<compile_context>
chip_gen: v6e
topology: v6e:2x2x1
jax: 0.10.0
libtpu: 0.0.40
codegen_flags: <defaults>
</compile_context>

<pallas_src>
import jax
import jax.numpy as jnp
from jax.experimental import pallas as pl
from jax.experimental.pallas import tpu as pltpu

D_IN, D_MAIN, D_HIDDEN, D_OUT = 32, 64, 128, 16
D_OUT_PAD = 128           # lane-dense padded head output width
N_BLOCKS = 2
EPS = 1e-5                # PyTorch LayerNorm default eps

# ---- row layout of the packed 1-D parameter slabs -------------------------
# vec64: (N_VEC64, D_MAIN)  f32
ROW_B0, ROW_HG, ROW_HB = 0, 1, 2


def ROW_BG(blk):  # LayerNorm gamma of block `blk`
    return 3 + 3 * blk + 0


def ROW_BB(blk):  # LayerNorm beta of block `blk`
    return 3 + 3 * blk + 1


def ROW_B2(blk):  # linear_second bias of block `blk`
    return 3 + 3 * blk + 2


N_VEC64 = 3 + 3 * N_BLOCKS

# vec128: (N_VEC128, 128) f32
ROW_HBIAS = 0


def ROW_B1(blk):  # linear_first bias of block `blk`
    return 1 + blk


N_VEC128 = 1 + N_BLOCKS


def _layernorm(h, gamma, beta):
    """Single-pass LayerNorm: independent E[x]/E[x^2] reductions + fused affine."""
    mu = jnp.mean(h, axis=-1, keepdims=True)
    msq = jnp.mean(h * h, axis=-1, keepdims=True)
    inv = jax.lax.rsqrt(msq - mu * mu + EPS)
    scale = inv * gamma
    return h * scale + (beta - mu * scale)


# --------------------------------------------------------------------------
# Kernel
# --------------------------------------------------------------------------
def resnet_kernel(x_ref, w0_ref, w1_ref, w2_ref, hw_ref,
                  vec64_ref, vec128_ref, out_ref):
    # x arrives f32 over the pipeline; cast to bf16 in VMEM (free VPU work,
    # avoids a separate XLA convert pass over x in HBM).
    x = x_ref[...].astype(jnp.bfloat16)                   # (tile_b, D_IN)

    # first_layer: Linear(d_in, d_main)  (bf16 operands, f32 accumulation)
    h = jnp.dot(x, w0_ref[...], preferred_element_type=jnp.float32)
    h = h + vec64_ref[ROW_B0][None, :]

    # residual blocks (static, unrolled; N_BLOCKS is a compile-time constant)
    for blk in range(N_BLOCKS):
        gamma = vec64_ref[ROW_BG(blk)][None, :]
        beta = vec64_ref[ROW_BB(blk)][None, :]
        z = _layernorm(h, gamma, beta)                    # normalization (f32)
        z = jnp.dot(z.astype(jnp.bfloat16), w1_ref[blk],  # linear_first
                    preferred_element_type=jnp.float32)
        z = z + vec128_ref[ROW_B1(blk)][None, :]
        z = jnp.maximum(z, 0.0)                           # activation (ReLU)
        # dropout_first: identity (p = 0.0 / eval mode)
        z = jnp.dot(z.astype(jnp.bfloat16), w2_ref[blk],  # linear_second
                    preferred_element_type=jnp.float32)
        z = z + vec64_ref[ROW_B2(blk)][None, :]
        # dropout_second: identity
        h = h + z                                         # skip_connection

    # head: normalization -> activation -> linear (padded to 128 lanes)
    z = _layernorm(h, vec64_ref[ROW_HG][None, :], vec64_ref[ROW_HB][None, :])
    z = jnp.maximum(z, 0.0)
    out = jnp.dot(z.astype(jnp.bfloat16), hw_ref[...],
                  preferred_element_type=jnp.float32)
    out = out + vec128_ref[ROW_HBIAS][None, :]
    out_ref[...] = out.astype(out_ref.dtype)              # bf16 store (halves writeback)


# --------------------------------------------------------------------------
# Wrapper
# --------------------------------------------------------------------------
def _choose_tile(B, cap):
    """Largest multiple-of-8 tile <= cap that divides B, preferring an even
    number of grid steps (v7x: 2 TensorCores share the 'parallel' axis).
    Returns None if no multiple-of-8 divisor exists."""
    cap8 = (min(cap, B) // 8) * 8
    best_odd = None
    t = cap8
    while t >= 8:
        if B % t == 0:
            if (B // t) % 2 == 0:
                return t
            if best_odd is None:
                best_odd = t
        t -= 8
    return best_odd


def resnet_forward(x, packed, *, tile_b=2048):
    """x: (B, D_IN) f32.  packed: output of prepare_params().  Returns (B, D_OUT) f32."""
    B = x.shape[0]
    w0, w1, w2, hw, vec64, vec128 = packed

    tb = _choose_tile(B, tile_b)
    if tb is not None:
        B_run, x_run = B, x
    elif B <= tile_b:
        # small / awkward batch: single full-extent block (always a legal BlockSpec)
        tb, B_run, x_run = B, B, x
    else:
        # non-divisible large batch: pad up to an even number of full tiles
        tb = max(8, (tile_b // 8) * 8)
        steps = -(-B // tb)
        if steps % 2:
            steps += 1
        B_run = steps * tb
        x_run = jnp.pad(x, ((0, B_run - B), (0, 0)))

    def _full_spec(arr):
        nd = arr.ndim
        return pl.BlockSpec(arr.shape, lambda i, _nd=nd: (0,) * _nd)

    weight_bytes = sum(int(a.size) * a.dtype.itemsize
                       for a in (w0, w1, w2, hw, vec64, vec128))
    # Explicit VMEM budget (double-buffered tiles + f32 intermediates + slack),
    # kept <= 32 MiB so it is valid on v7x (64 MiB physical) as well as v5e/v6e.
    vmem_bytes = int(
        2 * tb * D_IN * 4                # x tiles (f32, double-buffered)
        + 2 * tb * D_OUT_PAD * 2         # out tiles (bf16, double-buffered)
        + 12 * tb * D_HIDDEN * 4         # f32 activation intermediates (headroom)
        + 2 * weight_bytes
        + (2 << 20)                      # slack
    )
    vmem_bytes = min(max(vmem_bytes, 16 << 20), 32 << 20)

    grid = (B_run // tb,)
    out_padded = pl.pallas_call(
        resnet_kernel,
        out_shape=jax.ShapeDtypeStruct((B_run, D_OUT_PAD), jnp.bfloat16),
        grid_spec=pltpu.PrefetchScalarGridSpec(
            num_scalar_prefetch=0,
            grid=grid,
            in_specs=[pl.BlockSpec((tb, D_IN), lambda i: (i, 0))]
                     + [_full_spec(a) for a in (w0, w1, w2, hw, vec64, vec128)],
            out_specs=pl.BlockSpec((tb, D_OUT_PAD), lambda i: (i, 0)),
        ),
        compiler_params=pltpu.CompilerParams(
            dimension_semantics=("parallel",),
            vmem_limit_bytes=vmem_bytes,
        ),
    )(x_run, w0, w1, w2, hw, vec64, vec128)
    return out_padded[:B, :D_OUT].astype(jnp.float32)


# --------------------------------------------------------------------------
# Parameter construction / packing
# --------------------------------------------------------------------------
def init_params(key):
    """Raw f32 params, weights stored as (fan_in, fan_out) (= PyTorch weight.T).
    Mimics nn.Linear default init (uniform +/- 1/sqrt(fan_in))."""
    def lin(k, fan_in, shape):
        bound = 1.0 / jnp.sqrt(fan_in)
        return jax.random.uniform(k, shape, jnp.float32, -bound, bound)

    ks = jax.random.split(key, 8)
    w0 = lin(ks[0], D_IN, (D_IN, D_MAIN))
    b0 = lin(ks[1], D_IN, (D_MAIN,))
    bg = jnp.ones((N_BLOCKS, D_MAIN), jnp.float32)     # LayerNorm weight
    bb = jnp.zeros((N_BLOCKS, D_MAIN), jnp.float32)    # LayerNorm bias
    w1 = lin(ks[2], D_MAIN, (N_BLOCKS, D_MAIN, D_HIDDEN))
    b1 = lin(ks[3], D_MAIN, (N_BLOCKS, D_HIDDEN))
    w2 = lin(ks[4], D_HIDDEN, (N_BLOCKS, D_HIDDEN, D_MAIN))
    b2 = lin(ks[5], D_HIDDEN, (N_BLOCKS, D_MAIN))
    hg = jnp.ones((D_MAIN,), jnp.float32)
    hb = jnp.zeros((D_MAIN,), jnp.float32)
    hw = lin(ks[6], D_MAIN, (D_MAIN, D_OUT))
    hbias = lin(ks[7], D_MAIN, (D_OUT,))
    return (w0, b0, bg, bb, w1, b1, w2, b2, hg, hb, hw, hbias)


def prepare_params(raw):
    """bf16 matmul weights (head zero-padded to 128 lanes) + packed f32 bias/LN slabs."""
    (w0, b0, bg, bb, w1, b1, w2, b2, hg, hb, hw, hbias) = raw

    hw_pad = jnp.zeros((D_MAIN, D_OUT_PAD), jnp.float32).at[:, :D_OUT].set(hw)

    vec64 = jnp.zeros((N_VEC64, D_MAIN), jnp.float32)
    vec64 = vec64.at[ROW_B0].set(b0).at[ROW_HG].set(hg).at[ROW_HB].set(hb)
    for blk in range(N_BLOCKS):
        vec64 = (vec64.at[ROW_BG(blk)].set(bg[blk])
                       .at[ROW_BB(blk)].set(bb[blk])
                       .at[ROW_B2(blk)].set(b2[blk]))

    vec128 = jnp.zeros((N_VEC128, D_OUT_PAD), jnp.float32)
    vec128 = vec128.at[ROW_HBIAS, :D_OUT].set(hbias)
    for blk in range(N_BLOCKS):
        vec128 = vec128.at[ROW_B1(blk)].set(b1[blk])

    return (w0.astype(jnp.bfloat16),
            w1.astype(jnp.bfloat16),
            w2.astype(jnp.bfloat16),
            hw_pad.astype(jnp.bfloat16),
            vec64, vec128)


# --------------------------------------------------------------------------
# References
# --------------------------------------------------------------------------
def resnet_reference_mixed(x, packed):
    """Pure-JAX reference with the same mixed-precision policy as the kernel
    (bf16 MXU operands, f32 accumulation, bf16 output rounding)."""
    w0, w1, w2, hw, vec64, vec128 = packed
    h = jnp.dot(x.astype(jnp.bfloat16), w0,
                preferred_element_type=jnp.float32) + vec64[ROW_B0][None]
    for blk in range(N_BLOCKS):
        z = _layernorm(h, vec64[ROW_BG(blk)][None], vec64[ROW_BB(blk)][None])
        z = jnp.dot(z.astype(jnp.bfloat16), w1[blk],
                    preferred_element_type=jnp.float32) + vec128[ROW_B1(blk)][None]
        z = jnp.maximum(z, 0.0)
        z = jnp.dot(z.astype(jnp.bfloat16), w2[blk],
                    preferred_element_type=jnp.float32) + vec64[ROW_B2(blk)][None]
        h = h + z
    z = _layernorm(h, vec64[ROW_HG][None], vec64[ROW_HB][None])
    z = jnp.maximum(z, 0.0)
    out = jnp.dot(z.astype(jnp.bfloat16), hw,
                  preferred_element_type=jnp.float32) + vec128[ROW_HBIAS][None]
    return out[:, :D_OUT].astype(jnp.bfloat16).astype(jnp.float32)


def resnet_reference_f32(x, raw):
    """Full-f32 reference matching the PyTorch module's semantics."""
    (w0, b0, bg, bb, w1, b1, w2, b2, hg, hb, hw, hbias) = raw

    def ln(h, g, b):
        mu = jnp.mean(h, -1, keepdims=True)
        var = jnp.mean((h - mu) ** 2, -1, keepdims=True)
        return (h - mu) * jax.lax.rsqrt(var + EPS) * g + b

    h = x @ w0 + b0
    for blk in range(N_BLOCKS):
        z = ln(h, bg[blk], bb[blk])
        z = jnp.maximum(z @ w1[blk] + b1[blk], 0.0)
        z = z @ w2[blk] + b2[blk]
        h = h + z
    z = jnp.maximum(ln(h, hg, hb), 0.0)
    return z @ hw + hbias


if __name__ == "__main__":
    key = jax.random.PRNGKey(0)
    kx, kp = jax.random.split(key)
    B = 512                       # small test batch -> 2 grid steps of tile_b=256
    x = jax.random.normal(kx, (B, D_IN), jnp.float32)
    raw = init_params(kp)
    packed = prepare_params(raw)

    out = resnet_forward(x, packed, tile_b=2048)
    out = jax.block_until_ready(out)

    assert out.shape == (B, D_OUT)
    assert out.dtype == jnp.float32

    # Tight check vs a reference with the identical precision policy.
    ref_mixed = resnet_reference_mixed(x, packed)
    assert jnp.allclose(out, ref_mixed, atol=2e-2, rtol=2e-2), \
        "mismatch vs mixed-precision reference"

    # Looser check vs the full-f32 (PyTorch-semantics) reference.
    ref_f32 = resnet_reference_f32(x, raw)
    assert jnp.allclose(out, ref_f32, atol=5e-2, rtol=5e-2), \
        "mismatch vs f32 reference"

    print("KERNEL_OK")
</pallas_src>

<mosaic_0001>
module attributes {stable_mosaic.version = 11 : i64} {
  func.func @resnet_kernel(%arg0: i32, %arg1: memref<256x32xf32, #tpu.memory_space<vmem>>, %arg2: memref<32x64xbf16, #tpu.memory_space<vmem>>, %arg3: memref<2x64x128xbf16, #tpu.memory_space<vmem>>, %arg4: memref<2x128x64xbf16, #tpu.memory_space<vmem>>, %arg5: memref<64x128xbf16, #tpu.memory_space<vmem>>, %arg6: memref<9x64xf32, #tpu.memory_space<vmem>>, %arg7: memref<3x128xf32, #tpu.memory_space<vmem>>, %arg8: memref<256x128xbf16, #tpu.memory_space<vmem>>) attributes {dimension_semantics = [#tpu.dimension_semantics<parallel>], iteration_bounds = array<i64: 2>, scalar_prefetch = 0 : i64, scratch_operands = 0 : i64, tpu.core_type = #tpu.core_type<tc>, window_params = [{transform_indices = @transform_0, window_bounds = array<i64: 256, 32>}, {pipeline_mode = #tpu.pipeline_mode<synchronous>, transform_indices = @transform_1, window_bounds = array<i64: 32, 64>}, {pipeline_mode = #tpu.pipeline_mode<synchronous>, transform_indices = @transform_2, window_bounds = array<i64: 2, 64, 128>}, {pipeline_mode = #tpu.pipeline_mode<synchronous>, transform_indices = @transform_3, window_bounds = array<i64: 2, 128, 64>}, {pipeline_mode = #tpu.pipeline_mode<synchronous>, transform_indices = @transform_4, window_bounds = array<i64: 64, 128>}, {pipeline_mode = #tpu.pipeline_mode<synchronous>, transform_indices = @transform_5, window_bounds = array<i64: 9, 64>}, {pipeline_mode = #tpu.pipeline_mode<synchronous>, transform_indices = @transform_6, window_bounds = array<i64: 3, 128>}, {transform_indices = @transform_7, window_bounds = array<i64: 256, 128>}]} {
    %c0 = arith.constant 0 : index
    %c0_0 = arith.constant 0 : index
    %0 = vector.load %arg1[%c0, %c0_0] : memref<256x32xf32, #tpu.memory_space<vmem>>, vector<256x32xf32>
    %1 = arith.truncf %0 : vector<256x32xf32> to vector<256x32xbf16>
    %c0_1 = arith.constant 0 : index
    %c0_2 = arith.constant 0 : index
    %2 = vector.load %arg2[%c0_1, %c0_2] : memref<32x64xbf16, #tpu.memory_space<vmem>>, vector<32x64xbf16>
    %cst = arith.constant dense<0.000000e+00> : vector<256x64xf32>
    %3 = tpu.matmul %1, %2, %cst {dimension_numbers = #tpu.dot_dimension_numbers<[1], [0], [0], [1], [0, 0, 1, 1], [], []>} : vector<256x32xbf16>, vector<32x64xbf16>, vector<256x64xf32> -> vector<256x64xf32>
    %c0_3 = arith.constant 0 : index
    %c0_4 = arith.constant 0 : index
    %4 = vector.load %arg6[%c0_3, %c0_4] : memref<9x64xf32, #tpu.memory_space<vmem>>, vector<1x64xf32>
    %5 = vector.shape_cast %4 : vector<1x64xf32> to vector<64xf32>
    %6 = vector.shape_cast %5 : vector<64xf32> to vector<1x64xf32>
    %7 = vector.broadcast %6 : vector<1x64xf32> to vector<256x64xf32>
    %8 = arith.addf %3, %7 : vector<256x64xf32>
    %c3 = arith.constant 3 : index
    %c0_5 = arith.constant 0 : index
    %9 = vector.load %arg6[%c3, %c0_5] : memref<9x64xf32, #tpu.memory_space<vmem>>, vector<1x64xf32>
    %10 = vector.shape_cast %9 : vector<1x64xf32> to vector<64xf32>
    %11 = vector.shape_cast %10 : vector<64xf32> to vector<1x64xf32>
    %c4 = arith.constant 4 : index
    %c0_6 = arith.constant 0 : index
    %12 = vector.load %arg6[%c4, %c0_6] : memref<9x64xf32, #tpu.memory_space<vmem>>, vector<1x64xf32>
    %13 = vector.shape_cast %12 : vector<1x64xf32> to vector<64xf32>
    %14 = vector.shape_cast %13 : vector<64xf32> to vector<1x64xf32>
    %cst_7 = arith.constant dense<0.000000e+00> : vector<256xf32>
    %15 = vector.multi_reduction <add>, %8, %cst_7 [1] : vector<256x64xf32> to vector<256xf32>
    %16 = vector.shape_cast %15 : vector<256xf32> to vector<256x1xf32>
    %cst_8 = arith.constant 6.400000e+01 : f32
    %17 = vector.broadcast %cst_8 : f32 to vector<256x1xf32>
    %18 = arith.divf %16, %17 : vector<256x1xf32>
    %19 = arith.mulf %8, %8 : vector<256x64xf32>
    %cst_9 = arith.constant dense<0.000000e+00> : vector<256xf32>
    %20 = vector.multi_reduction <add>, %19, %cst_9 [1] : vector<256x64xf32> to vector<256xf32>
    %21 = vector.shape_cast %20 : vector<256xf32> to vector<256x1xf32>
    %cst_10 = arith.constant 6.400000e+01 : f32
    %22 = vector.broadcast %cst_10 : f32 to vector<256x1xf32>
    %23 = arith.divf %21, %22 : vector<256x1xf32>
    %24 = arith.mulf %18, %18 : vector<256x1xf32>
    %25 = arith.subf %23, %24 : vector<256x1xf32>
    %cst_11 = arith.constant 9.99999974E-6 : f32
    %26 = vector.broadcast %cst_11 : f32 to vector<256x1xf32>
    %27 = arith.addf %25, %26 : vector<256x1xf32>
    %28 = math.rsqrt %27 : vector<256x1xf32>
    %29 = vector.broadcast %28 : vector<256x1xf32> to vector<256x64xf32>
    %30 = vector.broadcast %11 : vector<1x64xf32> to vector<256x64xf32>
    %31 = arith.mulf %29, %30 : vector<256x64xf32>
    %32 = arith.mulf %8, %31 : vector<256x64xf32>
    %33 = vector.broadcast %18 : vector<256x1xf32> to vector<256x64xf32>
    %34 = arith.mulf %33, %31 : vector<256x64xf32>
    %35 = vector.broadcast %14 : vector<1x64xf32> to vector<256x64xf32>
    %36 = arith.subf %35, %34 : vector<256x64xf32>
    %37 = arith.addf %32, %36 : vector<256x64xf32>
    %38 = arith.truncf %37 : vector<256x64xf32> to vector<256x64xbf16>
    %c0_12 = arith.constant 0 : index
    %c0_13 = arith.constant 0 : index
    %c0_14 = arith.constant 0 : index
    %39 = vector.load %arg3[%c0_12, %c0_13, %c0_14] : memref<2x64x128xbf16, #tpu.memory_space<vmem>>, vector<1x64x128xbf16>
    %40 = vector.shape_cast %39 : vector<1x64x128xbf16> to vector<64x128xbf16>
    %cst_15 = arith.constant dense<0.000000e+00> : vector<256x128xf32>
    %41 = tpu.matmul %38, %40, %cst_15 {dimension_numbers = #tpu.dot_dimension_numbers<[1], [0], [0], [1], [0, 0, 1, 1], [], []>} : vector<256x64xbf16>, vector<64x128xbf16>, vector<256x128xf32> -> vector<256x128xf32>
    %c1 = arith.constant 1 : index
    %c0_16 = arith.constant 0 : index
    %42 = vector.load %arg7[%c1, %c0_16] : memref<3x128xf32, #tpu.memory_space<vmem>>, vector<1x128xf32>
    %43 = vector.shape_cast %42 : vector<1x128xf32> to vector<128xf32>
    %44 = vector.shape_cast %43 : vector<128xf32> to vector<1x128xf32>
    %45 = vector.broadcast %44 : vector<1x128xf32> to vector<256x128xf32>
    %46 = arith.addf %41, %45 : vector<256x128xf32>
    %cst_17 = arith.constant 0.000000e+00 : f32
    %47 = vector.broadcast %cst_17 : f32 to vector<256x128xf32>
    %48 = arith.maximumf %46, %47 : vector<256x128xf32>
    %49 = arith.truncf %48 : vector<256x128xf32> to vector<256x128xbf16>
    %c0_18 = arith.constant 0 : index
    %c0_19 = arith.constant 0 : index
    %c0_20 = arith.constant 0 : index
    %50 = vector.load %arg4[%c0_18, %c0_19, %c0_20] : memref<2x128x64xbf16, #tpu.memory_space<vmem>>, vector<1x128x64xbf16>
    %51 = vector.shape_cast %50 : vector<1x128x64xbf16> to vector<128x64xbf16>
    %cst_21 = arith.constant dense<0.000000e+00> : vector<256x64xf32>
    %52 = tpu.matmul %49, %51, %cst_21 {dimension_numbers = #tpu.dot_dimension_numbers<[1], [0], [0], [1], [0, 0, 1, 1], [], []>} : vector<256x128xbf16>, vector<128x64xbf16>, vector<256x64xf32> -> vector<256x64xf32>
    %c5 = arith.constant 5 : index
    %c0_22 = arith.constant 0 : index
    %53 = vector.load %arg6[%c5, %c0_22] : memref<9x64xf32, #tpu.memory_space<vmem>>, vector<1x64xf32>
    %54 = vector.shape_cast %53 : vector<1x64xf32> to vector<64xf32>
    %55 = vector.shape_cast %54 : vector<64xf32> to vector<1x64xf32>
    %56 = vector.broadcast %55 : vector<1x64xf32> to vector<256x64xf32>
    %57 = arith.addf %52, %56 : vector<256x64xf32>
    %58 = arith.addf %8, %57 : vector<256x64xf32>
    %c6 = arith.constant 6 : index
    %c0_23 = arith.constant 0 : index
    %59 = vector.load %arg6[%c6, %c0_23] : memref<9x64xf32, #tpu.memory_space<vmem>>, vector<1x64xf32>
    %60 = vector.shape_cast %59 : vector<1x64xf32> to vector<64xf32>
    %61 = vector.shape_cast %60 : vector<64xf32> to vector<1x64xf32>
    %c7 = arith.constant 7 : index
    %c0_24 = arith.constant 0 : index
    %62 = vector.load %arg6[%c7, %c0_24] : memref<9x64xf32, #tpu.memory_space<vmem>>, vector<1x64xf32>
    %63 = vector.shape_cast %62 : vector<1x64xf32> to vector<64xf32>
    %64 = vector.shape_cast %63 : vector<64xf32> to vector<1x64xf32>
    %cst_25 = arith.constant dense<0.000000e+00> : vector<256xf32>
    %65 = vector.multi_reduction <add>, %58, %cst_25 [1] : vector<256x64xf32> to vector<256xf32>
    %66 = vector.shape_cast %65 : vector<256xf32> to vector<256x1xf32>
    %cst_26 = arith.constant 6.400000e+01 : f32
    %67 = vector.broadcast %cst_26 : f32 to vector<256x1xf32>
    %68 = arith.divf %66, %67 : vector<256x1xf32>
    %69 = arith.mulf %58, %58 : vector<256x64xf32>
    %cst_27 = arith.constant dense<0.000000e+00> : vector<256xf32>
    %70 = vector.multi_reduction <add>, %69, %cst_27 [1] : vector<256x64xf32> to vector<256xf32>
    %71 = vector.shape_cast %70 : vector<256xf32> to vector<256x1xf32>
    %cst_28 = arith.constant 6.400000e+01 : f32
    %72 = vector.broadcast %cst_28 : f32 to vector<256x1xf32>
    %73 = arith.divf %71, %72 : vector<256x1xf32>
    %74 = arith.mulf %68, %68 : vector<256x1xf32>
    %75 = arith.subf %73, %74 : vector<256x1xf32>
    %cst_29 = arith.constant 9.99999974E-6 : f32
    %76 = vector.broadcast %cst_29 : f32 to vector<256x1xf32>
    %77 = arith.addf %75, %76 : vector<256x1xf32>
    %78 = math.rsqrt %77 : vector<256x1xf32>
    %79 = vector.broadcast %78 : vector<256x1xf32> to vector<256x64xf32>
    %80 = vector.broadcast %61 : vector<1x64xf32> to vector<256x64xf32>
    %81 = arith.mulf %79, %80 : vector<256x64xf32>
    %82 = arith.mulf %58, %81 : vector<256x64xf32>
    %83 = vector.broadcast %68 : vector<256x1xf32> to vector<256x64xf32>
    %84 = arith.mulf %83, %81 : vector<256x64xf32>
    %85 = vector.broadcast %64 : vector<1x64xf32> to vector<256x64xf32>
    %86 = arith.subf %85, %84 : vector<256x64xf32>
    %87 = arith.addf %82, %86 : vector<256x64xf32>
    %88 = arith.truncf %87 : vector<256x64xf32> to vector<256x64xbf16>
    %c1_30 = arith.constant 1 : index
    %c0_31 = arith.constant 0 : index
    %c0_32 = arith.constant 0 : index
    %89 = vector.load %arg3[%c1_30, %c0_31, %c0_32] : memref<2x64x128xbf16, #tpu.memory_space<vmem>>, vector<1x64x128xbf16>
    %90 = vector.shape_cast %89 : vector<1x64x128xbf16> to vector<64x128xbf16>
    %cst_33 = arith.constant dense<0.000000e+00> : vector<256x128xf32>
    %91 = tpu.matmul %88, %90, %cst_33 {dimension_numbers = #tpu.dot_dimension_numbers<[1], [0], [0], [1], [0, 0, 1, 1], [], []>} : vector<256x64xbf16>, vector<64x128xbf16>, vector<256x128xf32> -> vector<256x128xf32>
    %c2 = arith.constant 2 : index
    %c0_34 = arith.constant 0 : index
    %92 = vector.load %arg7[%c2, %c0_34] : memref<3x128xf32, #tpu.memory_space<vmem>>, vector<1x128xf32>
    %93 = vector.shape_cast %92 : vector<1x128xf32> to vector<128xf32>
    %94 = vector.shape_cast %93 : vector<128xf32> to vector<1x128xf32>
    %95 = vector.broadcast %94 : vector<1x128xf32> to vector<256x128xf32>
    %96 = arith.addf %91, %95 : vector<256x128xf32>
    %cst_35 = arith.constant 0.000000e+00 : f32
    %97 = vector.broadcast %cst_35 : f32 to vector<256x128xf32>
    %98 = arith.maximumf %96, %97 : vector<256x128xf32>
    %99 = arith.truncf %98 : vector<256x128xf32> to vector<256x128xbf16>
    %c1_36 = arith.constant 1 : index
    %c0_37 = arith.constant 0 : index
    %c0_38 = arith.constant 0 : index
    %100 = vector.load %arg4[%c1_36, %c0_37, %c0_38] : memref<2x128x64xbf16, #tpu.memory_space<vmem>>, vector<1x128x64xbf16>
    %101 = vector.shape_cast %100 : vector<1x128x64xbf16> to vector<128x64xbf16>
    %cst_39 = arith.constant dense<0.000000e+00> : vector<256x64xf32>
    %102 = tpu.matmul %99, %101, %cst_39 {dimension_numbers = #tpu.dot_dimension_numbers<[1], [0], [0], [1], [0, 0, 1, 1], [], []>} : vector<256x128xbf16>, vector<128x64xbf16>, vector<256x64xf32> -> vector<256x64xf32>
    %c8 = arith.constant 8 : index
    %c0_40 = arith.constant 0 : index
    %103 = vector.load %arg6[%c8, %c0_40] : memref<9x64xf32, #tpu.memory_space<vmem>>, vector<1x64xf32>
    %104 = vector.shape_cast %103 : vector<1x64xf32> to vector<64xf32>
    %105 = vector.shape_cast %104 : vector<64xf32> to vector<1x64xf32>
    %106 = vector.broadcast %105 : vector<1x64xf32> to vector<256x64xf32>
    %107 = arith.addf %102, %106 : vector<256x64xf32>
    %108 = arith.addf %58, %107 : vector<256x64xf32>
    %c1_41 = arith.constant 1 : index
    %c0_42 = arith.constant 0 : index
    %109 = vector.load %arg6[%c1_41, %c0_42] : memref<9x64xf32, #tpu.memory_space<vmem>>, vector<1x64xf32>
    %110 = vector.shape_cast %109 : vector<1x64xf32> to vector<64xf32>
    %111 = vector.shape_cast %110 : vector<64xf32> to vector<1x64xf32>
    %c2_43 = arith.constant 2 : index
    %c0_44 = arith.constant 0 : index
    %112 = vector.load %arg6[%c2_43, %c0_44] : memref<9x64xf32, #tpu.memory_space<vmem>>, vector<1x64xf32>
    %113 = vector.shape_cast %112 : vector<1x64xf32> to vector<64xf32>
    %114 = vector.shape_cast %113 : vector<64xf32> to vector<1x64xf32>
    %cst_45 = arith.constant dense<0.000000e+00> : vector<256xf32>
    %115 = vector.multi_reduction <add>, %108, %cst_45 [1] : vector<256x64xf32> to vector<256xf32>
    %116 = vector.shape_cast %115 : vector<256xf32> to vector<256x1xf32>
    %cst_46 = arith.constant 6.400000e+01 : f32
    %117 = vector.broadcast %cst_46 : f32 to vector<256x1xf32>
    %118 = arith.divf %116, %117 : vector<256x1xf32>
    %119 = arith.mulf %108, %108 : vector<256x64xf32>
    %cst_47 = arith.constant dense<0.000000e+00> : vector<256xf32>
    %120 = vector.multi_reduction <add>, %119, %cst_47 [1] : vector<256x64xf32> to vector<256xf32>
    %121 = vector.shape_cast %120 : vector<256xf32> to vector<256x1xf32>
    %cst_48 = arith.constant 6.400000e+01 : f32
    %122 = vector.broadcast %cst_48 : f32 to vector<256x1xf32>
    %123 = arith.divf %121, %122 : vector<256x1xf32>
    %124 = arith.mulf %118, %118 : vector<256x1xf32>
    %125 = arith.subf %123, %124 : vector<256x1xf32>
    %cst_49 = arith.constant 9.99999974E-6 : f32
    %126 = vector.broadcast %cst_49 : f32 to vector<256x1xf32>
    %127 = arith.addf %125, %126 : vector<256x1xf32>
    %128 = math.rsqrt %127 : vector<256x1xf32>
    %129 = vector.broadcast %128 : vector<256x1xf32> to vector<256x64xf32>
    %130 = vector.broadcast %111 : vector<1x64xf32> to vector<256x64xf32>
    %131 = arith.mulf %129, %130 : vector<256x64xf32>
    %132 = arith.mulf %108, %131 : vector<256x64xf32>
    %133 = vector.broadcast %118 : vector<256x1xf32> to vector<256x64xf32>
    %134 = arith.mulf %133, %131 : vector<256x64xf32>
    %135 = vector.broadcast %114 : vector<1x64xf32> to vector<256x64xf32>
    %136 = arith.subf %135, %134 : vector<256x64xf32>
    %137 = arith.addf %132, %136 : vector<256x64xf32>
    %cst_50 = arith.constant 0.000000e+00 : f32
    %138 = vector.broadcast %cst_50 : f32 to vector<256x64xf32>
    %139 = arith.maximumf %137, %138 : vector<256x64xf32>
    %140 = arith.truncf %139 : vector<256x64xf32> to vector<256x64xbf16>
    %c0_51 = arith.constant 0 : index
    %c0_52 = arith.constant 0 : index
    %141 = vector.load %arg5[%c0_51, %c0_52] : memref<64x128xbf16, #tpu.memory_space<vmem>>, vector<64x128xbf16>
    %cst_53 = arith.constant dense<0.000000e+00> : vector<256x128xf32>
    %142 = tpu.matmul %140, %141, %cst_53 {dimension_numbers = #tpu.dot_dimension_numbers<[1], [0], [0], [1], [0, 0, 1, 1], [], []>} : vector<256x64xbf16>, vector<64x128xbf16>, vector<256x128xf32> -> vector<256x128xf32>
    %c0_54 = arith.constant 0 : index
    %c0_55 = arith.constant 0 : index
    %143 = vector.load %arg7[%c0_54, %c0_55] : memref<3x128xf32, #tpu.memory_space<vmem>>, vector<1x128xf32>
    %144 = vector.shape_cast %143 : vector<1x128xf32> to vector<128xf32>
    %145 = vector.shape_cast %144 : vector<128xf32> to vector<1x128xf32>
    %146 = vector.broadcast %145 : vector<1x128xf32> to vector<256x128xf32>
    %147 = arith.addf %142, %146 : vector<256x128xf32>
    %148 = arith.truncf %147 : vector<256x128xf32> to vector<256x128xbf16>
    %c0_56 = arith.constant 0 : index
    %c0_57 = arith.constant 0 : index
    %149 = vector.load %arg8[%c0_56, %c0_57] : memref<256x128xbf16, #tpu.memory_space<vmem>>, vector<256x128xbf16>
    tpu.vector_store %arg8[%c0_56, %c0_57], %148 {strides = array<i32>} : memref<256x128xbf16, #tpu.memory_space<vmem>>, vector<256x128xbf16>,
    return
  }
  func.func @transform_0(%arg0: i32) -> (i32, i32) {
    %c0_i32 = arith.constant 0 : i32
    %c0_i32_0 = arith.constant 0 : i32
    return %arg0, %c0_i32 : i32, i32
  }
  func.func @transform_1(%arg0: i32) -> (i32, i32) {
    %c0_i32 = arith.constant 0 : i32
    %c0_i32_0 = arith.constant 0 : i32
    %c0_i32_1 = arith.constant 0 : i32
    return %c0_i32, %c0_i32_0 : i32, i32
  }
  func.func @transform_2(%arg0: i32) -> (i32, i32, i32) {
    %c0_i32 = arith.constant 0 : i32
    %c0_i32_0 = arith.constant 0 : i32
    %c0_i32_1 = arith.constant 0 : i32
    %c0_i32_2 = arith.constant 0 : i32
    return %c0_i32, %c0_i32_0, %c0_i32_1 : i32, i32, i32
  }
  func.func @transform_3(%arg0: i32) -> (i32, i32, i32) {
    %c0_i32 = arith.constant 0 : i32
    %c0_i32_0 = arith.constant 0 : i32
    %c0_i32_1 = arith.constant 0 : i32
    %c0_i32_2 = arith.constant 0 : i32
    return %c0_i32, %c0_i32_0, %c0_i32_1 : i32, i32, i32
  }
  func.func @transform_4(%arg0: i32) -> (i32, i32) {
    %c0_i32 = arith.constant 0 : i32
    %c0_i32_0 = arith.constant 0 : i32
    %c0_i32_1 = arith.constant 0 : i32
    return %c0_i32, %c0_i32_0 : i32, i32
  }
  func.func @transform_5(%arg0: i32) -> (i32, i32) {
    %c0_i32 = arith.constant 0 : i32
    %c0_i32_0 = arith.constant 0 : i32
    %c0_i32_1 = arith.constant 0 : i32
    return %c0_i32, %c0_i32_0 : i32, i32
  }
  func.func @transform_6(%arg0: i32) -> (i32, i32) {
    %c0_i32 = arith.constant 0 : i32
    %c0_i32_0 = arith.constant 0 : i32
    %c0_i32_1 = arith.constant 0 : i32
    return %c0_i32, %c0_i32_0 : i32, i32
  }
  func.func @transform_7(%arg0: i32) -> (i32, i32) {
    %c0_i32 = arith.constant 0 : i32
    %c0_i32_0 = arith.constant 0 : i32
    return %arg0, %c0_i32 : i32, i32
  }
}

</mosaic_0001>

<llo_original>
// kernel: tpu_custom_call.1
$region0: #{tpu_custom_call.1}
  #allocation0 [shape = 'u32[]', space=smem, size = 0x4, offset = 0x4, fixed_abs, tag = 'smem constant byte address 0x4 - core index']
  #allocation1 [shape = 'u32[144,128]{1,0:T(1,128)}', space=vmem, size = 0x12000, scoped, tag = 'internal scratch']
  %s0 = inlined_call_operand.vmem [shape: f32[512,32], index: 0, kind: input, shape index: {}]
  %s1 = inlined_call_operand.vmem [shape: bf16[32,64], index: 1, kind: input, shape index: {}]
  %s2 = inlined_call_operand.vmem [shape: bf16[2,64,128], index: 2, kind: input, shape index: {}]
  %s3 = inlined_call_operand.vmem [shape: bf16[2,128,64], index: 3, kind: input, shape index: {}]
  %s4 = inlined_call_operand.vmem [shape: bf16[64,128], index: 4, kind: input, shape index: {}]
  %s5 = inlined_call_operand.vmem [shape: f32[9,64], index: 5, kind: input, shape index: {}]
  %s6 = inlined_call_operand.vmem [shape: f32[3,128], index: 6, kind: input, shape index: {}]
  %s7 = inlined_call_operand.hbm [shape: bf16[512,128], index: 7, kind: output, shape index: {}]
  %s8 = sld [smem:[#allocation0]]
  $region61: #{tpu_custom_call.1} parent=0
    _
  %s10 = ssub.s32 1, %s8
  %s11 = scalar_select 0, %s10, %s8
  $region1: #{tpu_custom_call.1} parent=0
    #allocation2 [shape = 'u8[131072]{0}', space=vmem, size = 0x20000, scoped, tag = 'output window, operand 0']
    #allocation3 [shape = 's32[2]{0}', space=sflag, size = 0x8, scoped, tag = 'scoped memory for tpu_custom_call.1']
    %12 = vsyncpa [#allocation3], 0
    %s13 = scalar_lea.sflag [#allocation3], 1
    %14 = vsyncpa %s13, 0
    loop: start=0, step=1, limit=4
    $region2: #{tpu_custom_call.1} parent=1 // loop_pre_header
      _
    $region3: #{tpu_custom_call.1} parent=1 // loop_header
      %s16 = sphi 0, %s20
      %p17 = scmp.ge.s32.totalorder %s16, 4
      %s26 = sphi 0, %s28
      %s29 = sphi 0, %s26
      %s30 = sphi 0, %s29
      %s46 = sphi 0, %s30
      %s50 = sphi 0, %s50
      %s52 = sphi 0, %s50
      %s53 = sphi 0, %s52
      %s67 = sphi 0, %s53
      %s71 = sphi 0, %s71
      %s73 = sphi 0, %s71
      %s74 = sphi 0, %s73
      %s88 = sphi 0, %s74
      %s92 = sphi 0, %s92
      %s94 = sphi 0, %s92
      %s95 = sphi 0, %s94
      %s109 = sphi 0, %s95
      %s113 = sphi 0, %s113
      %s115 = sphi 0, %s113
      %s116 = sphi 0, %s115
      %s130 = sphi 0, %s116
      %s134 = sphi 0, %s134
      %s136 = sphi 0, %s134
      %s137 = sphi 0, %s136
      %s151 = sphi 0, %s137
      %s155 = sphi 0, %s155
      %s157 = sphi 0, %s155
      %s158 = sphi 0, %s157
      %s172 = sphi 0, %s158
      %s178 = sphi 0, %s180
      %s181 = sphi 0, %s178
      %s182 = sphi 0, %s181
      %s198 = sphi 0, %s182
    $region4: #{tpu_custom_call.1} parent=1 // loop_header_branch
      %19 = sbr.rel (%p17) target = $region8
    $region5: #{tpu_custom_call.1} parent=1 // loop_body
      %s21 = ssub.s32 %s16, 1
      %s22 = ssub.s32 %s16, 2
      %s23 = sadd.s32 %s16, 1
      %s24 = ssub.s32 %s16, %s23
      %p25 = scmp.eq.s32.totalorder %s24, 0
      %s27 = sadd.s32 %s26, 1
      %s28 = scalar_select %p25, %s26, %s27
      %p31 = pneg %p25
      %p32 = scmp.eq.s32.totalorder %s16, 1
      %p33 = por %p31, %p32
      %p34 = scmp.ne.s32.totalorder %s26, %s29
      %p35 = scmp.eq.s32.totalorder %s16, 0
      %p36 = por %p34, %p35
      %p37 = scmp.ne.s32.totalorder %s26, %s29
      %p38 = scmp.eq.s32.totalorder %s21, 1
      %p39 = por %p37, %p38
      %p40 = scmp.ne.s32.totalorder %s29, %s30
      %p41 = scmp.eq.s32.totalorder %s21, 0
      %p42 = por %p40, %p41
      %p43 = scmp.ne.s32.totalorder %s29, %s30
      %p44 = scmp.eq.s32.totalorder %s22, 1
      %p45 = por %p43, %p44
      %p47 = scmp.ne.s32.totalorder %s30, %s46
      %p48 = scmp.eq.s32.totalorder %s22, 0
      %p49 = por %p47, %p48
      %s51 = sadd.s32 %s50, 1
      %p54 = scmp.eq.s32.totalorder %s16, 1
      %p55 = scmp.ne.s32.totalorder %s50, %s52
      %p56 = scmp.eq.s32.totalorder %s16, 0
      %p57 = por %p55, %p56
      %p58 = scmp.ne.s32.totalorder %s50, %s52
      %p59 = scmp.eq.s32.totalorder %s21, 1
      %p60 = por %p58, %p59
      %p61 = scmp.ne.s32.totalorder %s52, %s53
      %p62 = scmp.eq.s32.totalorder %s21, 0
      %p63 = por %p61, %p62
      %p64 = scmp.ne.s32.totalorder %s52, %s53
      %p65 = scmp.eq.s32.totalorder %s22, 1
      %p66 = por %p64, %p65
      %p68 = scmp.ne.s32.totalorder %s53, %s67
      %p69 = scmp.eq.s32.totalorder %s22, 0
      %p70 = por %p68, %p69
      %s72 = sadd.s32 %s71, 1
      %p75 = scmp.eq.s32.totalorder %s16, 1
      %p76 = scmp.ne.s32.totalorder %s71, %s73
      %p77 = scmp.eq.s32.totalorder %s16, 0
      %p78 = por %p76, %p77
      %p79 = scmp.ne.s32.totalorder %s71, %s73
      %p80 = scmp.eq.s32.totalorder %s21, 1
      %p81 = por %p79, %p80
      %p82 = scmp.ne.s32.totalorder %s73, %s74
      %p83 = scmp.eq.s32.totalorder %s21, 0
      %p84 = por %p82, %p83
      %p85 = scmp.ne.s32.totalorder %s73, %s74
      %p86 = scmp.eq.s32.totalorder %s22, 1
      %p87 = por %p85, %p86
      %p89 = scmp.ne.s32.totalorder %s74, %s88
      %p90 = scmp.eq.s32.totalorder %s22, 0
      %p91 = por %p89, %p90
      %s93 = sadd.s32 %s92, 1
      %p96 = scmp.eq.s32.totalorder %s16, 1
      %p97 = scmp.ne.s32.totalorder %s92, %s94
      %p98 = scmp.eq.s32.totalorder %s16, 0
      %p99 = por %p97, %p98
      %p100 = scmp.ne.s32.totalorder %s92, %s94
      %p101 = scmp.eq.s32.totalorder %s21, 1
      %p102 = por %p100, %p101
      %p103 = scmp.ne.s32.totalorder %s94, %s95
      %p104 = scmp.eq.s32.totalorder %s21, 0
      %p105 = por %p103, %p104
      %p106 = scmp.ne.s32.totalorder %s94, %s95
      %p107 = scmp.eq.s32.totalorder %s22, 1
      %p108 = por %p106, %p107
      %p110 = scmp.ne.s32.totalorder %s95, %s109
      %p111 = scmp.eq.s32.totalorder %s22, 0
      %p112 = por %p110, %p111
      %s114 = sadd.s32 %s113, 1
      %p117 = scmp.eq.s32.totalorder %s16, 1
      %p118 = scmp.ne.s32.totalorder %s113, %s115
      %p119 = scmp.eq.s32.totalorder %s16, 0
      %p120 = por %p118, %p119
      %p121 = scmp.ne.s32.totalorder %s113, %s115
      %p122 = scmp.eq.s32.totalorder %s21, 1
      %p123 = por %p121, %p122
      %p124 = scmp.ne.s32.totalorder %s115, %s116
      %p125 = scmp.eq.s32.totalorder %s21, 0
      %p126 = por %p124, %p125
      %p127 = scmp.ne.s32.totalorder %s115, %s116
      %p128 = scmp.eq.s32.totalorder %s22, 1
      %p129 = por %p127, %p128
      %p131 = scmp.ne.s32.totalorder %s116, %s130
      %p132 = scmp.eq.s32.totalorder %s22, 0
      %p133 = por %p131, %p132
      %s135 = sadd.s32 %s134, 1
      %p138 = scmp.eq.s32.totalorder %s16, 1
      %p139 = scmp.ne.s32.totalorder %s134, %s136
      %p140 = scmp.eq.s32.totalorder %s16, 0
      %p141 = por %p139, %p140
      %p142 = scmp.ne.s32.totalorder %s134, %s136
      %p143 = scmp.eq.s32.totalorder %s21, 1
      %p144 = por %p142, %p143
      %p145 = scmp.ne.s32.totalorder %s136, %s137
      %p146 = scmp.eq.s32.totalorder %s21, 0
      %p147 = por %p145, %p146
      %p148 = scmp.ne.s32.totalorder %s136, %s137
      %p149 = scmp.eq.s32.totalorder %s22, 1
      %p150 = por %p148, %p149
      %p152 = scmp.ne.s32.totalorder %s137, %s151
      %p153 = scmp.eq.s32.totalorder %s22, 0
      %p154 = por %p152, %p153
      %s156 = sadd.s32 %s155, 1
      %p159 = scmp.eq.s32.totalorder %s16, 1
      %p160 = scmp.ne.s32.totalorder %s155, %s157
      %p161 = scmp.eq.s32.totalorder %s16, 0
      %p162 = por %p160, %p161
      %p163 = scmp.ne.s32.totalorder %s155, %s157
      %p164 = scmp.eq.s32.totalorder %s21, 1
      %p165 = por %p163, %p164
      %p166 = scmp.ne.s32.totalorder %s157, %s158
      %p167 = scmp.eq.s32.totalorder %s21, 0
      %p168 = por %p166, %p167
      %p169 = scmp.ne.s32.totalorder %s157, %s158
      %p170 = scmp.eq.s32.totalorder %s22, 1
      %p171 = por %p169, %p170
      %p173 = scmp.ne.s32.totalorder %s158, %s172
      %p174 = scmp.eq.s32.totalorder %s22, 0
      %p175 = por %p173, %p174
      %s176 = ssub.s32 %s16, %s23
      %p177 = scmp.eq.s32.totalorder %s176, 0
      %s179 = sadd.s32 %s178, 1
      %s180 = scalar_select %p177, %s178, %s179
      %p183 = pneg %p177
      %p184 = scmp.eq.s32.totalorder %s16, 1
      %p185 = por %p183, %p184
      %p186 = scmp.ne.s32.totalorder %s178, %s181
      %p187 = scmp.eq.s32.totalorder %s16, 0
      %p188 = por %p186, %p187
      %p189 = scmp.ne.s32.totalorder %s178, %s181
      %p190 = scmp.eq.s32.totalorder %s21, 1
      %p191 = por %p189, %p190
      %p192 = scmp.ne.s32.totalorder %s181, %s182
      %p193 = scmp.eq.s32.totalorder %s21, 0
      %p194 = por %p192, %p193
      %p195 = scmp.ne.s32.totalorder %s181, %s182
      %p196 = scmp.eq.s32.totalorder %s22, 1
      %p197 = por %p195, %p196
      %p199 = scmp.ne.s32.totalorder %s182, %s198
      %p200 = scmp.eq.s32.totalorder %s22, 0
      %p201 = por %p199, %p200
      %p202 = scmp.le.s32.totalorder 1, %s16
      %p203 = scmp.lt.s32.totalorder %s16, 3
      %p204 = pnand %p202, %p203
      %p205 = pneg %p204
      // Predicated region
      $region9: #{tpu_custom_call.1} parent=5 // pred_check
        _
      $region10: #{tpu_custom_call.1} parent=5 // pred_check_branch
        %207 = sbr.rel (%p204) target = $region12
      $region11: #{tpu_custom_call.1} parent=5 // pred_region
        %s208 = ssub.s32 %s16, 1
        // Predicated region
        $region13: #{tpu_custom_call.1} parent=11 // pred_check
          %p209 = pneg %p63
        $region14: #{tpu_custom_call.1} parent=11 // pred_check_branch
          %211 = sbr.rel (%p209) target = $region16
        $region15: #{tpu_custom_call.1} parent=11 // pred_region
          _
        $region16: #{tpu_custom_call.1} parent=11 // pred_fallthru
          _
        // Predicated region
        $region17: #{tpu_custom_call.1} parent=11 // pred_check
          %p212 = pneg %p84
        $region18: #{tpu_custom_call.1} parent=11 // pred_check_branch
          %214 = sbr.rel (%p212) target = $region20
        $region19: #{tpu_custom_call.1} parent=11 // pred_region
          _
        $region20: #{tpu_custom_call.1} parent=11 // pred_fallthru
          _
        // Predicated region
        $region21: #{tpu_custom_call.1} parent=11 // pred_check
          %p215 = pneg %p105
        $region22: #{tpu_custom_call.1} parent=11 // pred_check_branch
          %217 = sbr.rel (%p215) target = $region24
        $region23: #{tpu_custom_call.1} parent=11 // pred_region
          _
        $region24: #{tpu_custom_call.1} parent=11 // pred_fallthru
          _
        // Predicated region
        $region25: #{tpu_custom_call.1} parent=11 // pred_check
          %p218 = pneg %p126
        $region26: #{tpu_custom_call.1} parent=11 // pred_check_branch
          %220 = sbr.rel (%p218) target = $region28
        $region27: #{tpu_custom_call.1} parent=11 // pred_region
          _
        $region28: #{tpu_custom_call.1} parent=11 // pred_fallthru
          _
        // Predicated region
        $region29: #{tpu_custom_call.1} parent=11 // pred_check
          %p221 = pneg %p147
        $region30: #{tpu_custom_call.1} parent=11 // pred_check_branch
          %223 = sbr.rel (%p221) target = $region32
        $region31: #{tpu_custom_call.1} parent=11 // pred_region
          _
        $region32: #{tpu_custom_call.1} parent=11 // pred_fallthru
          _
        // Predicated region
        $region33: #{tpu_custom_call.1} parent=11 // pred_check
          %p224 = pneg %p168
        $region34: #{tpu_custom_call.1} parent=11 // pred_check_branch
          %226 = sbr.rel (%p224) target = $region36
        $region35: #{tpu_custom_call.1} parent=11 // pred_region
          _
        $region36: #{tpu_custom_call.1} parent=11 // pred_fallthru
          _
      $region12: #{tpu_custom_call.1} parent=5 // pred_fallthru
        _
      %p227 = scmp.lt.s32.totalorder %s16, 2
      // Predicated region
      $region37: #{tpu_custom_call.1} parent=5 // pred_check
        %p228 = pneg %p227
      $region38: #{tpu_custom_call.1} parent=5 // pred_check_branch
        %230 = sbr.rel (%p228) target = $region40
      $region39: #{tpu_custom_call.1} parent=5 // pred_region
        // Predicated region
        $region41: #{tpu_custom_call.1} parent=39 // pred_check
          %p231 = pneg %p36
        $region42: #{tpu_custom_call.1} parent=39 // pred_check_branch
          %233 = sbr.rel (%p231) target = $region44
        $region43: #{tpu_custom_call.1} parent=39 // pred_region
          %s234 = smul.u32 32, %s16
          %p235 = scmp.lt.s32.totalorder %s234, 63
          %s236 = scalar_select %p235, %s234, 63
          %s237 = smul.addr %s236, 8
          %s238 = scalar_lea.vmem %s0, %s237
          %s239 = smul.u32 32, %s16
        $region44: #{tpu_custom_call.1} parent=39 // pred_fallthru
          _
      $region40: #{tpu_custom_call.1} parent=5 // pred_fallthru
        _
      %p240 = scmp.le.s32.totalorder 1, %s16
      %p241 = scmp.lt.s32.totalorder %s16, 3
      %p242 = pnand %p240, %p241
      %p243 = pneg %p242
      // Predicated region
      $region45: #{tpu_custom_call.1} parent=5 // pred_check
        _
      $region46: #{tpu_custom_call.1} parent=5 // pred_check_branch
        %245 = sbr.rel (%p242) target = $region48
      $region47: #{tpu_custom_call.1} parent=5 // pred_region
        %s246 = ssub.s32 %s16, 1
        %s247 = smul.u32 32, %s21
        %p248 = scmp.lt.s32.totalorder %s247, 63
        %s249 = scalar_select %p248, %s247, 63
        %s250 = smul.addr %s249, 8
        %s251 = scalar_lea.vmem %s0, %s250
        %p252 = pneg %p42
        %p253 = pneg %p39
        %p254 = pneg %p63
        %p255 = pneg %p60
        %p256 = pneg %p84
        %p257 = pneg %p81
        %p258 = pneg %p105
        %p259 = pneg %p102
        %p260 = pneg %p126
        %p261 = pneg %p123
        %p262 = pneg %p147
        %p263 = pneg %p144
        %p264 = pneg %p168
        %p265 = pneg %p165
        %p266 = pneg %p194
        %p267 = pneg %p191
        %s268 = sand.u32 %s181, 1
        %s269 = scalar_lea.sflag [#allocation3], %s268
        %s270 = sand.u32 %s181, 1
        %s271 = smul.addr %s270, 128
        %s272 = scalar_lea.vmem [#allocation2], %s271
        %s273 = smul.u32 32, %s21
        %p274 = scmp.lt.s32.totalorder %s273, 63
        %s275 = scalar_select %p274, %s273, 63
        %s276 = smul.addr %s275, 8
        %s277 = scalar_lea.vmem %s0, %s276
        %s278 = smul.u32 32, %s21
        %s279 = smul.u32 32, %s21
        %v281 = vld [vmem:[%s277] sm:$0xff]
        %v282 = vld [vmem:[%s277 + $0x8] sm:$0xff]
        %v283 = vld [vmem:[%s277 + $0x10] sm:$0xff]
        %v284 = vld [vmem:[%s277 + $0x18] sm:$0xff]
        %v285 = vld [vmem:[%s277 + $0x20] sm:$0xff]
        %v286 = vld [vmem:[%s277 + $0x28] sm:$0xff]
        %v287 = vld [vmem:[%s277 + $0x30] sm:$0xff]
        %v288 = vld [vmem:[%s277 + $0x38] sm:$0xff]
        %v289 = vld [vmem:[%s277 + $0x40] sm:$0xff]
        %v290 = vld [vmem:[%s277 + $0x48] sm:$0xff]
        %v291 = vld [vmem:[%s277 + $0x50] sm:$0xff]
        %v292 = vld [vmem:[%s277 + $0x58] sm:$0xff]
        %v293 = vld [vmem:[%s277 + $0x60] sm:$0xff]
        %v294 = vld [vmem:[%s277 + $0x68] sm:$0xff]
        %v295 = vld [vmem:[%s277 + $0x70] sm:$0xff]
        %v296 = vld [vmem:[%s277 + $0x78] sm:$0xff]
        %v297 = vld [vmem:[%s277 + $0x80] sm:$0xff]
        %v298 = vld [vmem:[%s277 + $0x88] sm:$0xff]
        %v299 = vld [vmem:[%s277 + $0x90] sm:$0xff]
        %v300 = vld [vmem:[%s277 + $0x98] sm:$0xff]
        %v301 = vld [vmem:[%s277 + $0xa0] sm:$0xff]
        %v302 = vld [vmem:[%s277 + $0xa8] sm:$0xff]
        %v303 = vld [vmem:[%s277 + $0xb0] sm:$0xff]
        %v304 = vld [vmem:[%s277 + $0xb8] sm:$0xff]
        %v305 = vld [vmem:[%s277 + $0xc0] sm:$0xff]
        %v306 = vld [vmem:[%s277 + $0xc8] sm:$0xff]
        %v307 = vld [vmem:[%s277 + $0xd0] sm:$0xff]
        %v308 = vld [vmem:[%s277 + $0xd8] sm:$0xff]
        %v309 = vld [vmem:[%s277 + $0xe0] sm:$0xff]
        %v310 = vld [vmem:[%s277 + $0xe8] sm:$0xff]
        %v311 = vld [vmem:[%s277 + $0xf0] sm:$0xff]
        %v312 = vld [vmem:[%s277 + $0xf8] sm:$0xff]
        %v313 = vpack.c.bf16 %v282, %v281
        %v314 = vpack.c.bf16 %v284, %v283
        %v315 = vpack.c.bf16 %v286, %v285
        %v316 = vpack.c.bf16 %v288, %v287
        %v317 = vpack.c.bf16 %v290, %v289
        %v318 = vpack.c.bf16 %v292, %v291
        %v319 = vpack.c.bf16 %v294, %v293
        %v320 = vpack.c.bf16 %v296, %v295
        %v321 = vpack.c.bf16 %v298, %v297
        %v322 = vpack.c.bf16 %v300, %v299
        %v323 = vpack.c.bf16 %v302, %v301
        %v324 = vpack.c.bf16 %v304, %v303
        %v325 = vpack.c.bf16 %v306, %v305
        %v326 = vpack.c.bf16 %v308, %v307
        %v327 = vpack.c.bf16 %v310, %v309
        %v328 = vpack.c.bf16 %v312, %v311
        %v329 = vld [vmem:[%s1] sm:$0xf]
        %v330 = vld [vmem:[%s1 + $0x4] sm:$0xf]
        %v331 = vld [vmem:[%s1 + $0x8] sm:$0xf]
        %v332 = vld [vmem:[%s1 + $0xc] sm:$0xf]
        %v333 = vld [vmem:[%s5] sm:$0x1]
        %v334 = vlaneseq
        %v335 = vshrl.u32 %v334, 7
        %v336 = vsub.s32 0, %v335
        %v337 = vrot.slane %v333, %v336
        %v342 = vunpack.c.l.b16 %v329
        %v343 = vunpack.c.l.b16 %v330
        %v344 = vunpack.c.l.b16 %v331
        %v345 = vunpack.c.l.b16 %v332
        %v346 = vpack.c.b16 %v343, %v342
        %v347 = vpack.c.b16 %v345, %v344
        %vm350 = vcmask 261120
        %v352 = vsel %vm350, %v313, 0
        %v355 = vsel %vm350, %v314, 0
        %v358 = vsel %vm350, %v315, 0
        %v361 = vsel %vm350, %v316, 0
        %v364 = vsel %vm350, %v317, 0
        %v367 = vsel %vm350, %v318, 0
        %v370 = vsel %vm350, %v319, 0
        %v373 = vsel %vm350, %v320, 0
        %v376 = vsel %vm350, %v321, 0
        %v379 = vsel %vm350, %v322, 0
        %v382 = vsel %vm350, %v323, 0
        %v385 = vsel %vm350, %v324, 0
        %v388 = vsel %vm350, %v325, 0
        %v391 = vsel %vm350, %v326, 0
        %v394 = vsel %vm350, %v327, 0
        %v397 = vsel %vm350, %v328, 0
        %399 = vmatprep.subr.bf16.mxu0 0
        %400 = vmatpush1.bf16.msra.mxu0 0
        %401 = vmatprep.subr.bf16.mxu0 0
        %402 = vmatpush1.bf16.msra.mxu0 0
        %403 = vmatprep.subr.bf16.mxu0 0
        %404 = vmatpush1.bf16.msra.mxu0 0
        %405 = vmatprep.subr.bf16.mxu0 0
        %406 = vmatpush1.bf16.msra.mxu0 0
        %407 = vmatprep.subr.bf16.mxu0 0
        %408 = vmatpush1.bf16.msra.mxu0 0
        %409 = vmatprep.subr.bf16.mxu0 0
        %410 = vmatpush1.bf16.msra.mxu0 0
        %411 = vmatprep.subr.bf16.mxu0 0
        %412 = vmatpush1.bf16.msra.mxu0 %v347
        %413 = vmatprep.subr.bf16.mxu0 0
        %414 = vmatpush1.bf16.msra.mxu0 %v346
        %415 = vmatprep.subr.bf16.mxu0 0
        %416 = vmatpush2.bf16.msra.mxu0 0
        %417 = vmatprep.subr.bf16.mxu0 0
        %418 = vmatpush2.bf16.msra.mxu0 0
        %419 = vmatprep.subr.bf16.mxu0 0
        %420 = vmatpush2.bf16.msra.mxu0 0
        %421 = vmatprep.subr.bf16.mxu0 0
        %422 = vmatpush2.bf16.msra.mxu0 0
        %423 = vmatprep.subr.bf16.mxu0 0
        %424 = vmatpush2.bf16.msra.mxu0 0
        %425 = vmatprep.subr.bf16.mxu0 0
        %426 = vmatpush2.bf16.msra.mxu0 0
        %427 = vmatprep.subr.bf16.mxu0 0
        %428 = vmatpush2.bf16.msra.mxu0 0
        %429 = vmatprep.subr.bf16.mxu0 0
        %430 = vmatpush2.bf16.msra.mxu0 0
        %431 = vmatprep.mubr.bf16.mxu0 0
        %432 = vmatmul.mubr.bf16.gmra.mxu0 %v352
        %v433 = vpop.f32.mrf.mxu0
        %v434 = vadd.f32 %v337, %v433
        %v435 = vpop.f32.mrf.mxu0
        %v436 = vpop.f32.mrf.mxu0
        %v437 = vadd.f32 %v337, %v436
        %v438 = vpop.f32.mrf.mxu0
        %439 = vmatprep.mubr.bf16.mxu0 0
        %440 = vmatmul.mubr.bf16.gmra.mxu0 %v355
        %v441 = vpop.f32.mrf.mxu0
        %v442 = vadd.f32 %v337, %v441
        %v443 = vpop.f32.mrf.mxu0
        %v444 = vpop.f32.mrf.mxu0
        %v445 = vadd.f32 %v337, %v444
        %v446 = vpop.f32.mrf.mxu0
        %447 = vmatprep.mubr.bf16.mxu0 0
        %448 = vmatmul.mubr.bf16.gmra.mxu0 %v358
        %v449 = vpop.f32.mrf.mxu0
        %v450 = vadd.f32 %v337, %v449
        %v451 = vpop.f32.mrf.mxu0
        %v452 = vpop.f32.mrf.mxu0
        %v453 = vadd.f32 %v337, %v452
        %v454 = vpop.f32.mrf.mxu0
        %455 = vmatprep.mubr.bf16.mxu0 0
        %456 = vmatmul.mubr.bf16.gmra.mxu0 %v361
        %v457 = vpop.f32.mrf.mxu0
        %v458 = vadd.f32 %v337, %v457
        %v459 = vpop.f32.mrf.mxu0
        %v460 = vpop.f32.mrf.mxu0
        %v461 = vadd.f32 %v337, %v460
        %v462 = vpop.f32.mrf.mxu0
        %463 = vmatprep.mubr.bf16.mxu0 0
        %464 = vmatmul.mubr.bf16.gmra.mxu0 %v364
        %v465 = vpop.f32.mrf.mxu0
        %v466 = vadd.f32 %v337, %v465
        %v467 = vpop.f32.mrf.mxu0
        %v468 = vpop.f32.mrf.mxu0
        %v469 = vadd.f32 %v337, %v468
        %v470 = vpop.f32.mrf.mxu0
        %471 = vmatprep.mubr.bf16.mxu0 0
        %472 = vmatmul.mubr.bf16.gmra.mxu0 %v367
        %v473 = vpop.f32.mrf.mxu0
        %v474 = vadd.f32 %v337, %v473
        %v475 = vpop.f32.mrf.mxu0
        %v476 = vpop.f32.mrf.mxu0
        %v477 = vadd.f32 %v337, %v476
        %v478 = vpop.f32.mrf.mxu0
        %479 = vmatprep.mubr.bf16.mxu0 0
        %480 = vmatmul.mubr.bf16.gmra.mxu0 %v370
        %v481 = vpop.f32.mrf.mxu0
        %v482 = vadd.f32 %v337, %v481
        %v483 = vpop.f32.mrf.mxu0
        %v484 = vpop.f32.mrf.mxu0
        %v485 = vadd.f32 %v337, %v484
        %v486 = vpop.f32.mrf.mxu0
        %487 = vmatprep.mubr.bf16.mxu0 0
        %488 = vmatmul.mubr.bf16.gmra.mxu0 %v373
        %v489 = vpop.f32.mrf.mxu0
        %v490 = vadd.f32 %v337, %v489
        %v491 = vpop.f32.mrf.mxu0
        %v492 = vpop.f32.mrf.mxu0
        %v493 = vadd.f32 %v337, %v492
        %v494 = vpop.f32.mrf.mxu0
        %495 = vmatprep.mubr.bf16.mxu0 0
        %496 = vmatmul.mubr.bf16.gmra.mxu0 %v376
        %v497 = vpop.f32.mrf.mxu0
        %v498 = vadd.f32 %v337, %v497
        %v499 = vpop.f32.mrf.mxu0
        %v500 = vpop.f32.mrf.mxu0
        %v501 = vadd.f32 %v337, %v500
        %v502 = vpop.f32.mrf.mxu0
        %503 = vmatprep.mubr.bf16.mxu0 0
        %504 = vmatmul.mubr.bf16.gmra.mxu0 %v379
        %v505 = vpop.f32.mrf.mxu0
        %v506 = vadd.f32 %v337, %v505
        %v507 = vpop.f32.mrf.mxu0
        %v508 = vpop.f32.mrf.mxu0
        %v509 = vadd.f32 %v337, %v508
        %v510 = vpop.f32.mrf.mxu0
        %511 = vmatprep.mubr.bf16.mxu0 0
        %512 = vmatmul.mubr.bf16.gmra.mxu0 %v382
        %v513 = vpop.f32.mrf.mxu0
        %v514 = vadd.f32 %v337, %v513
        %v515 = vpop.f32.mrf.mxu0
        %v516 = vpop.f32.mrf.mxu0
        %v517 = vadd.f32 %v337, %v516
        %v518 = vpop.f32.mrf.mxu0
        %519 = vmatprep.mubr.bf16.mxu0 0
        %520 = vmatmul.mubr.bf16.gmra.mxu0 %v385
        %v521 = vpop.f32.mrf.mxu0
        %v522 = vadd.f32 %v337, %v521
        %v523 = vpop.f32.mrf.mxu0
        %v524 = vpop.f32.mrf.mxu0
        %v525 = vadd.f32 %v337, %v524
        %v526 = vpop.f32.mrf.mxu0
        %527 = vmatprep.mubr.bf16.mxu0 0
        %528 = vmatmul.mubr.bf16.gmra.mxu0 %v388
        %v529 = vpop.f32.mrf.mxu0
        %v530 = vadd.f32 %v337, %v529
        %v531 = vpop.f32.mrf.mxu0
        %v532 = vpop.f32.mrf.mxu0
        %v533 = vadd.f32 %v337, %v532
        %v534 = vpop.f32.mrf.mxu0
        %535 = vmatprep.mubr.bf16.mxu0 0
        %536 = vmatmul.mubr.bf16.gmra.mxu0 %v391
        %v537 = vpop.f32.mrf.mxu0
        %v538 = vadd.f32 %v337, %v537
        %v539 = vpop.f32.mrf.mxu0
        %v540 = vpop.f32.mrf.mxu0
        %v541 = vadd.f32 %v337, %v540
        %v542 = vpop.f32.mrf.mxu0
        %543 = vmatprep.mubr.bf16.mxu0 0
        %544 = vmatmul.mubr.bf16.gmra.mxu0 %v394
        %v545 = vpop.f32.mrf.mxu0
        %v546 = vadd.f32 %v337, %v545
        %v547 = vpop.f32.mrf.mxu0
        %v548 = vpop.f32.mrf.mxu0
        %v549 = vadd.f32 %v337, %v548
        %v550 = vpop.f32.mrf.mxu0
        %551 = vmatprep.mubr.bf16.mxu0 0
        %552 = vmatmul.mubr.bf16.gmra.mxu0 %v397
        %v553 = vpop.f32.mrf.mxu0
        %v554 = vadd.f32 %v337, %v553
        %v555 = vpop.f32.mrf.mxu0
        %v556 = vpop.f32.mrf.mxu0
        %v557 = vadd.f32 %v337, %v556
        %v558 = vpop.f32.mrf.mxu0
        %559 = vdwg.mxu0
        %v560 = vld [vmem:[%s5 + $0x3] sm:$0x1]
        %v561 = vld [vmem:[%s5 + $0x4] sm:$0x1]
        %vm562 = vcmask 523264
        %v563 = vsel %vm562, %v434, 0.0
        %564 = vadd.xlane.f32.xlu0 %v563
        %v565 = vpop.xlane.xlu0 %564
        %v566 = vsel %vm562, %v437, 0.0
        %567 = vadd.xlane.f32.xlu0 %v566
        %v568 = vpop.xlane.xlu0 %567
        %v569 = vsel %vm562, %v442, 0.0
        %570 = vadd.xlane.f32.xlu0 %v569
        %v571 = vpop.xlane.xlu0 %570
        %v572 = vsel %vm562, %v445, 0.0
        %573 = vadd.xlane.f32.xlu0 %v572
        %v574 = vpop.xlane.xlu0 %573
        %v575 = vsel %vm562, %v450, 0.0
        %576 = vadd.xlane.f32.xlu0 %v575
        %v577 = vpop.xlane.xlu0 %576
        %v578 = vsel %vm562, %v453, 0.0
        %579 = vadd.xlane.f32.xlu0 %v578
        %v580 = vpop.xlane.xlu0 %579
        %v581 = vsel %vm562, %v458, 0.0
        %582 = vadd.xlane.f32.xlu0 %v581
        %v583 = vpop.xlane.xlu0 %582
        %v584 = vsel %vm562, %v461, 0.0
        %585 = vadd.xlane.f32.xlu0 %v584
        %v586 = vpop.xlane.xlu0 %585
        %v587 = vsel %vm562, %v466, 0.0
        %588 = vadd.xlane.f32.xlu0 %v587
        %v589 = vpop.xlane.xlu0 %588
        %v590 = vsel %vm562, %v469, 0.0
        %591 = vadd.xlane.f32.xlu0 %v590
        %v592 = vpop.xlane.xlu0 %591
        %v593 = vsel %vm562, %v474, 0.0
        %594 = vadd.xlane.f32.xlu0 %v593
        %v595 = vpop.xlane.xlu0 %594
        %v596 = vsel %vm562, %v477, 0.0
        %597 = vadd.xlane.f32.xlu0 %v596
        %v598 = vpop.xlane.xlu0 %597
        %v599 = vsel %vm562, %v482, 0.0
        %600 = vadd.xlane.f32.xlu0 %v599
        %v601 = vpop.xlane.xlu0 %600
        %v602 = vsel %vm562, %v485, 0.0
        %603 = vadd.xlane.f32.xlu0 %v602
        %v604 = vpop.xlane.xlu0 %603
        %v605 = vsel %vm562, %v490, 0.0
        %606 = vadd.xlane.f32.xlu0 %v605
        %v607 = vpop.xlane.xlu0 %606
        %v608 = vsel %vm562, %v493, 0.0
        %609 = vadd.xlane.f32.xlu0 %v608
        %v610 = vpop.xlane.xlu0 %609
        %v611 = vsel %vm562, %v498, 0.0
        %612 = vadd.xlane.f32.xlu0 %v611
        %v613 = vpop.xlane.xlu0 %612
        %v614 = vsel %vm562, %v501, 0.0
        %615 = vadd.xlane.f32.xlu0 %v614
        %v616 = vpop.xlane.xlu0 %615
        %v617 = vsel %vm562, %v506, 0.0
        %618 = vadd.xlane.f32.xlu0 %v617
        %v619 = vpop.xlane.xlu0 %618
        %v620 = vsel %vm562, %v509, 0.0
        %621 = vadd.xlane.f32.xlu0 %v620
        %v622 = vpop.xlane.xlu0 %621
        %v623 = vsel %vm562, %v514, 0.0
        %624 = vadd.xlane.f32.xlu0 %v623
        %v625 = vpop.xlane.xlu0 %624
        %v626 = vsel %vm562, %v517, 0.0
        %627 = vadd.xlane.f32.xlu0 %v626
        %v628 = vpop.xlane.xlu0 %627
        %v629 = vsel %vm562, %v522, 0.0
        %630 = vadd.xlane.f32.xlu0 %v629
        %v631 = vpop.xlane.xlu0 %630
        %v632 = vsel %vm562, %v525, 0.0
        %633 = vadd.xlane.f32.xlu0 %v632
        %v634 = vpop.xlane.xlu0 %633
        %v635 = vsel %vm562, %v530, 0.0
        %636 = vadd.xlane.f32.xlu0 %v635
        %v637 = vpop.xlane.xlu0 %636
        %v638 = vsel %vm562, %v533, 0.0
        %639 = vadd.xlane.f32.xlu0 %v638
        %v640 = vpop.xlane.xlu0 %639
        %v641 = vsel %vm562, %v538, 0.0
        %642 = vadd.xlane.f32.xlu0 %v641
        %v643 = vpop.xlane.xlu0 %642
        %v644 = vsel %vm562, %v541, 0.0
        %645 = vadd.xlane.f32.xlu0 %v644
        %v646 = vpop.xlane.xlu0 %645
        %v647 = vsel %vm562, %v546, 0.0
        %648 = vadd.xlane.f32.xlu0 %v647
        %v649 = vpop.xlane.xlu0 %648
        %v650 = vsel %vm562, %v549, 0.0
        %651 = vadd.xlane.f32.xlu0 %v650
        %v652 = vpop.xlane.xlu0 %651
        %v653 = vsel %vm562, %v554, 0.0
        %654 = vadd.xlane.f32.xlu0 %v653
        %v655 = vpop.xlane.xlu0 %654
        %v656 = vsel %vm562, %v557, 0.0
        %657 = vadd.xlane.f32.xlu0 %v656
        %v658 = vpop.xlane.xlu0 %657
        %v659 = vrcp.pop 64.0
        %v660 = vmul.f32 %v565, %v659
        %v661 = vmul.f32 %v568, %v659
        %v662 = vmul.f32 %v571, %v659
        %v663 = vmul.f32 %v574, %v659
        %v664 = vmul.f32 %v577, %v659
        %v665 = vmul.f32 %v580, %v659
        %v666 = vmul.f32 %v583, %v659
        %v667 = vmul.f32 %v586, %v659
        %v668 = vmul.f32 %v589, %v659
        %v669 = vmul.f32 %v592, %v659
        %v670 = vmul.f32 %v595, %v659
        %v671 = vmul.f32 %v598, %v659
        %v672 = vmul.f32 %v601, %v659
        %v673 = vmul.f32 %v604, %v659
        %v674 = vmul.f32 %v607, %v659
        %v675 = vmul.f32 %v610, %v659
        %v676 = vmul.f32 %v613, %v659
        %v677 = vmul.f32 %v616, %v659
        %v678 = vmul.f32 %v619, %v659
        %v679 = vmul.f32 %v622, %v659
        %v680 = vmul.f32 %v625, %v659
        %v681 = vmul.f32 %v628, %v659
        %v682 = vmul.f32 %v631, %v659
        %v683 = vmul.f32 %v634, %v659
        %v684 = vmul.f32 %v637, %v659
        %v685 = vmul.f32 %v640, %v659
        %v686 = vmul.f32 %v643, %v659
        %v687 = vmul.f32 %v646, %v659
        %v688 = vmul.f32 %v649, %v659
        %v689 = vmul.f32 %v652, %v659
        %v690 = vmul.f32 %v655, %v659
        %v691 = vmul.f32 %v658, %v659
        %v692 = vmul.f32 %v434, %v434
        %v693 = vmul.f32 %v437, %v437
        %v694 = vmul.f32 %v442, %v442
        %v695 = vmul.f32 %v445, %v445
        %v696 = vmul.f32 %v450, %v450
        %v697 = vmul.f32 %v453, %v453
        %v698 = vmul.f32 %v458, %v458
        %v699 = vmul.f32 %v461, %v461
        %v700 = vmul.f32 %v466, %v466
        %v701 = vmul.f32 %v469, %v469
        %v702 = vmul.f32 %v474, %v474
        %v703 = vmul.f32 %v477, %v477
        %v704 = vmul.f32 %v482, %v482
        %v705 = vmul.f32 %v485, %v485
        %v706 = vmul.f32 %v490, %v490
        %v707 = vmul.f32 %v493, %v493
        %v708 = vmul.f32 %v498, %v498
        %v709 = vmul.f32 %v501, %v501
        %v710 = vmul.f32 %v506, %v506
        %v711 = vmul.f32 %v509, %v509
        %v712 = vmul.f32 %v514, %v514
        %v713 = vmul.f32 %v517, %v517
        %v714 = vmul.f32 %v522, %v522
        %v715 = vmul.f32 %v525, %v525
        %v716 = vmul.f32 %v530, %v530
        %v717 = vmul.f32 %v533, %v533
        %v718 = vmul.f32 %v538, %v538
        %v719 = vmul.f32 %v541, %v541
        %v720 = vmul.f32 %v546, %v546
        %v721 = vmul.f32 %v549, %v549
        %v722 = vmul.f32 %v554, %v554
        %v723 = vmul.f32 %v557, %v557
        %v724 = vsel %vm562, %v692, 0.0
        %725 = vadd.xlane.f32.xlu0 %v724
        %v726 = vpop.xlane.xlu0 %725
        %v727 = vsel %vm562, %v693, 0.0
        %728 = vadd.xlane.f32.xlu0 %v727
        %v729 = vpop.xlane.xlu0 %728
        %v730 = vsel %vm562, %v694, 0.0
        %731 = vadd.xlane.f32.xlu0 %v730
        %v732 = vpop.xlane.xlu0 %731
        %v733 = vsel %vm562, %v695, 0.0
        %734 = vadd.xlane.f32.xlu0 %v733
        %v735 = vpop.xlane.xlu0 %734
        %v736 = vsel %vm562, %v696, 0.0
        %737 = vadd.xlane.f32.xlu0 %v736
        %v738 = vpop.xlane.xlu0 %737
        %v739 = vsel %vm562, %v697, 0.0
        %740 = vadd.xlane.f32.xlu0 %v739
        %v741 = vpop.xlane.xlu0 %740
        %v742 = vsel %vm562, %v698, 0.0
        %743 = vadd.xlane.f32.xlu0 %v742
        %v744 = vpop.xlane.xlu0 %743
        %v745 = vsel %vm562, %v699, 0.0
        %746 = vadd.xlane.f32.xlu0 %v745
        %v747 = vpop.xlane.xlu0 %746
        %v748 = vsel %vm562, %v700, 0.0
        %749 = vadd.xlane.f32.xlu0 %v748
        %v750 = vpop.xlane.xlu0 %749
        %v751 = vsel %vm562, %v701, 0.0
        %752 = vadd.xlane.f32.xlu0 %v751
        %v753 = vpop.xlane.xlu0 %752
        %v754 = vsel %vm562, %v702, 0.0
        %755 = vadd.xlane.f32.xlu0 %v754
        %v756 = vpop.xlane.xlu0 %755
        %v757 = vsel %vm562, %v703, 0.0
        %758 = vadd.xlane.f32.xlu0 %v757
        %v759 = vpop.xlane.xlu0 %758
        %v760 = vsel %vm562, %v704, 0.0
        %761 = vadd.xlane.f32.xlu0 %v760
        %v762 = vpop.xlane.xlu0 %761
        %v763 = vsel %vm562, %v705, 0.0
        %764 = vadd.xlane.f32.xlu0 %v763
        %v765 = vpop.xlane.xlu0 %764
        %v766 = vsel %vm562, %v706, 0.0
        %767 = vadd.xlane.f32.xlu0 %v766
        %v768 = vpop.xlane.xlu0 %767
        %v769 = vsel %vm562, %v707, 0.0
        %770 = vadd.xlane.f32.xlu0 %v769
        %v771 = vpop.xlane.xlu0 %770
        %v772 = vsel %vm562, %v708, 0.0
        %773 = vadd.xlane.f32.xlu0 %v772
        %v774 = vpop.xlane.xlu0 %773
        %v775 = vsel %vm562, %v709, 0.0
        %776 = vadd.xlane.f32.xlu0 %v775
        %v777 = vpop.xlane.xlu0 %776
        %v778 = vsel %vm562, %v710, 0.0
        %779 = vadd.xlane.f32.xlu0 %v778
        %v780 = vpop.xlane.xlu0 %779
        %v781 = vsel %vm562, %v711, 0.0
        %782 = vadd.xlane.f32.xlu0 %v781
        %v783 = vpop.xlane.xlu0 %782
        %v784 = vsel %vm562, %v712, 0.0
        %785 = vadd.xlane.f32.xlu0 %v784
        %v786 = vpop.xlane.xlu0 %785
        %v787 = vsel %vm562, %v713, 0.0
        %788 = vadd.xlane.f32.xlu0 %v787
        %v789 = vpop.xlane.xlu0 %788
        %v790 = vsel %vm562, %v714, 0.0
        %791 = vadd.xlane.f32.xlu0 %v790
        %v792 = vpop.xlane.xlu0 %791
        %v793 = vsel %vm562, %v715, 0.0
        %794 = vadd.xlane.f32.xlu0 %v793
        %v795 = vpop.xlane.xlu0 %794
        %v796 = vsel %vm562, %v716, 0.0
        %797 = vadd.xlane.f32.xlu0 %v796
        %v798 = vpop.xlane.xlu0 %797
        %v799 = vsel %vm562, %v717, 0.0
        %800 = vadd.xlane.f32.xlu0 %v799
        %v801 = vpop.xlane.xlu0 %800
        %v802 = vsel %vm562, %v718, 0.0
        %803 = vadd.xlane.f32.xlu0 %v802
        %v804 = vpop.xlane.xlu0 %803
        %v805 = vsel %vm562, %v719, 0.0
        %806 = vadd.xlane.f32.xlu0 %v805
        %v807 = vpop.xlane.xlu0 %806
        %v808 = vsel %vm562, %v720, 0.0
        %809 = vadd.xlane.f32.xlu0 %v808
        %v810 = vpop.xlane.xlu0 %809
        %v811 = vsel %vm562, %v721, 0.0
        %812 = vadd.xlane.f32.xlu0 %v811
        %v813 = vpop.xlane.xlu0 %812
        %v814 = vsel %vm562, %v722, 0.0
        %815 = vadd.xlane.f32.xlu0 %v814
        %v816 = vpop.xlane.xlu0 %815
        %v817 = vsel %vm562, %v723, 0.0
        %818 = vadd.xlane.f32.xlu0 %v817
        %v819 = vpop.xlane.xlu0 %818
        %v820 = vmul.f32 %v726, %v659
        %v821 = vmul.f32 %v729, %v659
        %v822 = vmul.f32 %v732, %v659
        %v823 = vmul.f32 %v735, %v659
        %v824 = vmul.f32 %v738, %v659
        %v825 = vmul.f32 %v741, %v659
        %v826 = vmul.f32 %v744, %v659
        %v827 = vmul.f32 %v747, %v659
        %v828 = vmul.f32 %v750, %v659
        %v829 = vmul.f32 %v753, %v659
        %v830 = vmul.f32 %v756, %v659
        %v831 = vmul.f32 %v759, %v659
        %v832 = vmul.f32 %v762, %v659
        %v833 = vmul.f32 %v765, %v659
        %v834 = vmul.f32 %v768, %v659
        %v835 = vmul.f32 %v771, %v659
        %v836 = vmul.f32 %v774, %v659
        %v837 = vmul.f32 %v777, %v659
        %v838 = vmul.f32 %v780, %v659
        %v839 = vmul.f32 %v783, %v659
        %v840 = vmul.f32 %v786, %v659
        %v841 = vmul.f32 %v789, %v659
        %v842 = vmul.f32 %v792, %v659
        %v843 = vmul.f32 %v795, %v659
        %v844 = vmul.f32 %v798, %v659
        %v845 = vmul.f32 %v801, %v659
        %v846 = vmul.f32 %v804, %v659
        %v847 = vmul.f32 %v807, %v659
        %v848 = vmul.f32 %v810, %v659
        %v849 = vmul.f32 %v813, %v659
        %v850 = vmul.f32 %v816, %v659
        %v851 = vmul.f32 %v819, %v659
        %v852 = vmul.f32 %v660, %v660
        %v853 = vmul.f32 %v661, %v661
        %v854 = vmul.f32 %v662, %v662
        %v855 = vmul.f32 %v663, %v663
        %v856 = vmul.f32 %v664, %v664
        %v857 = vmul.f32 %v665, %v665
        %v858 = vmul.f32 %v666, %v666
        %v859 = vmul.f32 %v667, %v667
        %v860 = vmul.f32 %v668, %v668
        %v861 = vmul.f32 %v669, %v669
        %v862 = vmul.f32 %v670, %v670
        %v863 = vmul.f32 %v671, %v671
        %v864 = vmul.f32 %v672, %v672
        %v865 = vmul.f32 %v673, %v673
        %v866 = vmul.f32 %v674, %v674
        %v867 = vmul.f32 %v675, %v675
        %v868 = vmul.f32 %v676, %v676
        %v869 = vmul.f32 %v677, %v677
        %v870 = vmul.f32 %v678, %v678
        %v871 = vmul.f32 %v679, %v679
        %v872 = vmul.f32 %v680, %v680
        %v873 = vmul.f32 %v681, %v681
        %v874 = vmul.f32 %v682, %v682
        %v875 = vmul.f32 %v683, %v683
        %v876 = vmul.f32 %v684, %v684
        %v877 = vmul.f32 %v685, %v685
        %v878 = vmul.f32 %v686, %v686
        %v879 = vmul.f32 %v687, %v687
        %v880 = vmul.f32 %v688, %v688
        %v881 = vmul.f32 %v689, %v689
        %v882 = vmul.f32 %v690, %v690
        %v883 = vmul.f32 %v691, %v691
        %v884 = vsub.f32 %v820, %v852
        %v885 = vsub.f32 %v821, %v853
        %v886 = vsub.f32 %v822, %v854
        %v887 = vsub.f32 %v823, %v855
        %v888 = vsub.f32 %v824, %v856
        %v889 = vsub.f32 %v825, %v857
        %v890 = vsub.f32 %v826, %v858
        %v891 = vsub.f32 %v827, %v859
        %v892 = vsub.f32 %v828, %v860
        %v893 = vsub.f32 %v829, %v861
        %v894 = vsub.f32 %v830, %v862
        %v895 = vsub.f32 %v831, %v863
        %v896 = vsub.f32 %v832, %v864
        %v897 = vsub.f32 %v833, %v865
        %v898 = vsub.f32 %v834, %v866
        %v899 = vsub.f32 %v835, %v867
        %v900 = vsub.f32 %v836, %v868
        %v901 = vsub.f32 %v837, %v869
        %v902 = vsub.f32 %v838, %v870
        %v903 = vsub.f32 %v839, %v871
        %v904 = vsub.f32 %v840, %v872
        %v905 = vsub.f32 %v841, %v873
        %v906 = vsub.f32 %v842, %v874
        %v907 = vsub.f32 %v843, %v875
        %v908 = vsub.f32 %v844, %v876
        %v909 = vsub.f32 %v845, %v877
        %v910 = vsub.f32 %v846, %v878
        %v911 = vsub.f32 %v847, %v879
        %v912 = vsub.f32 %v848, %v880
        %v913 = vsub.f32 %v849, %v881
        %v914 = vsub.f32 %v850, %v882
        %v915 = vsub.f32 %v851, %v883
        %v916 = vadd.f32 %v884, 1e-05
        %v917 = vadd.f32 %v885, 1e-05
        %v918 = vadd.f32 %v886, 1e-05
        %v919 = vadd.f32 %v887, 1e-05
        %v920 = vadd.f32 %v888, 1e-05
        %v921 = vadd.f32 %v889, 1e-05
        %v922 = vadd.f32 %v890, 1e-05
        %v923 = vadd.f32 %v891, 1e-05
        %v924 = vadd.f32 %v892, 1e-05
        %v925 = vadd.f32 %v893, 1e-05
        %v926 = vadd.f32 %v894, 1e-05
        %v927 = vadd.f32 %v895, 1e-05
        %v928 = vadd.f32 %v896, 1e-05
        %v929 = vadd.f32 %v897, 1e-05
        %v930 = vadd.f32 %v898, 1e-05
        %v931 = vadd.f32 %v899, 1e-05
        %v932 = vadd.f32 %v900, 1e-05
        %v933 = vadd.f32 %v901, 1e-05
        %v934 = vadd.f32 %v902, 1e-05
        %v935 = vadd.f32 %v903, 1e-05
        %v936 = vadd.f32 %v904, 1e-05
        %v937 = vadd.f32 %v905, 1e-05
        %v938 = vadd.f32 %v906, 1e-05
        %v939 = vadd.f32 %v907, 1e-05
        %v940 = vadd.f32 %v908, 1e-05
        %v941 = vadd.f32 %v909, 1e-05
        %v942 = vadd.f32 %v910, 1e-05
        %v943 = vadd.f32 %v911, 1e-05
        %v944 = vadd.f32 %v912, 1e-05
        %v945 = vadd.f32 %v913, 1e-05
        %v946 = vadd.f32 %v914, 1e-05
        %v947 = vadd.f32 %v915, 1e-05
        %v948 = vrsqrt.pop %v916
        %v949 = vrsqrt.pop %v917
        %v950 = vrsqrt.pop %v918
        %v951 = vrsqrt.pop %v919
        %v952 = vrsqrt.pop %v920
        %v953 = vrsqrt.pop %v921
        %v954 = vrsqrt.pop %v922
        %v955 = vrsqrt.pop %v923
        %v956 = vrsqrt.pop %v924
        %v957 = vrsqrt.pop %v925
        %v958 = vrsqrt.pop %v926
        %v959 = vrsqrt.pop %v927
        %v960 = vrsqrt.pop %v928
        %v961 = vrsqrt.pop %v929
        %v962 = vrsqrt.pop %v930
        %v963 = vrsqrt.pop %v931
        %v964 = vrsqrt.pop %v932
        %v965 = vrsqrt.pop %v933
        %v966 = vrsqrt.pop %v934
        %v967 = vrsqrt.pop %v935
        %v968 = vrsqrt.pop %v936
        %v969 = vrsqrt.pop %v937
        %v970 = vrsqrt.pop %v938
        %v971 = vrsqrt.pop %v939
        %v972 = vrsqrt.pop %v940
        %v973 = vrsqrt.pop %v941
        %v974 = vrsqrt.pop %v942
        %v975 = vrsqrt.pop %v943
        %v976 = vrsqrt.pop %v944
        %v977 = vrsqrt.pop %v945
        %v978 = vrsqrt.pop %v946
        %v979 = vrsqrt.pop %v947
        %v980 = vlaneseq
        %v981 = vshrl.u32 %v980, 7
        %v982 = vsub.s32 0, %v981
        %v983 = vrot.slane %v560, %v982
        %v984 = vmul.f32 %v948, %v983
        %v985 = vmul.f32 %v949, %v983
        %v986 = vmul.f32 %v950, %v983
        %v987 = vmul.f32 %v951, %v983
        %v988 = vmul.f32 %v952, %v983
        %v989 = vmul.f32 %v953, %v983
        %v990 = vmul.f32 %v954, %v983
        %v991 = vmul.f32 %v955, %v983
        %v992 = vmul.f32 %v956, %v983
        %v993 = vmul.f32 %v957, %v983
        %v994 = vmul.f32 %v958, %v983
        %v995 = vmul.f32 %v959, %v983
        %v996 = vmul.f32 %v960, %v983
        %v997 = vmul.f32 %v961, %v983
        %v998 = vmul.f32 %v962, %v983
        %v999 = vmul.f32 %v963, %v983
        %v1000 = vmul.f32 %v964, %v983
        %v1001 = vmul.f32 %v965, %v983
        %v1002 = vmul.f32 %v966, %v983
        %v1003 = vmul.f32 %v967, %v983
        %v1004 = vmul.f32 %v968, %v983
        %v1005 = vmul.f32 %v969, %v983
        %v1006 = vmul.f32 %v970, %v983
        %v1007 = vmul.f32 %v971, %v983
        %v1008 = vmul.f32 %v972, %v983
        %v1009 = vmul.f32 %v973, %v983
        %v1010 = vmul.f32 %v974, %v983
        %v1011 = vmul.f32 %v975, %v983
        %v1012 = vmul.f32 %v976, %v983
        %v1013 = vmul.f32 %v977, %v983
        %v1014 = vmul.f32 %v978, %v983
        %v1015 = vmul.f32 %v979, %v983
        %v1016 = vmul.f32 %v434, %v984
        %v1017 = vmul.f32 %v437, %v985
        %v1018 = vmul.f32 %v442, %v986
        %v1019 = vmul.f32 %v445, %v987
        %v1020 = vmul.f32 %v450, %v988
        %v1021 = vmul.f32 %v453, %v989
        %v1022 = vmul.f32 %v458, %v990
        %v1023 = vmul.f32 %v461, %v991
        %v1024 = vmul.f32 %v466, %v992
        %v1025 = vmul.f32 %v469, %v993
        %v1026 = vmul.f32 %v474, %v994
        %v1027 = vmul.f32 %v477, %v995
        %v1028 = vmul.f32 %v482, %v996
        %v1029 = vmul.f32 %v485, %v997
        %v1030 = vmul.f32 %v490, %v998
        %v1031 = vmul.f32 %v493, %v999
        %v1032 = vmul.f32 %v498, %v1000
        %v1033 = vmul.f32 %v501, %v1001
        %v1034 = vmul.f32 %v506, %v1002
        %v1035 = vmul.f32 %v509, %v1003
        %v1036 = vmul.f32 %v514, %v1004
        %v1037 = vmul.f32 %v517, %v1005
        %v1038 = vmul.f32 %v522, %v1006
        %v1039 = vmul.f32 %v525, %v1007
        %v1040 = vmul.f32 %v530, %v1008
        %v1041 = vmul.f32 %v533, %v1009
        %v1042 = vmul.f32 %v538, %v1010
        %v1043 = vmul.f32 %v541, %v1011
        %v1044 = vmul.f32 %v546, %v1012
        %v1045 = vmul.f32 %v549, %v1013
        %v1046 = vmul.f32 %v554, %v1014
        %v1047 = vmul.f32 %v557, %v1015
        %v1048 = vmul.f32 %v660, %v984
        %v1049 = vmul.f32 %v661, %v985
        %v1050 = vmul.f32 %v662, %v986
        %v1051 = vmul.f32 %v663, %v987
        %v1052 = vmul.f32 %v664, %v988
        %v1053 = vmul.f32 %v665, %v989
        %v1054 = vmul.f32 %v666, %v990
        %v1055 = vmul.f32 %v667, %v991
        %v1056 = vmul.f32 %v668, %v992
        %v1057 = vmul.f32 %v669, %v993
        %v1058 = vmul.f32 %v670, %v994
        %v1059 = vmul.f32 %v671, %v995
        %v1060 = vmul.f32 %v672, %v996
        %v1061 = vmul.f32 %v673, %v997
        %v1062 = vmul.f32 %v674, %v998
        %v1063 = vmul.f32 %v675, %v999
        %v1064 = vmul.f32 %v676, %v1000
        %v1065 = vmul.f32 %v677, %v1001
        %v1066 = vmul.f32 %v678, %v1002
        %v1067 = vmul.f32 %v679, %v1003
        %v1068 = vmul.f32 %v680, %v1004
        %v1069 = vmul.f32 %v681, %v1005
        %v1070 = vmul.f32 %v682, %v1006
        %v1071 = vmul.f32 %v683, %v1007
        %v1072 = vmul.f32 %v684, %v1008
        %v1073 = vmul.f32 %v685, %v1009
        %v1074 = vmul.f32 %v686, %v1010
        %v1075 = vmul.f32 %v687, %v1011
        %v1076 = vmul.f32 %v688, %v1012
        %v1077 = vmul.f32 %v689, %v1013
        %v1078 = vmul.f32 %v690, %v1014
        %v1079 = vmul.f32 %v691, %v1015
        %v1080 = vlaneseq
        %v1081 = vshrl.u32 %v1080, 7
        %v1082 = vsub.s32 0, %v1081
        %v1083 = vrot.slane %v561, %v1082
        %v1084 = vsub.f32 %v1083, %v1048
        %v1085 = vsub.f32 %v1083, %v1049
        %v1086 = vsub.f32 %v1083, %v1050
        %v1087 = vsub.f32 %v1083, %v1051
        %v1088 = vsub.f32 %v1083, %v1052
        %v1089 = vsub.f32 %v1083, %v1053
        %v1090 = vsub.f32 %v1083, %v1054
        %v1091 = vsub.f32 %v1083, %v1055
        %v1092 = vsub.f32 %v1083, %v1056
        %v1093 = vsub.f32 %v1083, %v1057
        %v1094 = vsub.f32 %v1083, %v1058
        %v1095 = vsub.f32 %v1083, %v1059
        %v1096 = vsub.f32 %v1083, %v1060
        %v1097 = vsub.f32 %v1083, %v1061
        %v1098 = vsub.f32 %v1083, %v1062
        %v1099 = vsub.f32 %v1083, %v1063
        %v1100 = vsub.f32 %v1083, %v1064
        %v1101 = vsub.f32 %v1083, %v1065
        %v1102 = vsub.f32 %v1083, %v1066
        %v1103 = vsub.f32 %v1083, %v1067
        %v1104 = vsub.f32 %v1083, %v1068
        %v1105 = vsub.f32 %v1083, %v1069
        %v1106 = vsub.f32 %v1083, %v1070
        %v1107 = vsub.f32 %v1083, %v1071
        %v1108 = vsub.f32 %v1083, %v1072
        %v1109 = vsub.f32 %v1083, %v1073
        %v1110 = vsub.f32 %v1083, %v1074
        %v1111 = vsub.f32 %v1083, %v1075
        %v1112 = vsub.f32 %v1083, %v1076
        %v1113 = vsub.f32 %v1083, %v1077
        %v1114 = vsub.f32 %v1083, %v1078
        %v1115 = vsub.f32 %v1083, %v1079
        %v1116 = vadd.f32 %v1016, %v1084
        %v1117 = vadd.f32 %v1017, %v1085
        %v1118 = vadd.f32 %v1018, %v1086
        %v1119 = vadd.f32 %v1019, %v1087
        %v1120 = vadd.f32 %v1020, %v1088
        %v1121 = vadd.f32 %v1021, %v1089
        %v1122 = vadd.f32 %v1022, %v1090
        %v1123 = vadd.f32 %v1023, %v1091
        %v1124 = vadd.f32 %v1024, %v1092
        %v1125 = vadd.f32 %v1025, %v1093
        %v1126 = vadd.f32 %v1026, %v1094
        %v1127 = vadd.f32 %v1027, %v1095
        %v1128 = vadd.f32 %v1028, %v1096
        %v1129 = vadd.f32 %v1029, %v1097
        %v1130 = vadd.f32 %v1030, %v1098
        %v1131 = vadd.f32 %v1031, %v1099
        %v1132 = vadd.f32 %v1032, %v1100
        %v1133 = vadd.f32 %v1033, %v1101
        %v1134 = vadd.f32 %v1034, %v1102
        %v1135 = vadd.f32 %v1035, %v1103
        %v1136 = vadd.f32 %v1036, %v1104
        %v1137 = vadd.f32 %v1037, %v1105
        %v1138 = vadd.f32 %v1038, %v1106
        %v1139 = vadd.f32 %v1039, %v1107
        %v1140 = vadd.f32 %v1040, %v1108
        %v1141 = vadd.f32 %v1041, %v1109
        %v1142 = vadd.f32 %v1042, %v1110
        %v1143 = vadd.f32 %v1043, %v1111
        %v1144 = vadd.f32 %v1044, %v1112
        %v1145 = vadd.f32 %v1045, %v1113
        %v1146 = vadd.f32 %v1046, %v1114
        %v1147 = vadd.f32 %v1047, %v1115
        %v1148 = vpack.c.bf16 %v1117, %v1116
        %v1149 = vpack.c.bf16 %v1119, %v1118
        %v1150 = vpack.c.bf16 %v1121, %v1120
        %v1151 = vpack.c.bf16 %v1123, %v1122
        %v1152 = vpack.c.bf16 %v1125, %v1124
        %v1153 = vpack.c.bf16 %v1127, %v1126
        %v1154 = vpack.c.bf16 %v1129, %v1128
        %v1155 = vpack.c.bf16 %v1131, %v1130
        %v1156 = vpack.c.bf16 %v1133, %v1132
        %v1157 = vpack.c.bf16 %v1135, %v1134
        %v1158 = vpack.c.bf16 %v1137, %v1136
        %v1159 = vpack.c.bf16 %v1139, %v1138
        %v1160 = vpack.c.bf16 %v1141, %v1140
        %v1161 = vpack.c.bf16 %v1143, %v1142
        %v1162 = vpack.c.bf16 %v1145, %v1144
        %v1163 = vpack.c.bf16 %v1147, %v1146
        %v1164 = vld [vmem:[%s2] sm:$0xf]
        %v1165 = vld [vmem:[%s2 + $0x4] sm:$0xf]
        %v1166 = vld [vmem:[%s2 + $0x8] sm:$0xf]
        %v1167 = vld [vmem:[%s2 + $0xc] sm:$0xf]
        %v1168 = vld [vmem:[%s2 + $0x10] sm:$0xf]
        %v1169 = vld [vmem:[%s2 + $0x14] sm:$0xf]
        %v1170 = vld [vmem:[%s2 + $0x18] sm:$0xf]
        %v1171 = vld [vmem:[%s2 + $0x1c] sm:$0xf]
        %v1172 = vld [vmem:[%s6 + $0x1] sm:$0x1]
        %v1173 = vlaneseq
        %v1174 = vshrl.u32 %v1173, 7
        %v1175 = vsub.s32 0, %v1174
        %v1176 = vrot.slane %v1172, %v1175
        %v1185 = vunpack.c.l.b16 %v1164
        %v1186 = vunpack.c.l.b16 %v1165
        %v1187 = vunpack.c.l.b16 %v1166
        %v1188 = vunpack.c.l.b16 %v1167
        %v1189 = vunpack.c.l.b16 %v1168
        %v1190 = vunpack.c.l.b16 %v1169
        %v1191 = vunpack.c.l.b16 %v1170
        %v1192 = vunpack.c.l.b16 %v1171
        %v1193 = vpack.c.b16 %v1186, %v1185
        %v1194 = vpack.c.b16 %v1188, %v1187
        %v1195 = vpack.c.b16 %v1190, %v1189
        %v1196 = vpack.c.b16 %v1192, %v1191
        %v1202 = vsel %vm562, %v1148, 0
        %v1205 = vsel %vm562, %v1149, 0
        %v1208 = vsel %vm562, %v1150, 0
        %v1211 = vsel %vm562, %v1151, 0
        %v1214 = vsel %vm562, %v1152, 0
        %v1217 = vsel %vm562, %v1153, 0
        %v1220 = vsel %vm562, %v1154, 0
        %v1223 = vsel %vm562, %v1155, 0
        %v1226 = vsel %vm562, %v1156, 0
        %v1229 = vsel %vm562, %v1157, 0
        %v1232 = vsel %vm562, %v1158, 0
        %v1235 = vsel %vm562, %v1159, 0
        %v1238 = vsel %vm562, %v1160, 0
        %v1241 = vsel %vm562, %v1161, 0
        %v1244 = vsel %vm562, %v1162, 0
        %v1247 = vsel %vm562, %v1163, 0
        %1249 = vmatprep.subr.bf16.mxu0 0
        %1250 = vmatpush1.bf16.msra.mxu0 0
        %1251 = vmatprep.subr.bf16.mxu0 0
        %1252 = vmatpush1.bf16.msra.mxu0 0
        %1253 = vmatprep.subr.bf16.mxu0 0
        %1254 = vmatpush1.bf16.msra.mxu0 0
        %1255 = vmatprep.subr.bf16.mxu0 0
        %1256 = vmatpush1.bf16.msra.mxu0 0
        %1257 = vmatprep.subr.bf16.mxu0 0
        %1258 = vmatpush1.bf16.msra.mxu0 %v1196
        %1259 = vmatprep.subr.bf16.mxu0 0
        %1260 = vmatpush1.bf16.msra.mxu0 %v1195
        %1261 = vmatprep.subr.bf16.mxu0 0
        %1262 = vmatpush1.bf16.msra.mxu0 %v1194
        %1263 = vmatprep.subr.bf16.mxu0 0
        %1264 = vmatpush1.bf16.msra.mxu0 %v1193
        %1265 = vmatprep.subr.bf16.mxu0 0
        %1266 = vmatpush2.bf16.msra.mxu0 0
        %1267 = vmatprep.subr.bf16.mxu0 0
        %1268 = vmatpush2.bf16.msra.mxu0 0
        %1269 = vmatprep.subr.bf16.mxu0 0
        %1270 = vmatpush2.bf16.msra.mxu0 0
        %1271 = vmatprep.subr.bf16.mxu0 0
        %1272 = vmatpush2.bf16.msra.mxu0 0
        %1273 = vmatprep.subr.bf16.mxu0 0
        %1274 = vmatpush2.bf16.msra.mxu0 0
        %1275 = vmatprep.subr.bf16.mxu0 0
        %1276 = vmatpush2.bf16.msra.mxu0 0
        %1277 = vmatprep.subr.bf16.mxu0 0
        %1278 = vmatpush2.bf16.msra.mxu0 0
        %1279 = vmatprep.subr.bf16.mxu0 0
        %1280 = vmatpush2.bf16.msra.mxu0 0
        %1281 = vmatprep.mubr.bf16.mxu0 0
        %1282 = vmatmul.mubr.bf16.gmra.mxu0 %v1202
        %v1283 = vpop.f32.mrf.mxu0
        %v1284 = vadd.f32 %v1176, %v1283
        %v1285 = vpop.f32.mrf.mxu0
        %v1286 = vpop.f32.mrf.mxu0
        %v1287 = vadd.f32 %v1176, %v1286
        %v1288 = vpop.f32.mrf.mxu0
        %1289 = vmatprep.mubr.bf16.mxu0 0
        %1290 = vmatmul.mubr.bf16.gmra.mxu0 %v1205
        %v1291 = vpop.f32.mrf.mxu0
        %v1292 = vadd.f32 %v1176, %v1291
        %v1293 = vpop.f32.mrf.mxu0
        %v1294 = vpop.f32.mrf.mxu0
        %v1295 = vadd.f32 %v1176, %v1294
        %v1296 = vpop.f32.mrf.mxu0
        %1297 = vmatprep.mubr.bf16.mxu0 0
        %1298 = vmatmul.mubr.bf16.gmra.mxu0 %v1208
        %v1299 = vpop.f32.mrf.mxu0
        %v1300 = vadd.f32 %v1176, %v1299
        %v1301 = vpop.f32.mrf.mxu0
        %v1302 = vpop.f32.mrf.mxu0
        %v1303 = vadd.f32 %v1176, %v1302
        %v1304 = vpop.f32.mrf.mxu0
        %1305 = vmatprep.mubr.bf16.mxu0 0
        %1306 = vmatmul.mubr.bf16.gmra.mxu0 %v1211
        %v1307 = vpop.f32.mrf.mxu0
        %v1308 = vadd.f32 %v1176, %v1307
        %v1309 = vpop.f32.mrf.mxu0
        %v1310 = vpop.f32.mrf.mxu0
        %v1311 = vadd.f32 %v1176, %v1310
        %v1312 = vpop.f32.mrf.mxu0
        %1313 = vmatprep.mubr.bf16.mxu0 0
        %1314 = vmatmul.mubr.bf16.gmra.mxu0 %v1214
        %v1315 = vpop.f32.mrf.mxu0
        %v1316 = vadd.f32 %v1176, %v1315
        %v1317 = vpop.f32.mrf.mxu0
        %v1318 = vpop.f32.mrf.mxu0
        %v1319 = vadd.f32 %v1176, %v1318
        %v1320 = vpop.f32.mrf.mxu0
        %1321 = vmatprep.mubr.bf16.mxu0 0
        %1322 = vmatmul.mubr.bf16.gmra.mxu0 %v1217
        %v1323 = vpop.f32.mrf.mxu0
        %v1324 = vadd.f32 %v1176, %v1323
        %v1325 = vpop.f32.mrf.mxu0
        %v1326 = vpop.f32.mrf.mxu0
        %v1327 = vadd.f32 %v1176, %v1326
        %v1328 = vpop.f32.mrf.mxu0
        %1329 = vmatprep.mubr.bf16.mxu0 0
        %1330 = vmatmul.mubr.bf16.gmra.mxu0 %v1220
        %v1331 = vpop.f32.mrf.mxu0
        %v1332 = vadd.f32 %v1176, %v1331
        %v1333 = vpop.f32.mrf.mxu0
        %v1334 = vpop.f32.mrf.mxu0
        %v1335 = vadd.f32 %v1176, %v1334
        %v1336 = vpop.f32.mrf.mxu0
        %1337 = vmatprep.mubr.bf16.mxu0 0
        %1338 = vmatmul.mubr.bf16.gmra.mxu0 %v1223
        %v1339 = vpop.f32.mrf.mxu0
        %v1340 = vadd.f32 %v1176, %v1339
        %v1341 = vpop.f32.mrf.mxu0
        %v1342 = vpop.f32.mrf.mxu0
        %v1343 = vadd.f32 %v1176, %v1342
        %v1344 = vpop.f32.mrf.mxu0
        %1345 = vmatprep.mubr.bf16.mxu0 0
        %1346 = vmatmul.mubr.bf16.gmra.mxu0 %v1226
        %v1347 = vpop.f32.mrf.mxu0
        %v1348 = vadd.f32 %v1176, %v1347
        %v1349 = vpop.f32.mrf.mxu0
        %v1350 = vpop.f32.mrf.mxu0
        %v1351 = vadd.f32 %v1176, %v1350
        %v1352 = vpop.f32.mrf.mxu0
        %1353 = vmatprep.mubr.bf16.mxu0 0
        %1354 = vmatmul.mubr.bf16.gmra.mxu0 %v1229
        %v1355 = vpop.f32.mrf.mxu0
        %v1356 = vadd.f32 %v1176, %v1355
        %v1357 = vpop.f32.mrf.mxu0
        %v1358 = vpop.f32.mrf.mxu0
        %v1359 = vadd.f32 %v1176, %v1358
        %v1360 = vpop.f32.mrf.mxu0
        %1361 = vmatprep.mubr.bf16.mxu0 0
        %1362 = vmatmul.mubr.bf16.gmra.mxu0 %v1232
        %v1363 = vpop.f32.mrf.mxu0
        %v1364 = vadd.f32 %v1176, %v1363
        %v1365 = vpop.f32.mrf.mxu0
        %v1366 = vpop.f32.mrf.mxu0
        %v1367 = vadd.f32 %v1176, %v1366
        %v1368 = vpop.f32.mrf.mxu0
        %1369 = vmatprep.mubr.bf16.mxu0 0
        %1370 = vmatmul.mubr.bf16.gmra.mxu0 %v1235
        %v1371 = vpop.f32.mrf.mxu0
        %v1372 = vadd.f32 %v1176, %v1371
        %v1373 = vpop.f32.mrf.mxu0
        %v1374 = vpop.f32.mrf.mxu0
        %v1375 = vadd.f32 %v1176, %v1374
        %v1376 = vpop.f32.mrf.mxu0
        %1377 = vmatprep.mubr.bf16.mxu0 0
        %1378 = vmatmul.mubr.bf16.gmra.mxu0 %v1238
        %v1379 = vpop.f32.mrf.mxu0
        %v1380 = vadd.f32 %v1176, %v1379
        %v1381 = vpop.f32.mrf.mxu0
        %v1382 = vpop.f32.mrf.mxu0
        %v1383 = vadd.f32 %v1176, %v1382
        %v1384 = vpop.f32.mrf.mxu0
        %1385 = vmatprep.mubr.bf16.mxu0 0
        %1386 = vmatmul.mubr.bf16.gmra.mxu0 %v1241
        %v1387 = vpop.f32.mrf.mxu0
        %v1388 = vadd.f32 %v1176, %v1387
        %v1389 = vpop.f32.mrf.mxu0
        %v1390 = vpop.f32.mrf.mxu0
        %v1391 = vadd.f32 %v1176, %v1390
        %v1392 = vpop.f32.mrf.mxu0
        %1393 = vmatprep.mubr.bf16.mxu0 0
        %1394 = vmatmul.mubr.bf16.gmra.mxu0 %v1244
        %v1395 = vpop.f32.mrf.mxu0
        %v1396 = vadd.f32 %v1176, %v1395
        %v1397 = vpop.f32.mrf.mxu0
        %v1398 = vpop.f32.mrf.mxu0
        %v1399 = vadd.f32 %v1176, %v1398
        %v1400 = vpop.f32.mrf.mxu0
        %1401 = vmatprep.mubr.bf16.mxu0 0
        %1402 = vmatmul.mubr.bf16.gmra.mxu0 %v1247
        %v1403 = vpop.f32.mrf.mxu0
        %v1404 = vadd.f32 %v1176, %v1403
        %v1405 = vpop.f32.mrf.mxu0
        %v1406 = vpop.f32.mrf.mxu0
        %v1407 = vadd.f32 %v1176, %v1406
        %v1408 = vpop.f32.mrf.mxu0
        %1409 = vdwg.mxu0
        %v1410 = vmax.f32 %v1284, 0.0
        %v1411 = vmax.f32 %v1287, 0.0
        %v1412 = vmax.f32 %v1292, 0.0
        %v1413 = vmax.f32 %v1295, 0.0
        %v1414 = vmax.f32 %v1300, 0.0
        %v1415 = vmax.f32 %v1303, 0.0
        %v1416 = vmax.f32 %v1308, 0.0
        %v1417 = vmax.f32 %v1311, 0.0
        %v1418 = vmax.f32 %v1316, 0.0
        %v1419 = vmax.f32 %v1319, 0.0
        %v1420 = vmax.f32 %v1324, 0.0
        %v1421 = vmax.f32 %v1327, 0.0
        %v1422 = vmax.f32 %v1332, 0.0
        %v1423 = vmax.f32 %v1335, 0.0
        %v1424 = vmax.f32 %v1340, 0.0
        %v1425 = vmax.f32 %v1343, 0.0
        %v1426 = vmax.f32 %v1348, 0.0
        %v1427 = vmax.f32 %v1351, 0.0
        %v1428 = vmax.f32 %v1356, 0.0
        %v1429 = vmax.f32 %v1359, 0.0
        %v1430 = vmax.f32 %v1364, 0.0
        %v1431 = vmax.f32 %v1367, 0.0
        %v1432 = vmax.f32 %v1372, 0.0
        %v1433 = vmax.f32 %v1375, 0.0
        %v1434 = vmax.f32 %v1380, 0.0
        %v1435 = vmax.f32 %v1383, 0.0
        %v1436 = vmax.f32 %v1388, 0.0
        %v1437 = vmax.f32 %v1391, 0.0
        %v1438 = vmax.f32 %v1396, 0.0
        %v1439 = vmax.f32 %v1399, 0.0
        %v1440 = vmax.f32 %v1404, 0.0
        %v1441 = vmax.f32 %v1407, 0.0
        %v1442 = vpack.c.bf16 %v1411, %v1410
        %v1443 = vpack.c.bf16 %v1413, %v1412
        %v1444 = vpack.c.bf16 %v1415, %v1414
        %v1445 = vpack.c.bf16 %v1417, %v1416
        %v1446 = vpack.c.bf16 %v1419, %v1418
        %v1447 = vpack.c.bf16 %v1421, %v1420
        %v1448 = vpack.c.bf16 %v1423, %v1422
        %v1449 = vpack.c.bf16 %v1425, %v1424
        %v1450 = vpack.c.bf16 %v1427, %v1426
        %v1451 = vpack.c.bf16 %v1429, %v1428
        %v1452 = vpack.c.bf16 %v1431, %v1430
        %v1453 = vpack.c.bf16 %v1433, %v1432
        %v1454 = vpack.c.bf16 %v1435, %v1434
        %v1455 = vpack.c.bf16 %v1437, %v1436
        %v1456 = vpack.c.bf16 %v1439, %v1438
        %v1457 = vpack.c.bf16 %v1441, %v1440
        %v1458 = vld [vmem:[%s3] sm:$0xf]
        %v1459 = vld [vmem:[%s3 + $0x4] sm:$0xf]
        %v1460 = vld [vmem:[%s3 + $0x8] sm:$0xf]
        %v1461 = vld [vmem:[%s3 + $0xc] sm:$0xf]
        %v1462 = vld [vmem:[%s3 + $0x10] sm:$0xf]
        %v1463 = vld [vmem:[%s3 + $0x14] sm:$0xf]
        %v1464 = vld [vmem:[%s3 + $0x18] sm:$0xf]
        %v1465 = vld [vmem:[%s3 + $0x1c] sm:$0xf]
        %v1466 = vld [vmem:[%s3 + $0x20] sm:$0xf]
        %v1467 = vld [vmem:[%s3 + $0x24] sm:$0xf]
        %v1468 = vld [vmem:[%s3 + $0x28] sm:$0xf]
        %v1469 = vld [vmem:[%s3 + $0x2c] sm:$0xf]
        %v1470 = vld [vmem:[%s3 + $0x30] sm:$0xf]
        %v1471 = vld [vmem:[%s3 + $0x34] sm:$0xf]
        %v1472 = vld [vmem:[%s3 + $0x38] sm:$0xf]
        %v1473 = vld [vmem:[%s3 + $0x3c] sm:$0xf]
        %v1474 = vld [vmem:[%s5 + $0x5] sm:$0x1]
        %v1475 = vlaneseq
        %v1476 = vshrl.u32 %v1475, 7
        %v1477 = vsub.s32 0, %v1476
        %v1478 = vrot.slane %v1474, %v1477
        %v1495 = vunpack.c.l.b16 %v1458
        %v1496 = vunpack.c.l.b16 %v1459
        %v1497 = vunpack.c.l.b16 %v1460
        %v1498 = vunpack.c.l.b16 %v1461
        %v1499 = vunpack.c.l.b16 %v1462
        %v1500 = vunpack.c.l.b16 %v1463
        %v1501 = vunpack.c.l.b16 %v1464
        %v1502 = vunpack.c.l.b16 %v1465
        %v1503 = vunpack.c.l.b16 %v1466
        %v1504 = vunpack.c.l.b16 %v1467
        %v1505 = vunpack.c.l.b16 %v1468
        %v1506 = vunpack.c.l.b16 %v1469
        %v1507 = vunpack.c.l.b16 %v1470
        %v1508 = vunpack.c.l.b16 %v1471
        %v1509 = vunpack.c.l.b16 %v1472
        %v1510 = vunpack.c.l.b16 %v1473
        %v1511 = vpack.c.b16 %v1496, %v1495
        %v1512 = vpack.c.b16 %v1498, %v1497
        %v1513 = vpack.c.b16 %v1500, %v1499
        %v1514 = vpack.c.b16 %v1502, %v1501
        %v1515 = vpack.c.b16 %v1504, %v1503
        %v1516 = vpack.c.b16 %v1506, %v1505
        %v1517 = vpack.c.b16 %v1508, %v1507
        %v1518 = vpack.c.b16 %v1510, %v1509
        %1527 = vmatprep.subr.bf16.mxu0 0
        %1528 = vmatpush1.bf16.msra.mxu0 %v1518
        %1529 = vmatprep.subr.bf16.mxu0 0
        %1530 = vmatpush1.bf16.msra.mxu0 %v1517
        %1531 = vmatprep.subr.bf16.mxu0 0
        %1532 = vmatpush1.bf16.msra.mxu0 %v1516
        %1533 = vmatprep.subr.bf16.mxu0 0
        %1534 = vmatpush1.bf16.msra.mxu0 %v1515
        %1535 = vmatprep.subr.bf16.mxu0 0
        %1536 = vmatpush1.bf16.msra.mxu0 %v1514
        %1537 = vmatprep.subr.bf16.mxu0 0
        %1538 = vmatpush1.bf16.msra.mxu0 %v1513
        %1539 = vmatprep.subr.bf16.mxu0 0
        %1540 = vmatpush1.bf16.msra.mxu0 %v1512
        %1541 = vmatprep.subr.bf16.mxu0 0
        %1542 = vmatpush1.bf16.msra.mxu0 %v1511
        %1543 = vmatprep.subr.bf16.mxu0 0
        %1544 = vmatpush2.bf16.msra.mxu0 0
        %1545 = vmatprep.subr.bf16.mxu0 0
        %1546 = vmatpush2.bf16.msra.mxu0 0
        %1547 = vmatprep.subr.bf16.mxu0 0
        %1548 = vmatpush2.bf16.msra.mxu0 0
        %1549 = vmatprep.subr.bf16.mxu0 0
        %1550 = vmatpush2.bf16.msra.mxu0 0
        %1551 = vmatprep.subr.bf16.mxu0 0
        %1552 = vmatpush2.bf16.msra.mxu0 0
        %1553 = vmatprep.subr.bf16.mxu0 0
        %1554 = vmatpush2.bf16.msra.mxu0 0
        %1555 = vmatprep.subr.bf16.mxu0 0
        %1556 = vmatpush2.bf16.msra.mxu0 0
        %1557 = vmatprep.subr.bf16.mxu0 0
        %1558 = vmatpush2.bf16.msra.mxu0 0
        %1559 = vmatprep.mubr.bf16.mxu0 0
        %1560 = vmatmul.mubr.bf16.gmra.mxu0 %v1442
        %v1561 = vpop.f32.mrf.mxu0
        %v1562 = vadd.f32 %v1478, %v1561
        %v1563 = vpop.f32.mrf.mxu0
        %v1564 = vpop.f32.mrf.mxu0
        %v1565 = vadd.f32 %v1478, %v1564
        %v1566 = vpop.f32.mrf.mxu0
        %1567 = vmatprep.mubr.bf16.mxu0 0
        %1568 = vmatmul.mubr.bf16.gmra.mxu0 %v1443
        %v1569 = vpop.f32.mrf.mxu0
        %v1570 = vadd.f32 %v1478, %v1569
        %v1571 = vpop.f32.mrf.mxu0
        %v1572 = vpop.f32.mrf.mxu0
        %v1573 = vadd.f32 %v1478, %v1572
        %v1574 = vpop.f32.mrf.mxu0
        %1575 = vmatprep.mubr.bf16.mxu0 0
        %1576 = vmatmul.mubr.bf16.gmra.mxu0 %v1444
        %v1577 = vpop.f32.mrf.mxu0
        %v1578 = vadd.f32 %v1478, %v1577
        %v1579 = vpop.f32.mrf.mxu0
        %v1580 = vpop.f32.mrf.mxu0
        %v1581 = vadd.f32 %v1478, %v1580
        %v1582 = vpop.f32.mrf.mxu0
        %1583 = vmatprep.mubr.bf16.mxu0 0
        %1584 = vmatmul.mubr.bf16.gmra.mxu0 %v1445
        %v1585 = vpop.f32.mrf.mxu0
        %v1586 = vadd.f32 %v1478, %v1585
        %v1587 = vpop.f32.mrf.mxu0
        %v1588 = vpop.f32.mrf.mxu0
        %v1589 = vadd.f32 %v1478, %v1588
        %v1590 = vpop.f32.mrf.mxu0
        %1591 = vmatprep.mubr.bf16.mxu0 0
        %1592 = vmatmul.mubr.bf16.gmra.mxu0 %v1446
        %v1593 = vpop.f32.mrf.mxu0
        %v1594 = vadd.f32 %v1478, %v1593
        %v1595 = vpop.f32.mrf.mxu0
        %v1596 = vpop.f32.mrf.mxu0
        %v1597 = vadd.f32 %v1478, %v1596
        %v1598 = vpop.f32.mrf.mxu0
        %1599 = vmatprep.mubr.bf16.mxu0 0
        %1600 = vmatmul.mubr.bf16.gmra.mxu0 %v1447
        %v1601 = vpop.f32.mrf.mxu0
        %v1602 = vadd.f32 %v1478, %v1601
        %v1603 = vpop.f32.mrf.mxu0
        %v1604 = vpop.f32.mrf.mxu0
        %v1605 = vadd.f32 %v1478, %v1604
        %v1606 = vpop.f32.mrf.mxu0
        %1607 = vmatprep.mubr.bf16.mxu0 0
        %1608 = vmatmul.mubr.bf16.gmra.mxu0 %v1448
        %v1609 = vpop.f32.mrf.mxu0
        %v1610 = vadd.f32 %v1478, %v1609
        %v1611 = vpop.f32.mrf.mxu0
        %v1612 = vpop.f32.mrf.mxu0
        %v1613 = vadd.f32 %v1478, %v1612
        %v1614 = vpop.f32.mrf.mxu0
        %1615 = vmatprep.mubr.bf16.mxu0 0
        %1616 = vmatmul.mubr.bf16.gmra.mxu0 %v1449
        %v1617 = vpop.f32.mrf.mxu0
        %v1618 = vadd.f32 %v1478, %v1617
        %v1619 = vpop.f32.mrf.mxu0
        %v1620 = vpop.f32.mrf.mxu0
        %v1621 = vadd.f32 %v1478, %v1620
        %v1622 = vpop.f32.mrf.mxu0
        %1623 = vmatprep.mubr.bf16.mxu0 0
        %1624 = vmatmul.mubr.bf16.gmra.mxu0 %v1450
        %v1625 = vpop.f32.mrf.mxu0
        %v1626 = vadd.f32 %v1478, %v1625
        %v1627 = vpop.f32.mrf.mxu0
        %v1628 = vpop.f32.mrf.mxu0
        %v1629 = vadd.f32 %v1478, %v1628
        %v1630 = vpop.f32.mrf.mxu0
        %1631 = vmatprep.mubr.bf16.mxu0 0
        %1632 = vmatmul.mubr.bf16.gmra.mxu0 %v1451
        %v1633 = vpop.f32.mrf.mxu0
        %v1634 = vadd.f32 %v1478, %v1633
        %v1635 = vpop.f32.mrf.mxu0
        %v1636 = vpop.f32.mrf.mxu0
        %v1637 = vadd.f32 %v1478, %v1636
        %v1638 = vpop.f32.mrf.mxu0
        %1639 = vmatprep.mubr.bf16.mxu0 0
        %1640 = vmatmul.mubr.bf16.gmra.mxu0 %v1452
        %v1641 = vpop.f32.mrf.mxu0
        %v1642 = vadd.f32 %v1478, %v1641
        %v1643 = vpop.f32.mrf.mxu0
        %v1644 = vpop.f32.mrf.mxu0
        %v1645 = vadd.f32 %v1478, %v1644
        %v1646 = vpop.f32.mrf.mxu0
        %1647 = vmatprep.mubr.bf16.mxu0 0
        %1648 = vmatmul.mubr.bf16.gmra.mxu0 %v1453
        %v1649 = vpop.f32.mrf.mxu0
        %v1650 = vadd.f32 %v1478, %v1649
        %v1651 = vpop.f32.mrf.mxu0
        %v1652 = vpop.f32.mrf.mxu0
        %v1653 = vadd.f32 %v1478, %v1652
        %v1654 = vpop.f32.mrf.mxu0
        %1655 = vmatprep.mubr.bf16.mxu0 0
        %1656 = vmatmul.mubr.bf16.gmra.mxu0 %v1454
        %v1657 = vpop.f32.mrf.mxu0
        %v1658 = vadd.f32 %v1478, %v1657
        %v1659 = vpop.f32.mrf.mxu0
        %v1660 = vpop.f32.mrf.mxu0
        %v1661 = vadd.f32 %v1478, %v1660
        %v1662 = vpop.f32.mrf.mxu0
        %1663 = vmatprep.mubr.bf16.mxu0 0
        %1664 = vmatmul.mubr.bf16.gmra.mxu0 %v1455
        %v1665 = vpop.f32.mrf.mxu0
        %v1666 = vadd.f32 %v1478, %v1665
        %v1667 = vpop.f32.mrf.mxu0
        %v1668 = vpop.f32.mrf.mxu0
        %v1669 = vadd.f32 %v1478, %v1668
        %v1670 = vpop.f32.mrf.mxu0
        %1671 = vmatprep.mubr.bf16.mxu0 0
        %1672 = vmatmul.mubr.bf16.gmra.mxu0 %v1456
        %v1673 = vpop.f32.mrf.mxu0
        %v1674 = vadd.f32 %v1478, %v1673
        %v1675 = vpop.f32.mrf.mxu0
        %v1676 = vpop.f32.mrf.mxu0
        %v1677 = vadd.f32 %v1478, %v1676
        %v1678 = vpop.f32.mrf.mxu0
        %1679 = vmatprep.mubr.bf16.mxu0 0
        %1680 = vmatmul.mubr.bf16.gmra.mxu0 %v1457
        %v1681 = vpop.f32.mrf.mxu0
        %v1682 = vadd.f32 %v1478, %v1681
        %v1683 = vpop.f32.mrf.mxu0
        %v1684 = vpop.f32.mrf.mxu0
        %v1685 = vadd.f32 %v1478, %v1684
        %v1686 = vpop.f32.mrf.mxu0
        %1687 = vdwg.mxu0
        %v1688 = vadd.f32 %v434, %v1562
        %v1689 = vadd.f32 %v437, %v1565
        %v1690 = vadd.f32 %v442, %v1570
        %v1691 = vadd.f32 %v445, %v1573
        %v1692 = vadd.f32 %v450, %v1578
        %v1693 = vadd.f32 %v453, %v1581
        %v1694 = vadd.f32 %v458, %v1586
        %v1695 = vadd.f32 %v461, %v1589
        %v1696 = vadd.f32 %v466, %v1594
        %v1697 = vadd.f32 %v469, %v1597
        %v1698 = vadd.f32 %v474, %v1602
        %v1699 = vadd.f32 %v477, %v1605
        %v1700 = vadd.f32 %v482, %v1610
        %v1701 = vadd.f32 %v485, %v1613
        %v1702 = vadd.f32 %v490, %v1618
        %v1703 = vadd.f32 %v493, %v1621
        %v1704 = vadd.f32 %v498, %v1626
        %v1705 = vadd.f32 %v501, %v1629
        %v1706 = vadd.f32 %v506, %v1634
        %v1707 = vadd.f32 %v509, %v1637
        %v1708 = vadd.f32 %v514, %v1642
        %v1709 = vadd.f32 %v517, %v1645
        %v1710 = vadd.f32 %v522, %v1650
        %v1711 = vadd.f32 %v525, %v1653
        %v1712 = vadd.f32 %v530, %v1658
        %v1713 = vadd.f32 %v533, %v1661
        %v1714 = vadd.f32 %v538, %v1666
        %v1715 = vadd.f32 %v541, %v1669
        %v1716 = vadd.f32 %v546, %v1674
        %v1717 = vadd.f32 %v549, %v1677
        %v1718 = vadd.f32 %v554, %v1682
        %v1719 = vadd.f32 %v557, %v1685
        %v1720 = vld [vmem:[%s5 + $0x6] sm:$0x1]
        %v1721 = vld [vmem:[%s5 + $0x7] sm:$0x1]
        %v1722 = vsel %vm562, %v1688, 0.0
        %1723 = vadd.xlane.f32.xlu0 %v1722
        %v1724 = vpop.xlane.xlu0 %1723
        %v1725 = vsel %vm562, %v1689, 0.0
        %1726 = vadd.xlane.f32.xlu0 %v1725
        %v1727 = vpop.xlane.xlu0 %1726
        %v1728 = vsel %vm562, %v1690, 0.0
        %1729 = vadd.xlane.f32.xlu0 %v1728
        %v1730 = vpop.xlane.xlu0 %1729
        %v1731 = vsel %vm562, %v1691, 0.0
        %1732 = vadd.xlane.f32.xlu0 %v1731
        %v1733 = vpop.xlane.xlu0 %1732
        %v1734 = vsel %vm562, %v1692, 0.0
        %1735 = vadd.xlane.f32.xlu0 %v1734
        %v1736 = vpop.xlane.xlu0 %1735
        %v1737 = vsel %vm562, %v1693, 0.0
        %1738 = vadd.xlane.f32.xlu0 %v1737
        %v1739 = vpop.xlane.xlu0 %1738
        %v1740 = vsel %vm562, %v1694, 0.0
        %1741 = vadd.xlane.f32.xlu0 %v1740
        %v1742 = vpop.xlane.xlu0 %1741
        %v1743 = vsel %vm562, %v1695, 0.0
        %1744 = vadd.xlane.f32.xlu0 %v1743
        %v1745 = vpop.xlane.xlu0 %1744
        %v1746 = vsel %vm562, %v1696, 0.0
        %1747 = vadd.xlane.f32.xlu0 %v1746
        %v1748 = vpop.xlane.xlu0 %1747
        %v1749 = vsel %vm562, %v1697, 0.0
        %1750 = vadd.xlane.f32.xlu0 %v1749
        %v1751 = vpop.xlane.xlu0 %1750
        %v1752 = vsel %vm562, %v1698, 0.0
        %1753 = vadd.xlane.f32.xlu0 %v1752
        %v1754 = vpop.xlane.xlu0 %1753
        %v1755 = vsel %vm562, %v1699, 0.0
        %1756 = vadd.xlane.f32.xlu0 %v1755
        %v1757 = vpop.xlane.xlu0 %1756
        %v1758 = vsel %vm562, %v1700, 0.0
        %1759 = vadd.xlane.f32.xlu0 %v1758
        %v1760 = vpop.xlane.xlu0 %1759
        %v1761 = vsel %vm562, %v1701, 0.0
        %1762 = vadd.xlane.f32.xlu0 %v1761
        %v1763 = vpop.xlane.xlu0 %1762
        %v1764 = vsel %vm562, %v1702, 0.0
        %1765 = vadd.xlane.f32.xlu0 %v1764
        %v1766 = vpop.xlane.xlu0 %1765
        %v1767 = vsel %vm562, %v1703, 0.0
        %1768 = vadd.xlane.f32.xlu0 %v1767
        %v1769 = vpop.xlane.xlu0 %1768
        %v1770 = vsel %vm562, %v1704, 0.0
        %1771 = vadd.xlane.f32.xlu0 %v1770
        %v1772 = vpop.xlane.xlu0 %1771
        %v1773 = vsel %vm562, %v1705, 0.0
        %1774 = vadd.xlane.f32.xlu0 %v1773
        %v1775 = vpop.xlane.xlu0 %1774
        %v1776 = vsel %vm562, %v1706, 0.0
        %1777 = vadd.xlane.f32.xlu0 %v1776
        %v1778 = vpop.xlane.xlu0 %1777
        %v1779 = vsel %vm562, %v1707, 0.0
        %1780 = vadd.xlane.f32.xlu0 %v1779
        %v1781 = vpop.xlane.xlu0 %1780
        %v1782 = vsel %vm562, %v1708, 0.0
        %1783 = vadd.xlane.f32.xlu0 %v1782
        %v1784 = vpop.xlane.xlu0 %1783
        %v1785 = vsel %vm562, %v1709, 0.0
        %1786 = vadd.xlane.f32.xlu0 %v1785
        %v1787 = vpop.xlane.xlu0 %1786
        %v1788 = vsel %vm562, %v1710, 0.0
        %1789 = vadd.xlane.f32.xlu0 %v1788
        %v1790 = vpop.xlane.xlu0 %1789
        %v1791 = vsel %vm562, %v1711, 0.0
        %1792 = vadd.xlane.f32.xlu0 %v1791
        %v1793 = vpop.xlane.xlu0 %1792
        %v1794 = vsel %vm562, %v1712, 0.0
        %1795 = vadd.xlane.f32.xlu0 %v1794
        %v1796 = vpop.xlane.xlu0 %1795
        %v1797 = vsel %vm562, %v1713, 0.0
        %1798 = vadd.xlane.f32.xlu0 %v1797
        %v1799 = vpop.xlane.xlu0 %1798
        %v1800 = vsel %vm562, %v1714, 0.0
        %1801 = vadd.xlane.f32.xlu0 %v1800
        %v1802 = vpop.xlane.xlu0 %1801
        %v1803 = vsel %vm562, %v1715, 0.0
        %1804 = vadd.xlane.f32.xlu0 %v1803
        %v1805 = vpop.xlane.xlu0 %1804
        %v1806 = vsel %vm562, %v1716, 0.0
        %1807 = vadd.xlane.f32.xlu0 %v1806
        %v1808 = vpop.xlane.xlu0 %1807
        %v1809 = vsel %vm562, %v1717, 0.0
        %1810 = vadd.xlane.f32.xlu0 %v1809
        %v1811 = vpop.xlane.xlu0 %1810
        %v1812 = vsel %vm562, %v1718, 0.0
        %1813 = vadd.xlane.f32.xlu0 %v1812
        %v1814 = vpop.xlane.xlu0 %1813
        %v1815 = vsel %vm562, %v1719, 0.0
        %1816 = vadd.xlane.f32.xlu0 %v1815
        %v1817 = vpop.xlane.xlu0 %1816
        %v1818 = vmul.f32 %v1724, %v659
        %v1819 = vmul.f32 %v1727, %v659
        %v1820 = vmul.f32 %v1730, %v659
        %v1821 = vmul.f32 %v1733, %v659
        %v1822 = vmul.f32 %v1736, %v659
        %v1823 = vmul.f32 %v1739, %v659
        %v1824 = vmul.f32 %v1742, %v659
        %v1825 = vmul.f32 %v1745, %v659
        %v1826 = vmul.f32 %v1748, %v659
        %v1827 = vmul.f32 %v1751, %v659
        %v1828 = vmul.f32 %v1754, %v659
        %v1829 = vmul.f32 %v1757, %v659
        %v1830 = vmul.f32 %v1760, %v659
        %v1831 = vmul.f32 %v1763, %v659
        %v1832 = vmul.f32 %v1766, %v659
        %v1833 = vmul.f32 %v1769, %v659
        %v1834 = vmul.f32 %v1772, %v659
        %v1835 = vmul.f32 %v1775, %v659
        %v1836 = vmul.f32 %v1778, %v659
        %v1837 = vmul.f32 %v1781, %v659
        %v1838 = vmul.f32 %v1784, %v659
        %v1839 = vmul.f32 %v1787, %v659
        %v1840 = vmul.f32 %v1790, %v659
        %v1841 = vmul.f32 %v1793, %v659
        %v1842 = vmul.f32 %v1796, %v659
        %v1843 = vmul.f32 %v1799, %v659
        %v1844 = vmul.f32 %v1802, %v659
        %v1845 = vmul.f32 %v1805, %v659
        %v1846 = vmul.f32 %v1808, %v659
        %v1847 = vmul.f32 %v1811, %v659
        %v1848 = vmul.f32 %v1814, %v659
        %v1849 = vmul.f32 %v1817, %v659
        %v1850 = vmul.f32 %v1688, %v1688
        %v1851 = vmul.f32 %v1689, %v1689
        %v1852 = vmul.f32 %v1690, %v1690
        %v1853 = vmul.f32 %v1691, %v1691
        %v1854 = vmul.f32 %v1692, %v1692
        %v1855 = vmul.f32 %v1693, %v1693
        %v1856 = vmul.f32 %v1694, %v1694
        %v1857 = vmul.f32 %v1695, %v1695
        %v1858 = vmul.f32 %v1696, %v1696
        %v1859 = vmul.f32 %v1697, %v1697
        %v1860 = vmul.f32 %v1698, %v1698
        %v1861 = vmul.f32 %v1699, %v1699
        %v1862 = vmul.f32 %v1700, %v1700
        %v1863 = vmul.f32 %v1701, %v1701
        %v1864 = vmul.f32 %v1702, %v1702
        %v1865 = vmul.f32 %v1703, %v1703
        %v1866 = vmul.f32 %v1704, %v1704
        %v1867 = vmul.f32 %v1705, %v1705
        %v1868 = vmul.f32 %v1706, %v1706
        %v1869 = vmul.f32 %v1707, %v1707
        %v1870 = vmul.f32 %v1708, %v1708
        %v1871 = vmul.f32 %v1709, %v1709
        %v1872 = vmul.f32 %v1710, %v1710
        %v1873 = vmul.f32 %v1711, %v1711
        %v1874 = vmul.f32 %v1712, %v1712
        %v1875 = vmul.f32 %v1713, %v1713
        %v1876 = vmul.f32 %v1714, %v1714
        %v1877 = vmul.f32 %v1715, %v1715
        %v1878 = vmul.f32 %v1716, %v1716
        %v1879 = vmul.f32 %v1717, %v1717
        %v1880 = vmul.f32 %v1718, %v1718
        %v1881 = vmul.f32 %v1719, %v1719
        %v1882 = vsel %vm562, %v1850, 0.0
        %1883 = vadd.xlane.f32.xlu0 %v1882
        %v1884 = vpop.xlane.xlu0 %1883
        %v1885 = vsel %vm562, %v1851, 0.0
        %1886 = vadd.xlane.f32.xlu0 %v1885
        %v1887 = vpop.xlane.xlu0 %1886
        %v1888 = vsel %vm562, %v1852, 0.0
        %1889 = vadd.xlane.f32.xlu0 %v1888
        %v1890 = vpop.xlane.xlu0 %1889
        %v1891 = vsel %vm562, %v1853, 0.0
        %1892 = vadd.xlane.f32.xlu0 %v1891
        %v1893 = vpop.xlane.xlu0 %1892
        %v1894 = vsel %vm562, %v1854, 0.0
        %1895 = vadd.xlane.f32.xlu0 %v1894
        %v1896 = vpop.xlane.xlu0 %1895
        %v1897 = vsel %vm562, %v1855, 0.0
        %1898 = vadd.xlane.f32.xlu0 %v1897
        %v1899 = vpop.xlane.xlu0 %1898
        %v1900 = vsel %vm562, %v1856, 0.0
        %1901 = vadd.xlane.f32.xlu0 %v1900
        %v1902 = vpop.xlane.xlu0 %1901
        %v1903 = vsel %vm562, %v1857, 0.0
        %1904 = vadd.xlane.f32.xlu0 %v1903
        %v1905 = vpop.xlane.xlu0 %1904
        %v1906 = vsel %vm562, %v1858, 0.0
        %1907 = vadd.xlane.f32.xlu0 %v1906
        %v1908 = vpop.xlane.xlu0 %1907
        %v1909 = vsel %vm562, %v1859, 0.0
        %1910 = vadd.xlane.f32.xlu0 %v1909
        %v1911 = vpop.xlane.xlu0 %1910
        %v1912 = vsel %vm562, %v1860, 0.0
        %1913 = vadd.xlane.f32.xlu0 %v1912
        %v1914 = vpop.xlane.xlu0 %1913
        %v1915 = vsel %vm562, %v1861, 0.0
        %1916 = vadd.xlane.f32.xlu0 %v1915
        %v1917 = vpop.xlane.xlu0 %1916
        %v1918 = vsel %vm562, %v1862, 0.0
        %1919 = vadd.xlane.f32.xlu0 %v1918
        %v1920 = vpop.xlane.xlu0 %1919
        %v1921 = vsel %vm562, %v1863, 0.0
        %1922 = vadd.xlane.f32.xlu0 %v1921
        %v1923 = vpop.xlane.xlu0 %1922
        %v1924 = vsel %vm562, %v1864, 0.0
        %1925 = vadd.xlane.f32.xlu0 %v1924
        %v1926 = vpop.xlane.xlu0 %1925
        %v1927 = vsel %vm562, %v1865, 0.0
        %1928 = vadd.xlane.f32.xlu0 %v1927
        %v1929 = vpop.xlane.xlu0 %1928
        %v1930 = vsel %vm562, %v1866, 0.0
        %1931 = vadd.xlane.f32.xlu0 %v1930
        %v1932 = vpop.xlane.xlu0 %1931
        %v1933 = vsel %vm562, %v1867, 0.0
        %1934 = vadd.xlane.f32.xlu0 %v1933
        %v1935 = vpop.xlane.xlu0 %1934
        %v1936 = vsel %vm562, %v1868, 0.0
        %1937 = vadd.xlane.f32.xlu0 %v1936
        %v1938 = vpop.xlane.xlu0 %1937
        %v1939 = vsel %vm562, %v1869, 0.0
        %1940 = vadd.xlane.f32.xlu0 %v1939
        %v1941 = vpop.xlane.xlu0 %1940
        %v1942 = vsel %vm562, %v1870, 0.0
        %1943 = vadd.xlane.f32.xlu0 %v1942
        %v1944 = vpop.xlane.xlu0 %1943
        %v1945 = vsel %vm562, %v1871, 0.0
        %1946 = vadd.xlane.f32.xlu0 %v1945
        %v1947 = vpop.xlane.xlu0 %1946
        %v1948 = vsel %vm562, %v1872, 0.0
        %1949 = vadd.xlane.f32.xlu0 %v1948
        %v1950 = vpop.xlane.xlu0 %1949
        %v1951 = vsel %vm562, %v1873, 0.0
        %1952 = vadd.xlane.f32.xlu0 %v1951
        %v1953 = vpop.xlane.xlu0 %1952
        %v1954 = vsel %vm562, %v1874, 0.0
        %1955 = vadd.xlane.f32.xlu0 %v1954
        %v1956 = vpop.xlane.xlu0 %1955
        %v1957 = vsel %vm562, %v1875, 0.0
        %1958 = vadd.xlane.f32.xlu0 %v1957
        %v1959 = vpop.xlane.xlu0 %1958
        %v1960 = vsel %vm562, %v1876, 0.0
        %1961 = vadd.xlane.f32.xlu0 %v1960
        %v1962 = vpop.xlane.xlu0 %1961
        %v1963 = vsel %vm562, %v1877, 0.0
        %1964 = vadd.xlane.f32.xlu0 %v1963
        %v1965 = vpop.xlane.xlu0 %1964
        %v1966 = vsel %vm562, %v1878, 0.0
        %1967 = vadd.xlane.f32.xlu0 %v1966
        %v1968 = vpop.xlane.xlu0 %1967
        %v1969 = vsel %vm562, %v1879, 0.0
        %1970 = vadd.xlane.f32.xlu0 %v1969
        %v1971 = vpop.xlane.xlu0 %1970
        %v1972 = vsel %vm562, %v1880, 0.0
        %1973 = vadd.xlane.f32.xlu0 %v1972
        %v1974 = vpop.xlane.xlu0 %1973
        %v1975 = vsel %vm562, %v1881, 0.0
        %1976 = vadd.xlane.f32.xlu0 %v1975
        %v1977 = vpop.xlane.xlu0 %1976
        %v1978 = vmul.f32 %v1884, %v659
        %v1979 = vmul.f32 %v1887, %v659
        %v1980 = vmul.f32 %v1890, %v659
        %v1981 = vmul.f32 %v1893, %v659
        %v1982 = vmul.f32 %v1896, %v659
        %v1983 = vmul.f32 %v1899, %v659
        %v1984 = vmul.f32 %v1902, %v659
        %v1985 = vmul.f32 %v1905, %v659
        %v1986 = vmul.f32 %v1908, %v659
        %v1987 = vmul.f32 %v1911, %v659
        %v1988 = vmul.f32 %v1914, %v659
        %v1989 = vmul.f32 %v1917, %v659
        %v1990 = vmul.f32 %v1920, %v659
        %v1991 = vmul.f32 %v1923, %v659
        %v1992 = vmul.f32 %v1926, %v659
        %v1993 = vmul.f32 %v1929, %v659
        %v1994 = vmul.f32 %v1932, %v659
        %v1995 = vmul.f32 %v1935, %v659
        %v1996 = vmul.f32 %v1938, %v659
        %v1997 = vmul.f32 %v1941, %v659
        %v1998 = vmul.f32 %v1944, %v659
        %v1999 = vmul.f32 %v1947, %v659
        %v2000 = vmul.f32 %v1950, %v659
        %v2001 = vmul.f32 %v1953, %v659
        %v2002 = vmul.f32 %v1956, %v659
        %v2003 = vmul.f32 %v1959, %v659
        %v2004 = vmul.f32 %v1962, %v659
        %v2005 = vmul.f32 %v1965, %v659
        %v2006 = vmul.f32 %v1968, %v659
        %v2007 = vmul.f32 %v1971, %v659
        %v2008 = vmul.f32 %v1974, %v659
        %v2009 = vmul.f32 %v1977, %v659
        %v2010 = vmul.f32 %v1818, %v1818
        %v2011 = vmul.f32 %v1819, %v1819
        %v2012 = vmul.f32 %v1820, %v1820
        %v2013 = vmul.f32 %v1821, %v1821
        %v2014 = vmul.f32 %v1822, %v1822
        %v2015 = vmul.f32 %v1823, %v1823
        %v2016 = vmul.f32 %v1824, %v1824
        %v2017 = vmul.f32 %v1825, %v1825
        %v2018 = vmul.f32 %v1826, %v1826
        %v2019 = vmul.f32 %v1827, %v1827
        %v2020 = vmul.f32 %v1828, %v1828
        %v2021 = vmul.f32 %v1829, %v1829
        %v2022 = vmul.f32 %v1830, %v1830
        %v2023 = vmul.f32 %v1831, %v1831
        %v2024 = vmul.f32 %v1832, %v1832
        %v2025 = vmul.f32 %v1833, %v1833
        %v2026 = vmul.f32 %v1834, %v1834
        %v2027 = vmul.f32 %v1835, %v1835
        %v2028 = vmul.f32 %v1836, %v1836
        %v2029 = vmul.f32 %v1837, %v1837
        %v2030 = vmul.f32 %v1838, %v1838
        %v2031 = vmul.f32 %v1839, %v1839
        %v2032 = vmul.f32 %v1840, %v1840
        %v2033 = vmul.f32 %v1841, %v1841
        %v2034 = vmul.f32 %v1842, %v1842
        %v2035 = vmul.f32 %v1843, %v1843
        %v2036 = vmul.f32 %v1844, %v1844
        %v2037 = vmul.f32 %v1845, %v1845
        %v2038 = vmul.f32 %v1846, %v1846
        %v2039 = vmul.f32 %v1847, %v1847
        %v2040 = vmul.f32 %v1848, %v1848
        %v2041 = vmul.f32 %v1849, %v1849
        %v2042 = vsub.f32 %v1978, %v2010
        %v2043 = vsub.f32 %v1979, %v2011
        %v2044 = vsub.f32 %v1980, %v2012
        %v2045 = vsub.f32 %v1981, %v2013
        %v2046 = vsub.f32 %v1982, %v2014
        %v2047 = vsub.f32 %v1983, %v2015
        %v2048 = vsub.f32 %v1984, %v2016
        %v2049 = vsub.f32 %v1985, %v2017
        %v2050 = vsub.f32 %v1986, %v2018
        %v2051 = vsub.f32 %v1987, %v2019
        %v2052 = vsub.f32 %v1988, %v2020
        %v2053 = vsub.f32 %v1989, %v2021
        %v2054 = vsub.f32 %v1990, %v2022
        %v2055 = vsub.f32 %v1991, %v2023
        %v2056 = vsub.f32 %v1992, %v2024
        %v2057 = vsub.f32 %v1993, %v2025
        %v2058 = vsub.f32 %v1994, %v2026
        %v2059 = vsub.f32 %v1995, %v2027
        %v2060 = vsub.f32 %v1996, %v2028
        %v2061 = vsub.f32 %v1997, %v2029
        %v2062 = vsub.f32 %v1998, %v2030
        %v2063 = vsub.f32 %v1999, %v2031
        %v2064 = vsub.f32 %v2000, %v2032
        %v2065 = vsub.f32 %v2001, %v2033
        %v2066 = vsub.f32 %v2002, %v2034
        %v2067 = vsub.f32 %v2003, %v2035
        %v2068 = vsub.f32 %v2004, %v2036
        %v2069 = vsub.f32 %v2005, %v2037
        %v2070 = vsub.f32 %v2006, %v2038
        %v2071 = vsub.f32 %v2007, %v2039
        %v2072 = vsub.f32 %v2008, %v2040
        %v2073 = vsub.f32 %v2009, %v2041
        %v2074 = vadd.f32 %v2042, 1e-05
        %v2075 = vadd.f32 %v2043, 1e-05
        %v2076 = vadd.f32 %v2044, 1e-05
        %v2077 = vadd.f32 %v2045, 1e-05
        %v2078 = vadd.f32 %v2046, 1e-05
        %v2079 = vadd.f32 %v2047, 1e-05
        %v2080 = vadd.f32 %v2048, 1e-05
        %v2081 = vadd.f32 %v2049, 1e-05
        %v2082 = vadd.f32 %v2050, 1e-05
        %v2083 = vadd.f32 %v2051, 1e-05
        %v2084 = vadd.f32 %v2052, 1e-05
        %v2085 = vadd.f32 %v2053, 1e-05
        %v2086 = vadd.f32 %v2054, 1e-05
        %v2087 = vadd.f32 %v2055, 1e-05
        %v2088 = vadd.f32 %v2056, 1e-05
        %v2089 = vadd.f32 %v2057, 1e-05
        %v2090 = vadd.f32 %v2058, 1e-05
        %v2091 = vadd.f32 %v2059, 1e-05
        %v2092 = vadd.f32 %v2060, 1e-05
        %v2093 = vadd.f32 %v2061, 1e-05
        %v2094 = vadd.f32 %v2062, 1e-05
        %v2095 = vadd.f32 %v2063, 1e-05
        %v2096 = vadd.f32 %v2064, 1e-05
        %v2097 = vadd.f32 %v2065, 1e-05
        %v2098 = vadd.f32 %v2066, 1e-05
        %v2099 = vadd.f32 %v2067, 1e-05
        %v2100 = vadd.f32 %v2068, 1e-05
        %v2101 = vadd.f32 %v2069, 1e-05
        %v2102 = vadd.f32 %v2070, 1e-05
        %v2103 = vadd.f32 %v2071, 1e-05
        %v2104 = vadd.f32 %v2072, 1e-05
        %v2105 = vadd.f32 %v2073, 1e-05
        %v2106 = vrsqrt.pop %v2074
        %v2107 = vrsqrt.pop %v2075
        %v2108 = vrsqrt.pop %v2076
        %v2109 = vrsqrt.pop %v2077
        %v2110 = vrsqrt.pop %v2078
        %v2111 = vrsqrt.pop %v2079
        %v2112 = vrsqrt.pop %v2080
        %v2113 = vrsqrt.pop %v2081
        %v2114 = vrsqrt.pop %v2082
        %v2115 = vrsqrt.pop %v2083
        %v2116 = vrsqrt.pop %v2084
        %v2117 = vrsqrt.pop %v2085
        %v2118 = vrsqrt.pop %v2086
        %v2119 = vrsqrt.pop %v2087
        %v2120 = vrsqrt.pop %v2088
        %v2121 = vrsqrt.pop %v2089
        %v2122 = vrsqrt.pop %v2090
        %v2123 = vrsqrt.pop %v2091
        %v2124 = vrsqrt.pop %v2092
        %v2125 = vrsqrt.pop %v2093
        %v2126 = vrsqrt.pop %v2094
        %v2127 = vrsqrt.pop %v2095
        %v2128 = vrsqrt.pop %v2096
        %v2129 = vrsqrt.pop %v2097
        %v2130 = vrsqrt.pop %v2098
        %v2131 = vrsqrt.pop %v2099
        %v2132 = vrsqrt.pop %v2100
        %v2133 = vrsqrt.pop %v2101
        %v2134 = vrsqrt.pop %v2102
        %v2135 = vrsqrt.pop %v2103
        %v2136 = vrsqrt.pop %v2104
        %v2137 = vrsqrt.pop %v2105
        %v2138 = vlaneseq
        %v2139 = vshrl.u32 %v2138, 7
        %v2140 = vsub.s32 0, %v2139
        %v2141 = vrot.slane %v1720, %v2140
        %v2142 = vmul.f32 %v2106, %v2141
        %v2143 = vmul.f32 %v2107, %v2141
        %v2144 = vmul.f32 %v2108, %v2141
        %v2145 = vmul.f32 %v2109, %v2141
        %v2146 = vmul.f32 %v2110, %v2141
        %v2147 = vmul.f32 %v2111, %v2141
        %v2148 = vmul.f32 %v2112, %v2141
        %v2149 = vmul.f32 %v2113, %v2141
        %v2150 = vmul.f32 %v2114, %v2141
        %v2151 = vmul.f32 %v2115, %v2141
        %v2152 = vmul.f32 %v2116, %v2141
        %v2153 = vmul.f32 %v2117, %v2141
        %v2154 = vmul.f32 %v2118, %v2141
        %v2155 = vmul.f32 %v2119, %v2141
        %v2156 = vmul.f32 %v2120, %v2141
        %v2157 = vmul.f32 %v2121, %v2141
        %v2158 = vmul.f32 %v2122, %v2141
        %v2159 = vmul.f32 %v2123, %v2141
        %v2160 = vmul.f32 %v2124, %v2141
        %v2161 = vmul.f32 %v2125, %v2141
        %v2162 = vmul.f32 %v2126, %v2141
        %v2163 = vmul.f32 %v2127, %v2141
        %v2164 = vmul.f32 %v2128, %v2141
        %v2165 = vmul.f32 %v2129, %v2141
        %v2166 = vmul.f32 %v2130, %v2141
        %v2167 = vmul.f32 %v2131, %v2141
        %v2168 = vmul.f32 %v2132, %v2141
        %v2169 = vmul.f32 %v2133, %v2141
        %v2170 = vmul.f32 %v2134, %v2141
        %v2171 = vmul.f32 %v2135, %v2141
        %v2172 = vmul.f32 %v2136, %v2141
        %v2173 = vmul.f32 %v2137, %v2141
        %v2174 = vmul.f32 %v1688, %v2142
        %v2175 = vmul.f32 %v1689, %v2143
        %v2176 = vmul.f32 %v1690, %v2144
        %v2177 = vmul.f32 %v1691, %v2145
        %v2178 = vmul.f32 %v1692, %v2146
        %v2179 = vmul.f32 %v1693, %v2147
        %v2180 = vmul.f32 %v1694, %v2148
        %v2181 = vmul.f32 %v1695, %v2149
        %v2182 = vmul.f32 %v1696, %v2150
        %v2183 = vmul.f32 %v1697, %v2151
        %v2184 = vmul.f32 %v1698, %v2152
        %v2185 = vmul.f32 %v1699, %v2153
        %v2186 = vmul.f32 %v1700, %v2154
        %v2187 = vmul.f32 %v1701, %v2155
        %v2188 = vmul.f32 %v1702, %v2156
        %v2189 = vmul.f32 %v1703, %v2157
        %v2190 = vmul.f32 %v1704, %v2158
        %v2191 = vmul.f32 %v1705, %v2159
        %v2192 = vmul.f32 %v1706, %v2160
        %v2193 = vmul.f32 %v1707, %v2161
        %v2194 = vmul.f32 %v1708, %v2162
        %v2195 = vmul.f32 %v1709, %v2163
        %v2196 = vmul.f32 %v1710, %v2164
        %v2197 = vmul.f32 %v1711, %v2165
        %v2198 = vmul.f32 %v1712, %v2166
        %v2199 = vmul.f32 %v1713, %v2167
        %v2200 = vmul.f32 %v1714, %v2168
        %v2201 = vmul.f32 %v1715, %v2169
        %v2202 = vmul.f32 %v1716, %v2170
        %v2203 = vmul.f32 %v1717, %v2171
        %v2204 = vmul.f32 %v1718, %v2172
        %v2205 = vmul.f32 %v1719, %v2173
        %v2206 = vmul.f32 %v1818, %v2142
        %v2207 = vmul.f32 %v1819, %v2143
        %v2208 = vmul.f32 %v1820, %v2144
        %v2209 = vmul.f32 %v1821, %v2145
        %v2210 = vmul.f32 %v1822, %v2146
        %v2211 = vmul.f32 %v1823, %v2147
        %v2212 = vmul.f32 %v1824, %v2148
        %v2213 = vmul.f32 %v1825, %v2149
        %v2214 = vmul.f32 %v1826, %v2150
        %v2215 = vmul.f32 %v1827, %v2151
        %v2216 = vmul.f32 %v1828, %v2152
        %v2217 = vmul.f32 %v1829, %v2153
        %v2218 = vmul.f32 %v1830, %v2154
        %v2219 = vmul.f32 %v1831, %v2155
        %v2220 = vmul.f32 %v1832, %v2156
        %v2221 = vmul.f32 %v1833, %v2157
        %v2222 = vmul.f32 %v1834, %v2158
        %v2223 = vmul.f32 %v1835, %v2159
        %v2224 = vmul.f32 %v1836, %v2160
        %v2225 = vmul.f32 %v1837, %v2161
        %v2226 = vmul.f32 %v1838, %v2162
        %v2227 = vmul.f32 %v1839, %v2163
        %v2228 = vmul.f32 %v1840, %v2164
        %v2229 = vmul.f32 %v1841, %v2165
        %v2230 = vmul.f32 %v1842, %v2166
        %v2231 = vmul.f32 %v1843, %v2167
        %v2232 = vmul.f32 %v1844, %v2168
        %v2233 = vmul.f32 %v1845, %v2169
        %v2234 = vmul.f32 %v1846, %v2170
        %v2235 = vmul.f32 %v1847, %v2171
        %v2236 = vmul.f32 %v1848, %v2172
        %v2237 = vmul.f32 %v1849, %v2173
        %v2238 = vlaneseq
        %v2239 = vshrl.u32 %v2238, 7
        %v2240 = vsub.s32 0, %v2239
        %v2241 = vrot.slane %v1721, %v2240
        %v2242 = vsub.f32 %v2241, %v2206
        %v2243 = vsub.f32 %v2241, %v2207
        %v2244 = vsub.f32 %v2241, %v2208
        %v2245 = vsub.f32 %v2241, %v2209
        %v2246 = vsub.f32 %v2241, %v2210
        %v2247 = vsub.f32 %v2241, %v2211
        %v2248 = vsub.f32 %v2241, %v2212
        %v2249 = vsub.f32 %v2241, %v2213
        %v2250 = vsub.f32 %v2241, %v2214
        %v2251 = vsub.f32 %v2241, %v2215
        %v2252 = vsub.f32 %v2241, %v2216
        %v2253 = vsub.f32 %v2241, %v2217
        %v2254 = vsub.f32 %v2241, %v2218
        %v2255 = vsub.f32 %v2241, %v2219
        %v2256 = vsub.f32 %v2241, %v2220
        %v2257 = vsub.f32 %v2241, %v2221
        %v2258 = vsub.f32 %v2241, %v2222
        %v2259 = vsub.f32 %v2241, %v2223
        %v2260 = vsub.f32 %v2241, %v2224
        %v2261 = vsub.f32 %v2241, %v2225
        %v2262 = vsub.f32 %v2241, %v2226
        %v2263 = vsub.f32 %v2241, %v2227
        %v2264 = vsub.f32 %v2241, %v2228
        %v2265 = vsub.f32 %v2241, %v2229
        %v2266 = vsub.f32 %v2241, %v2230
        %v2267 = vsub.f32 %v2241, %v2231
        %v2268 = vsub.f32 %v2241, %v2232
        %v2269 = vsub.f32 %v2241, %v2233
        %v2270 = vsub.f32 %v2241, %v2234
        %v2271 = vsub.f32 %v2241, %v2235
        %v2272 = vsub.f32 %v2241, %v2236
        %v2273 = vsub.f32 %v2241, %v2237
        %v2274 = vadd.f32 %v2174, %v2242
        %v2275 = vadd.f32 %v2175, %v2243
        %v2276 = vadd.f32 %v2176, %v2244
        %v2277 = vadd.f32 %v2177, %v2245
        %v2278 = vadd.f32 %v2178, %v2246
        %v2279 = vadd.f32 %v2179, %v2247
        %v2280 = vadd.f32 %v2180, %v2248
        %v2281 = vadd.f32 %v2181, %v2249
        %v2282 = vadd.f32 %v2182, %v2250
        %v2283 = vadd.f32 %v2183, %v2251
        %v2284 = vadd.f32 %v2184, %v2252
        %v2285 = vadd.f32 %v2185, %v2253
        %v2286 = vadd.f32 %v2186, %v2254
        %v2287 = vadd.f32 %v2187, %v2255
        %v2288 = vadd.f32 %v2188, %v2256
        %v2289 = vadd.f32 %v2189, %v2257
        %v2290 = vadd.f32 %v2190, %v2258
        %v2291 = vadd.f32 %v2191, %v2259
        %v2292 = vadd.f32 %v2192, %v2260
        %v2293 = vadd.f32 %v2193, %v2261
        %v2294 = vadd.f32 %v2194, %v2262
        %v2295 = vadd.f32 %v2195, %v2263
        %v2296 = vadd.f32 %v2196, %v2264
        %v2297 = vadd.f32 %v2197, %v2265
        %v2298 = vadd.f32 %v2198, %v2266
        %v2299 = vadd.f32 %v2199, %v2267
        %v2300 = vadd.f32 %v2200, %v2268
        %v2301 = vadd.f32 %v2201, %v2269
        %v2302 = vadd.f32 %v2202, %v2270
        %v2303 = vadd.f32 %v2203, %v2271
        %v2304 = vadd.f32 %v2204, %v2272
        %v2305 = vadd.f32 %v2205, %v2273
        %v2306 = vpack.c.bf16 %v2275, %v2274
        %v2307 = vpack.c.bf16 %v2277, %v2276
        %v2308 = vpack.c.bf16 %v2279, %v2278
        %v2309 = vpack.c.bf16 %v2281, %v2280
        %v2310 = vpack.c.bf16 %v2283, %v2282
        %v2311 = vpack.c.bf16 %v2285, %v2284
        %v2312 = vpack.c.bf16 %v2287, %v2286
        %v2313 = vpack.c.bf16 %v2289, %v2288
        %v2314 = vpack.c.bf16 %v2291, %v2290
        %v2315 = vpack.c.bf16 %v2293, %v2292
        %v2316 = vpack.c.bf16 %v2295, %v2294
        %v2317 = vpack.c.bf16 %v2297, %v2296
        %v2318 = vpack.c.bf16 %v2299, %v2298
        %v2319 = vpack.c.bf16 %v2301, %v2300
        %v2320 = vpack.c.bf16 %v2303, %v2302
        %v2321 = vpack.c.bf16 %v2305, %v2304
        %s2322 = scalar_lea.vmem %s2, 32
        %v2323 = vld [vmem:[%s2322] sm:$0xf]
        %v2324 = vld [vmem:[%s2322 + $0x4] sm:$0xf]
        %v2325 = vld [vmem:[%s2322 + $0x8] sm:$0xf]
        %v2326 = vld [vmem:[%s2322 + $0xc] sm:$0xf]
        %v2327 = vld [vmem:[%s2322 + $0x10] sm:$0xf]
        %v2328 = vld [vmem:[%s2322 + $0x14] sm:$0xf]
        %v2329 = vld [vmem:[%s2322 + $0x18] sm:$0xf]
        %v2330 = vld [vmem:[%s2322 + $0x1c] sm:$0xf]
        %v2331 = vld [vmem:[%s6 + $0x2] sm:$0x1]
        %v2332 = vlaneseq
        %v2333 = vshrl.u32 %v2332, 7
        %v2334 = vsub.s32 0, %v2333
        %v2335 = vrot.slane %v2331, %v2334
        %v2344 = vunpack.c.l.b16 %v2323
        %v2345 = vunpack.c.l.b16 %v2324
        %v2346 = vunpack.c.l.b16 %v2325
        %v2347 = vunpack.c.l.b16 %v2326
        %v2348 = vunpack.c.l.b16 %v2327
        %v2349 = vunpack.c.l.b16 %v2328
        %v2350 = vunpack.c.l.b16 %v2329
        %v2351 = vunpack.c.l.b16 %v2330
        %v2352 = vpack.c.b16 %v2345, %v2344
        %v2353 = vpack.c.b16 %v2347, %v2346
        %v2354 = vpack.c.b16 %v2349, %v2348
        %v2355 = vpack.c.b16 %v2351, %v2350
        %v2361 = vsel %vm562, %v2306, 0
        %v2364 = vsel %vm562, %v2307, 0
        %v2367 = vsel %vm562, %v2308, 0
        %v2370 = vsel %vm562, %v2309, 0
        %v2373 = vsel %vm562, %v2310, 0
        %v2376 = vsel %vm562, %v2311, 0
        %v2379 = vsel %vm562, %v2312, 0
        %v2382 = vsel %vm562, %v2313, 0
        %v2385 = vsel %vm562, %v2314, 0
        %v2388 = vsel %vm562, %v2315, 0
        %v2391 = vsel %vm562, %v2316, 0
        %v2394 = vsel %vm562, %v2317, 0
        %v2397 = vsel %vm562, %v2318, 0
        %v2400 = vsel %vm562, %v2319, 0
        %v2403 = vsel %vm562, %v2320, 0
        %v2406 = vsel %vm562, %v2321, 0
        %2408 = vmatprep.subr.bf16.mxu0 0
        %2409 = vmatpush1.bf16.msra.mxu0 0
        %2410 = vmatprep.subr.bf16.mxu0 0
        %2411 = vmatpush1.bf16.msra.mxu0 0
        %2412 = vmatprep.subr.bf16.mxu0 0
        %2413 = vmatpush1.bf16.msra.mxu0 0
        %2414 = vmatprep.subr.bf16.mxu0 0
        %2415 = vmatpush1.bf16.msra.mxu0 0
        %2416 = vmatprep.subr.bf16.mxu0 0
        %2417 = vmatpush1.bf16.msra.mxu0 %v2355
        %2418 = vmatprep.subr.bf16.mxu0 0
        %2419 = vmatpush1.bf16.msra.mxu0 %v2354
        %2420 = vmatprep.subr.bf16.mxu0 0
        %2421 = vmatpush1.bf16.msra.mxu0 %v2353
        %2422 = vmatprep.subr.bf16.mxu0 0
        %2423 = vmatpush1.bf16.msra.mxu0 %v2352
        %2424 = vmatprep.subr.bf16.mxu0 0
        %2425 = vmatpush2.bf16.msra.mxu0 0
        %2426 = vmatprep.subr.bf16.mxu0 0
        %2427 = vmatpush2.bf16.msra.mxu0 0
        %2428 = vmatprep.subr.bf16.mxu0 0
        %2429 = vmatpush2.bf16.msra.mxu0 0
        %2430 = vmatprep.subr.bf16.mxu0 0
        %2431 = vmatpush2.bf16.msra.mxu0 0
        %2432 = vmatprep.subr.bf16.mxu0 0
        %2433 = vmatpush2.bf16.msra.mxu0 0
        %2434 = vmatprep.subr.bf16.mxu0 0
        %2435 = vmatpush2.bf16.msra.mxu0 0
        %2436 = vmatprep.subr.bf16.mxu0 0
        %2437 = vmatpush2.bf16.msra.mxu0 0
        %2438 = vmatprep.subr.bf16.mxu0 0
        %2439 = vmatpush2.bf16.msra.mxu0 0
        %2440 = vmatprep.mubr.bf16.mxu0 0
        %2441 = vmatmul.mubr.bf16.gmra.mxu0 %v2361
        %v2442 = vpop.f32.mrf.mxu0
        %v2443 = vadd.f32 %v2335, %v2442
        %v2444 = vpop.f32.mrf.mxu0
        %v2445 = vpop.f32.mrf.mxu0
        %v2446 = vadd.f32 %v2335, %v2445
        %v2447 = vpop.f32.mrf.mxu0
        %2448 = vmatprep.mubr.bf16.mxu0 0
        %2449 = vmatmul.mubr.bf16.gmra.mxu0 %v2364
        %v2450 = vpop.f32.mrf.mxu0
        %v2451 = vadd.f32 %v2335, %v2450
        %v2452 = vpop.f32.mrf.mxu0
        %v2453 = vpop.f32.mrf.mxu0
        %v2454 = vadd.f32 %v2335, %v2453
        %v2455 = vpop.f32.mrf.mxu0
        %2456 = vmatprep.mubr.bf16.mxu0 0
        %2457 = vmatmul.mubr.bf16.gmra.mxu0 %v2367
        %v2458 = vpop.f32.mrf.mxu0
        %v2459 = vadd.f32 %v2335, %v2458
        %v2460 = vpop.f32.mrf.mxu0
        %v2461 = vpop.f32.mrf.mxu0
        %v2462 = vadd.f32 %v2335, %v2461
        %v2463 = vpop.f32.mrf.mxu0
        %2464 = vmatprep.mubr.bf16.mxu0 0
        %2465 = vmatmul.mubr.bf16.gmra.mxu0 %v2370
        %v2466 = vpop.f32.mrf.mxu0
        %v2467 = vadd.f32 %v2335, %v2466
        %v2468 = vpop.f32.mrf.mxu0
        %v2469 = vpop.f32.mrf.mxu0
        %v2470 = vadd.f32 %v2335, %v2469
        %v2471 = vpop.f32.mrf.mxu0
        %2472 = vmatprep.mubr.bf16.mxu0 0
        %2473 = vmatmul.mubr.bf16.gmra.mxu0 %v2373
        %v2474 = vpop.f32.mrf.mxu0
        %v2475 = vadd.f32 %v2335, %v2474
        %v2476 = vpop.f32.mrf.mxu0
        %v2477 = vpop.f32.mrf.mxu0
        %v2478 = vadd.f32 %v2335, %v2477
        %v2479 = vpop.f32.mrf.mxu0
        %2480 = vmatprep.mubr.bf16.mxu0 0
        %2481 = vmatmul.mubr.bf16.gmra.mxu0 %v2376
        %v2482 = vpop.f32.mrf.mxu0
        %v2483 = vadd.f32 %v2335, %v2482
        %v2484 = vpop.f32.mrf.mxu0
        %v2485 = vpop.f32.mrf.mxu0
        %v2486 = vadd.f32 %v2335, %v2485
        %v2487 = vpop.f32.mrf.mxu0
        %2488 = vmatprep.mubr.bf16.mxu0 0
        %2489 = vmatmul.mubr.bf16.gmra.mxu0 %v2379
        %v2490 = vpop.f32.mrf.mxu0
        %v2491 = vadd.f32 %v2335, %v2490
        %v2492 = vpop.f32.mrf.mxu0
        %v2493 = vpop.f32.mrf.mxu0
        %v2494 = vadd.f32 %v2335, %v2493
        %v2495 = vpop.f32.mrf.mxu0
        %2496 = vmatprep.mubr.bf16.mxu0 0
        %2497 = vmatmul.mubr.bf16.gmra.mxu0 %v2382
        %v2498 = vpop.f32.mrf.mxu0
        %v2499 = vadd.f32 %v2335, %v2498
        %v2500 = vpop.f32.mrf.mxu0
        %v2501 = vpop.f32.mrf.mxu0
        %v2502 = vadd.f32 %v2335, %v2501
        %v2503 = vpop.f32.mrf.mxu0
        %2504 = vmatprep.mubr.bf16.mxu0 0
        %2505 = vmatmul.mubr.bf16.gmra.mxu0 %v2385
        %v2506 = vpop.f32.mrf.mxu0
        %v2507 = vadd.f32 %v2335, %v2506
        %v2508 = vpop.f32.mrf.mxu0
        %v2509 = vpop.f32.mrf.mxu0
        %v2510 = vadd.f32 %v2335, %v2509
        %v2511 = vpop.f32.mrf.mxu0
        %2512 = vmatprep.mubr.bf16.mxu0 0
        %2513 = vmatmul.mubr.bf16.gmra.mxu0 %v2388
        %v2514 = vpop.f32.mrf.mxu0
        %v2515 = vadd.f32 %v2335, %v2514
        %v2516 = vpop.f32.mrf.mxu0
        %v2517 = vpop.f32.mrf.mxu0
        %v2518 = vadd.f32 %v2335, %v2517
        %v2519 = vpop.f32.mrf.mxu0
        %2520 = vmatprep.mubr.bf16.mxu0 0
        %2521 = vmatmul.mubr.bf16.gmra.mxu0 %v2391
        %v2522 = vpop.f32.mrf.mxu0
        %v2523 = vadd.f32 %v2335, %v2522
        %v2524 = vpop.f32.mrf.mxu0
        %v2525 = vpop.f32.mrf.mxu0
        %v2526 = vadd.f32 %v2335, %v2525
        %v2527 = vpop.f32.mrf.mxu0
        %2528 = vmatprep.mubr.bf16.mxu0 0
        %2529 = vmatmul.mubr.bf16.gmra.mxu0 %v2394
        %v2530 = vpop.f32.mrf.mxu0
        %v2531 = vadd.f32 %v2335, %v2530
        %v2532 = vpop.f32.mrf.mxu0
        %v2533 = vpop.f32.mrf.mxu0
        %v2534 = vadd.f32 %v2335, %v2533
        %v2535 = vpop.f32.mrf.mxu0
        %2536 = vmatprep.mubr.bf16.mxu0 0
        %2537 = vmatmul.mubr.bf16.gmra.mxu0 %v2397
        %v2538 = vpop.f32.mrf.mxu0
        %v2539 = vadd.f32 %v2335, %v2538
        %v2540 = vpop.f32.mrf.mxu0
        %v2541 = vpop.f32.mrf.mxu0
        %v2542 = vadd.f32 %v2335, %v2541
        %v2543 = vpop.f32.mrf.mxu0
        %2544 = vmatprep.mubr.bf16.mxu0 0
        %2545 = vmatmul.mubr.bf16.gmra.mxu0 %v2400
        %v2546 = vpop.f32.mrf.mxu0
        %v2547 = vadd.f32 %v2335, %v2546
        %v2548 = vpop.f32.mrf.mxu0
        %v2549 = vpop.f32.mrf.mxu0
        %v2550 = vadd.f32 %v2335, %v2549
        %v2551 = vpop.f32.mrf.mxu0
        %2552 = vmatprep.mubr.bf16.mxu0 0
        %2553 = vmatmul.mubr.bf16.gmra.mxu0 %v2403
        %v2554 = vpop.f32.mrf.mxu0
        %v2555 = vadd.f32 %v2335, %v2554
        %v2556 = vpop.f32.mrf.mxu0
        %v2557 = vpop.f32.mrf.mxu0
        %v2558 = vadd.f32 %v2335, %v2557
        %v2559 = vpop.f32.mrf.mxu0
        %2560 = vmatprep.mubr.bf16.mxu0 0
        %2561 = vmatmul.mubr.bf16.gmra.mxu0 %v2406
        %v2562 = vpop.f32.mrf.mxu0
        %v2563 = vadd.f32 %v2335, %v2562
        %v2564 = vpop.f32.mrf.mxu0
        %v2565 = vpop.f32.mrf.mxu0
        %v2566 = vadd.f32 %v2335, %v2565
        %v2567 = vpop.f32.mrf.mxu0
        %2568 = vdwg.mxu0
        %v2569 = vmax.f32 %v2443, 0.0
        %v2570 = vmax.f32 %v2446, 0.0
        %v2571 = vmax.f32 %v2451, 0.0
        %v2572 = vmax.f32 %v2454, 0.0
        %v2573 = vmax.f32 %v2459, 0.0
        %v2574 = vmax.f32 %v2462, 0.0
        %v2575 = vmax.f32 %v2467, 0.0
        %v2576 = vmax.f32 %v2470, 0.0
        %v2577 = vmax.f32 %v2475, 0.0
        %v2578 = vmax.f32 %v2478, 0.0
        %v2579 = vmax.f32 %v2483, 0.0
        %v2580 = vmax.f32 %v2486, 0.0
        %v2581 = vmax.f32 %v2491, 0.0
        %v2582 = vmax.f32 %v2494, 0.0
        %v2583 = vmax.f32 %v2499, 0.0
        %v2584 = vmax.f32 %v2502, 0.0
        %v2585 = vmax.f32 %v2507, 0.0
        %v2586 = vmax.f32 %v2510, 0.0
        %v2587 = vmax.f32 %v2515, 0.0
        %v2588 = vmax.f32 %v2518, 0.0
        %v2589 = vmax.f32 %v2523, 0.0
        %v2590 = vmax.f32 %v2526, 0.0
        %v2591 = vmax.f32 %v2531, 0.0
        %v2592 = vmax.f32 %v2534, 0.0
        %v2593 = vmax.f32 %v2539, 0.0
        %v2594 = vmax.f32 %v2542, 0.0
        %v2595 = vmax.f32 %v2547, 0.0
        %v2596 = vmax.f32 %v2550, 0.0
        %v2597 = vmax.f32 %v2555, 0.0
        %v2598 = vmax.f32 %v2558, 0.0
        %v2599 = vmax.f32 %v2563, 0.0
        %v2600 = vmax.f32 %v2566, 0.0
        %v2601 = vpack.c.bf16 %v2570, %v2569
        %v2602 = vpack.c.bf16 %v2572, %v2571
        %v2603 = vpack.c.bf16 %v2574, %v2573
        %v2604 = vpack.c.bf16 %v2576, %v2575
        %v2605 = vpack.c.bf16 %v2578, %v2577
        %v2606 = vpack.c.bf16 %v2580, %v2579
        %v2607 = vpack.c.bf16 %v2582, %v2581
        %v2608 = vpack.c.bf16 %v2584, %v2583
        %v2609 = vpack.c.bf16 %v2586, %v2585
        %v2610 = vpack.c.bf16 %v2588, %v2587
        %v2611 = vpack.c.bf16 %v2590, %v2589
        %v2612 = vpack.c.bf16 %v2592, %v2591
        %v2613 = vpack.c.bf16 %v2594, %v2593
        %v2614 = vpack.c.bf16 %v2596, %v2595
        %v2615 = vpack.c.bf16 %v2598, %v2597
        %v2616 = vpack.c.bf16 %v2600, %v2599
        %s2617 = scalar_lea.vmem %s3, 64
        %v2618 = vld [vmem:[%s2617] sm:$0xf]
        %v2619 = vld [vmem:[%s2617 + $0x4] sm:$0xf]
        %v2620 = vld [vmem:[%s2617 + $0x8] sm:$0xf]
        %v2621 = vld [vmem:[%s2617 + $0xc] sm:$0xf]
        %v2622 = vld [vmem:[%s2617 + $0x10] sm:$0xf]
        %v2623 = vld [vmem:[%s2617 + $0x14] sm:$0xf]
        %v2624 = vld [vmem:[%s2617 + $0x18] sm:$0xf]
        %v2625 = vld [vmem:[%s2617 + $0x1c] sm:$0xf]
        %v2626 = vld [vmem:[%s2617 + $0x20] sm:$0xf]
        %v2627 = vld [vmem:[%s2617 + $0x24] sm:$0xf]
        %v2628 = vld [vmem:[%s2617 + $0x28] sm:$0xf]
        %v2629 = vld [vmem:[%s2617 + $0x2c] sm:$0xf]
        %v2630 = vld [vmem:[%s2617 + $0x30] sm:$0xf]
        %v2631 = vld [vmem:[%s2617 + $0x34] sm:$0xf]
        %v2632 = vld [vmem:[%s2617 + $0x38] sm:$0xf]
        %v2633 = vld [vmem:[%s2617 + $0x3c] sm:$0xf]
        %v2634 = vld [vmem:[%s5 + $0x8] sm:$0x1]
        %v2635 = vlaneseq
        %v2636 = vshrl.u32 %v2635, 7
        %v2637 = vsub.s32 0, %v2636
        %v2638 = vrot.slane %v2634, %v2637
        %v2655 = vunpack.c.l.b16 %v2618
        %v2656 = vunpack.c.l.b16 %v2619
        %v2657 = vunpack.c.l.b16 %v2620
        %v2658 = vunpack.c.l.b16 %v2621
        %v2659 = vunpack.c.l.b16 %v2622
        %v2660 = vunpack.c.l.b16 %v2623
        %v2661 = vunpack.c.l.b16 %v2624
        %v2662 = vunpack.c.l.b16 %v2625
        %v2663 = vunpack.c.l.b16 %v2626
        %v2664 = vunpack.c.l.b16 %v2627
        %v2665 = vunpack.c.l.b16 %v2628
        %v2666 = vunpack.c.l.b16 %v2629
        %v2667 = vunpack.c.l.b16 %v2630
        %v2668 = vunpack.c.l.b16 %v2631
        %v2669 = vunpack.c.l.b16 %v2632
        %v2670 = vunpack.c.l.b16 %v2633
        %v2671 = vpack.c.b16 %v2656, %v2655
        %v2672 = vpack.c.b16 %v2658, %v2657
        %v2673 = vpack.c.b16 %v2660, %v2659
        %v2674 = vpack.c.b16 %v2662, %v2661
        %v2675 = vpack.c.b16 %v2664, %v2663
        %v2676 = vpack.c.b16 %v2666, %v2665
        %v2677 = vpack.c.b16 %v2668, %v2667
        %v2678 = vpack.c.b16 %v2670, %v2669
        %2687 = vmatprep.subr.bf16.mxu0 0
        %2688 = vmatpush1.bf16.msra.mxu0 %v2678
        %2689 = vmatprep.subr.bf16.mxu0 0
        %2690 = vmatpush1.bf16.msra.mxu0 %v2677
        %2691 = vmatprep.subr.bf16.mxu0 0
        %2692 = vmatpush1.bf16.msra.mxu0 %v2676
        %2693 = vmatprep.subr.bf16.mxu0 0
        %2694 = vmatpush1.bf16.msra.mxu0 %v2675
        %2695 = vmatprep.subr.bf16.mxu0 0
        %2696 = vmatpush1.bf16.msra.mxu0 %v2674
        %2697 = vmatprep.subr.bf16.mxu0 0
        %2698 = vmatpush1.bf16.msra.mxu0 %v2673
        %2699 = vmatprep.subr.bf16.mxu0 0
        %2700 = vmatpush1.bf16.msra.mxu0 %v2672
        %2701 = vmatprep.subr.bf16.mxu0 0
        %2702 = vmatpush1.bf16.msra.mxu0 %v2671
        %2703 = vmatprep.subr.bf16.mxu0 0
        %2704 = vmatpush2.bf16.msra.mxu0 0
        %2705 = vmatprep.subr.bf16.mxu0 0
        %2706 = vmatpush2.bf16.msra.mxu0 0
        %2707 = vmatprep.subr.bf16.mxu0 0
        %2708 = vmatpush2.bf16.msra.mxu0 0
        %2709 = vmatprep.subr.bf16.mxu0 0
        %2710 = vmatpush2.bf16.msra.mxu0 0
        %2711 = vmatprep.subr.bf16.mxu0 0
        %2712 = vmatpush2.bf16.msra.mxu0 0
        %2713 = vmatprep.subr.bf16.mxu0 0
        %2714 = vmatpush2.bf16.msra.mxu0 0
        %2715 = vmatprep.subr.bf16.mxu0 0
        %2716 = vmatpush2.bf16.msra.mxu0 0
        %2717 = vmatprep.subr.bf16.mxu0 0
        %2718 = vmatpush2.bf16.msra.mxu0 0
        %2719 = vmatprep.mubr.bf16.mxu0 0
        %2720 = vmatmul.mubr.bf16.gmra.mxu0 %v2601
        %v2721 = vpop.f32.mrf.mxu0
        %v2722 = vadd.f32 %v2638, %v2721
        %v2723 = vpop.f32.mrf.mxu0
        %v2724 = vpop.f32.mrf.mxu0
        %v2725 = vadd.f32 %v2638, %v2724
        %v2726 = vpop.f32.mrf.mxu0
        %2727 = vmatprep.mubr.bf16.mxu0 0
        %2728 = vmatmul.mubr.bf16.gmra.mxu0 %v2602
        %v2729 = vpop.f32.mrf.mxu0
        %v2730 = vadd.f32 %v2638, %v2729
        %v2731 = vpop.f32.mrf.mxu0
        %v2732 = vpop.f32.mrf.mxu0
        %v2733 = vadd.f32 %v2638, %v2732
        %v2734 = vpop.f32.mrf.mxu0
        %2735 = vmatprep.mubr.bf16.mxu0 0
        %2736 = vmatmul.mubr.bf16.gmra.mxu0 %v2603
        %v2737 = vpop.f32.mrf.mxu0
        %v2738 = vadd.f32 %v2638, %v2737
        %v2739 = vpop.f32.mrf.mxu0
        %v2740 = vpop.f32.mrf.mxu0
        %v2741 = vadd.f32 %v2638, %v2740
        %v2742 = vpop.f32.mrf.mxu0
        %2743 = vmatprep.mubr.bf16.mxu0 0
        %2744 = vmatmul.mubr.bf16.gmra.mxu0 %v2604
        %v2745 = vpop.f32.mrf.mxu0
        %v2746 = vadd.f32 %v2638, %v2745
        %v2747 = vpop.f32.mrf.mxu0
        %v2748 = vpop.f32.mrf.mxu0
        %v2749 = vadd.f32 %v2638, %v2748
        %v2750 = vpop.f32.mrf.mxu0
        %2751 = vmatprep.mubr.bf16.mxu0 0
        %2752 = vmatmul.mubr.bf16.gmra.mxu0 %v2605
        %v2753 = vpop.f32.mrf.mxu0
        %v2754 = vadd.f32 %v2638, %v2753
        %v2755 = vpop.f32.mrf.mxu0
        %v2756 = vpop.f32.mrf.mxu0
        %v2757 = vadd.f32 %v2638, %v2756
        %v2758 = vpop.f32.mrf.mxu0
        %2759 = vmatprep.mubr.bf16.mxu0 0
        %2760 = vmatmul.mubr.bf16.gmra.mxu0 %v2606
        %v2761 = vpop.f32.mrf.mxu0
        %v2762 = vadd.f32 %v2638, %v2761
        %v2763 = vpop.f32.mrf.mxu0
        %v2764 = vpop.f32.mrf.mxu0
        %v2765 = vadd.f32 %v2638, %v2764
        %v2766 = vpop.f32.mrf.mxu0
        %2767 = vmatprep.mubr.bf16.mxu0 0
        %2768 = vmatmul.mubr.bf16.gmra.mxu0 %v2607
        %v2769 = vpop.f32.mrf.mxu0
        %v2770 = vadd.f32 %v2638, %v2769
        %v2771 = vpop.f32.mrf.mxu0
        %v2772 = vpop.f32.mrf.mxu0
        %v2773 = vadd.f32 %v2638, %v2772
        %v2774 = vpop.f32.mrf.mxu0
        %2775 = vmatprep.mubr.bf16.mxu0 0
        %2776 = vmatmul.mubr.bf16.gmra.mxu0 %v2608
        %v2777 = vpop.f32.mrf.mxu0
        %v2778 = vadd.f32 %v2638, %v2777
        %v2779 = vpop.f32.mrf.mxu0
        %v2780 = vpop.f32.mrf.mxu0
        %v2781 = vadd.f32 %v2638, %v2780
        %v2782 = vpop.f32.mrf.mxu0
        %2783 = vmatprep.mubr.bf16.mxu0 0
        %2784 = vmatmul.mubr.bf16.gmra.mxu0 %v2609
        %v2785 = vpop.f32.mrf.mxu0
        %v2786 = vadd.f32 %v2638, %v2785
        %v2787 = vpop.f32.mrf.mxu0
        %v2788 = vpop.f32.mrf.mxu0
        %v2789 = vadd.f32 %v2638, %v2788
        %v2790 = vpop.f32.mrf.mxu0
        %2791 = vmatprep.mubr.bf16.mxu0 0
        %2792 = vmatmul.mubr.bf16.gmra.mxu0 %v2610
        %v2793 = vpop.f32.mrf.mxu0
        %v2794 = vadd.f32 %v2638, %v2793
        %v2795 = vpop.f32.mrf.mxu0
        %v2796 = vpop.f32.mrf.mxu0
        %v2797 = vadd.f32 %v2638, %v2796
        %v2798 = vpop.f32.mrf.mxu0
        %2799 = vmatprep.mubr.bf16.mxu0 0
        %2800 = vmatmul.mubr.bf16.gmra.mxu0 %v2611
        %v2801 = vpop.f32.mrf.mxu0
        %v2802 = vadd.f32 %v2638, %v2801
        %v2803 = vpop.f32.mrf.mxu0
        %v2804 = vpop.f32.mrf.mxu0
        %v2805 = vadd.f32 %v2638, %v2804
        %v2806 = vpop.f32.mrf.mxu0
        %2807 = vmatprep.mubr.bf16.mxu0 0
        %2808 = vmatmul.mubr.bf16.gmra.mxu0 %v2612
        %v2809 = vpop.f32.mrf.mxu0
        %v2810 = vadd.f32 %v2638, %v2809
        %v2811 = vpop.f32.mrf.mxu0
        %v2812 = vpop.f32.mrf.mxu0
        %v2813 = vadd.f32 %v2638, %v2812
        %v2814 = vpop.f32.mrf.mxu0
        %2815 = vmatprep.mubr.bf16.mxu0 0
        %2816 = vmatmul.mubr.bf16.gmra.mxu0 %v2613
        %v2817 = vpop.f32.mrf.mxu0
        %v2818 = vadd.f32 %v2638, %v2817
        %v2819 = vpop.f32.mrf.mxu0
        %v2820 = vpop.f32.mrf.mxu0
        %v2821 = vadd.f32 %v2638, %v2820
        %v2822 = vpop.f32.mrf.mxu0
        %2823 = vmatprep.mubr.bf16.mxu0 0
        %2824 = vmatmul.mubr.bf16.gmra.mxu0 %v2614
        %v2825 = vpop.f32.mrf.mxu0
        %v2826 = vadd.f32 %v2638, %v2825
        %v2827 = vpop.f32.mrf.mxu0
        %v2828 = vpop.f32.mrf.mxu0
        %v2829 = vadd.f32 %v2638, %v2828
        %v2830 = vpop.f32.mrf.mxu0
        %2831 = vmatprep.mubr.bf16.mxu0 0
        %2832 = vmatmul.mubr.bf16.gmra.mxu0 %v2615
        %v2833 = vpop.f32.mrf.mxu0
        %v2834 = vadd.f32 %v2638, %v2833
        %v2835 = vpop.f32.mrf.mxu0
        %v2836 = vpop.f32.mrf.mxu0
        %v2837 = vadd.f32 %v2638, %v2836
        %v2838 = vpop.f32.mrf.mxu0
        %2839 = vmatprep.mubr.bf16.mxu0 0
        %2840 = vmatmul.mubr.bf16.gmra.mxu0 %v2616
        %v2841 = vpop.f32.mrf.mxu0
        %v2842 = vadd.f32 %v2638, %v2841
        %v2843 = vpop.f32.mrf.mxu0
        %v2844 = vpop.f32.mrf.mxu0
        %v2845 = vadd.f32 %v2638, %v2844
        %v2846 = vpop.f32.mrf.mxu0
        %2847 = vdwg.mxu0
        %v2848 = vadd.f32 %v1688, %v2722
        %v2849 = vadd.f32 %v1689, %v2725
        %v2850 = vadd.f32 %v1690, %v2730
        %v2851 = vadd.f32 %v1691, %v2733
        %v2852 = vadd.f32 %v1692, %v2738
        %v2853 = vadd.f32 %v1693, %v2741
        %v2854 = vadd.f32 %v1694, %v2746
        %v2855 = vadd.f32 %v1695, %v2749
        %v2856 = vadd.f32 %v1696, %v2754
        %v2857 = vadd.f32 %v1697, %v2757
        %v2858 = vadd.f32 %v1698, %v2762
        %v2859 = vadd.f32 %v1699, %v2765
        %v2860 = vadd.f32 %v1700, %v2770
        %v2861 = vadd.f32 %v1701, %v2773
        %v2862 = vadd.f32 %v1702, %v2778
        %v2863 = vadd.f32 %v1703, %v2781
        %v2864 = vadd.f32 %v1704, %v2786
        %v2865 = vadd.f32 %v1705, %v2789
        %v2866 = vadd.f32 %v1706, %v2794
        %v2867 = vadd.f32 %v1707, %v2797
        %v2868 = vadd.f32 %v1708, %v2802
        %v2869 = vadd.f32 %v1709, %v2805
        %v2870 = vadd.f32 %v1710, %v2810
        %v2871 = vadd.f32 %v1711, %v2813
        %v2872 = vadd.f32 %v1712, %v2818
        %v2873 = vadd.f32 %v1713, %v2821
        %v2874 = vadd.f32 %v1714, %v2826
        %v2875 = vadd.f32 %v1715, %v2829
        %v2876 = vadd.f32 %v1716, %v2834
        %v2877 = vadd.f32 %v1717, %v2837
        %v2878 = vadd.f32 %v1718, %v2842
        %v2879 = vadd.f32 %v1719, %v2845
        %v2880 = vld [vmem:[%s5 + $0x1] sm:$0x1]
        %v2881 = vld [vmem:[%s5 + $0x2] sm:$0x1]
        %v2882 = vsel %vm562, %v2848, 0.0
        %2883 = vadd.xlane.f32.xlu0 %v2882
        %v2884 = vpop.xlane.xlu0 %2883
        %v2885 = vsel %vm562, %v2849, 0.0
        %2886 = vadd.xlane.f32.xlu0 %v2885
        %v2887 = vpop.xlane.xlu0 %2886
        %v2888 = vsel %vm562, %v2850, 0.0
        %2889 = vadd.xlane.f32.xlu0 %v2888
        %v2890 = vpop.xlane.xlu0 %2889
        %v2891 = vsel %vm562, %v2851, 0.0
        %2892 = vadd.xlane.f32.xlu0 %v2891
        %v2893 = vpop.xlane.xlu0 %2892
        %v2894 = vsel %vm562, %v2852, 0.0
        %2895 = vadd.xlane.f32.xlu0 %v2894
        %v2896 = vpop.xlane.xlu0 %2895
        %v2897 = vsel %vm562, %v2853, 0.0
        %2898 = vadd.xlane.f32.xlu0 %v2897
        %v2899 = vpop.xlane.xlu0 %2898
        %v2900 = vsel %vm562, %v2854, 0.0
        %2901 = vadd.xlane.f32.xlu0 %v2900
        %v2902 = vpop.xlane.xlu0 %2901
        %v2903 = vsel %vm562, %v2855, 0.0
        %2904 = vadd.xlane.f32.xlu0 %v2903
        %v2905 = vpop.xlane.xlu0 %2904
        %v2906 = vsel %vm562, %v2856, 0.0
        %2907 = vadd.xlane.f32.xlu0 %v2906
        %v2908 = vpop.xlane.xlu0 %2907
        %v2909 = vsel %vm562, %v2857, 0.0
        %2910 = vadd.xlane.f32.xlu0 %v2909
        %v2911 = vpop.xlane.xlu0 %2910
        %v2912 = vsel %vm562, %v2858, 0.0
        %2913 = vadd.xlane.f32.xlu0 %v2912
        %v2914 = vpop.xlane.xlu0 %2913
        %v2915 = vsel %vm562, %v2859, 0.0
        %2916 = vadd.xlane.f32.xlu0 %v2915
        %v2917 = vpop.xlane.xlu0 %2916
        %v2918 = vsel %vm562, %v2860, 0.0
        %2919 = vadd.xlane.f32.xlu0 %v2918
        %v2920 = vpop.xlane.xlu0 %2919
        %v2921 = vsel %vm562, %v2861, 0.0
        %2922 = vadd.xlane.f32.xlu0 %v2921
        %v2923 = vpop.xlane.xlu0 %2922
        %v2924 = vsel %vm562, %v2862, 0.0
        %2925 = vadd.xlane.f32.xlu0 %v2924
        %v2926 = vpop.xlane.xlu0 %2925
        %v2927 = vsel %vm562, %v2863, 0.0
        %2928 = vadd.xlane.f32.xlu0 %v2927
        %v2929 = vpop.xlane.xlu0 %2928
        %v2930 = vsel %vm562, %v2864, 0.0
        %2931 = vadd.xlane.f32.xlu0 %v2930
        %v2932 = vpop.xlane.xlu0 %2931
        %v2933 = vsel %vm562, %v2865, 0.0
        %2934 = vadd.xlane.f32.xlu0 %v2933
        %v2935 = vpop.xlane.xlu0 %2934
        %v2936 = vsel %vm562, %v2866, 0.0
        %2937 = vadd.xlane.f32.xlu0 %v2936
        %v2938 = vpop.xlane.xlu0 %2937
        %v2939 = vsel %vm562, %v2867, 0.0
        %2940 = vadd.xlane.f32.xlu0 %v2939
        %v2941 = vpop.xlane.xlu0 %2940
        %v2942 = vsel %vm562, %v2868, 0.0
        %2943 = vadd.xlane.f32.xlu0 %v2942
        %v2944 = vpop.xlane.xlu0 %2943
        %v2945 = vsel %vm562, %v2869, 0.0
        %2946 = vadd.xlane.f32.xlu0 %v2945
        %v2947 = vpop.xlane.xlu0 %2946
        %v2948 = vsel %vm562, %v2870, 0.0
        %2949 = vadd.xlane.f32.xlu0 %v2948
        %v2950 = vpop.xlane.xlu0 %2949
        %v2951 = vsel %vm562, %v2871, 0.0
        %2952 = vadd.xlane.f32.xlu0 %v2951
        %v2953 = vpop.xlane.xlu0 %2952
        %v2954 = vsel %vm562, %v2872, 0.0
        %2955 = vadd.xlane.f32.xlu0 %v2954
        %v2956 = vpop.xlane.xlu0 %2955
        %v2957 = vsel %vm562, %v2873, 0.0
        %2958 = vadd.xlane.f32.xlu0 %v2957
        %v2959 = vpop.xlane.xlu0 %2958
        %v2960 = vsel %vm562, %v2874, 0.0
        %2961 = vadd.xlane.f32.xlu0 %v2960
        %v2962 = vpop.xlane.xlu0 %2961
        %v2963 = vsel %vm562, %v2875, 0.0
        %2964 = vadd.xlane.f32.xlu0 %v2963
        %v2965 = vpop.xlane.xlu0 %2964
        %v2966 = vsel %vm562, %v2876, 0.0
        %2967 = vadd.xlane.f32.xlu0 %v2966
        %v2968 = vpop.xlane.xlu0 %2967
        %v2969 = vsel %vm562, %v2877, 0.0
        %2970 = vadd.xlane.f32.xlu0 %v2969
        %v2971 = vpop.xlane.xlu0 %2970
        %v2972 = vsel %vm562, %v2878, 0.0
        %2973 = vadd.xlane.f32.xlu0 %v2972
        %v2974 = vpop.xlane.xlu0 %2973
        %v2975 = vsel %vm562, %v2879, 0.0
        %2976 = vadd.xlane.f32.xlu0 %v2975
        %v2977 = vpop.xlane.xlu0 %2976
        %v2978 = vmul.f32 %v2884, %v659
        %v2979 = vmul.f32 %v2887, %v659
        %v2980 = vmul.f32 %v2890, %v659
        %v2981 = vmul.f32 %v2893, %v659
        %v2982 = vmul.f32 %v2896, %v659
        %v2983 = vmul.f32 %v2899, %v659
        %v2984 = vmul.f32 %v2902, %v659
        %v2985 = vmul.f32 %v2905, %v659
        %v2986 = vmul.f32 %v2908, %v659
        %v2987 = vmul.f32 %v2911, %v659
        %v2988 = vmul.f32 %v2914, %v659
        %v2989 = vmul.f32 %v2917, %v659
        %v2990 = vmul.f32 %v2920, %v659
        %v2991 = vmul.f32 %v2923, %v659
        %v2992 = vmul.f32 %v2926, %v659
        %v2993 = vmul.f32 %v2929, %v659
        %v2994 = vmul.f32 %v2932, %v659
        %v2995 = vmul.f32 %v2935, %v659
        %v2996 = vmul.f32 %v2938, %v659
        %v2997 = vmul.f32 %v2941, %v659
        %v2998 = vmul.f32 %v2944, %v659
        %v2999 = vmul.f32 %v2947, %v659
        %v3000 = vmul.f32 %v2950, %v659
        %v3001 = vmul.f32 %v2953, %v659
        %v3002 = vmul.f32 %v2956, %v659
        %v3003 = vmul.f32 %v2959, %v659
        %v3004 = vmul.f32 %v2962, %v659
        %v3005 = vmul.f32 %v2965, %v659
        %v3006 = vmul.f32 %v2968, %v659
        %v3007 = vmul.f32 %v2971, %v659
        %v3008 = vmul.f32 %v2974, %v659
        %v3009 = vmul.f32 %v2977, %v659
        %v3010 = vmul.f32 %v2848, %v2848
        %v3011 = vmul.f32 %v2849, %v2849
        %v3012 = vmul.f32 %v2850, %v2850
        %v3013 = vmul.f32 %v2851, %v2851
        %v3014 = vmul.f32 %v2852, %v2852
        %v3015 = vmul.f32 %v2853, %v2853
        %v3016 = vmul.f32 %v2854, %v2854
        %v3017 = vmul.f32 %v2855, %v2855
        %v3018 = vmul.f32 %v2856, %v2856
        %v3019 = vmul.f32 %v2857, %v2857
        %v3020 = vmul.f32 %v2858, %v2858
        %v3021 = vmul.f32 %v2859, %v2859
        %v3022 = vmul.f32 %v2860, %v2860
        %v3023 = vmul.f32 %v2861, %v2861
        %v3024 = vmul.f32 %v2862, %v2862
        %v3025 = vmul.f32 %v2863, %v2863
        %v3026 = vmul.f32 %v2864, %v2864
        %v3027 = vmul.f32 %v2865, %v2865
        %v3028 = vmul.f32 %v2866, %v2866
        %v3029 = vmul.f32 %v2867, %v2867
        %v3030 = vmul.f32 %v2868, %v2868
        %v3031 = vmul.f32 %v2869, %v2869
        %v3032 = vmul.f32 %v2870, %v2870
        %v3033 = vmul.f32 %v2871, %v2871
        %v3034 = vmul.f32 %v2872, %v2872
        %v3035 = vmul.f32 %v2873, %v2873
        %v3036 = vmul.f32 %v2874, %v2874
        %v3037 = vmul.f32 %v2875, %v2875
        %v3038 = vmul.f32 %v2876, %v2876
        %v3039 = vmul.f32 %v2877, %v2877
        %v3040 = vmul.f32 %v2878, %v2878
        %v3041 = vmul.f32 %v2879, %v2879
        %v3042 = vsel %vm562, %v3010, 0.0
        %3043 = vadd.xlane.f32.xlu0 %v3042
        %v3044 = vpop.xlane.xlu0 %3043
        %v3045 = vsel %vm562, %v3011, 0.0
        %3046 = vadd.xlane.f32.xlu0 %v3045
        %v3047 = vpop.xlane.xlu0 %3046
        %v3048 = vsel %vm562, %v3012, 0.0
        %3049 = vadd.xlane.f32.xlu0 %v3048
        %v3050 = vpop.xlane.xlu0 %3049
        %v3051 = vsel %vm562, %v3013, 0.0
        %3052 = vadd.xlane.f32.xlu0 %v3051
        %v3053 = vpop.xlane.xlu0 %3052
        %v3054 = vsel %vm562, %v3014, 0.0
        %3055 = vadd.xlane.f32.xlu0 %v3054
        %v3056 = vpop.xlane.xlu0 %3055
        %v3057 = vsel %vm562, %v3015, 0.0
        %3058 = vadd.xlane.f32.xlu0 %v3057
        %v3059 = vpop.xlane.xlu0 %3058
        %v3060 = vsel %vm562, %v3016, 0.0
        %3061 = vadd.xlane.f32.xlu0 %v3060
        %v3062 = vpop.xlane.xlu0 %3061
        %v3063 = vsel %vm562, %v3017, 0.0
        %3064 = vadd.xlane.f32.xlu0 %v3063
        %v3065 = vpop.xlane.xlu0 %3064
        %v3066 = vsel %vm562, %v3018, 0.0
        %3067 = vadd.xlane.f32.xlu0 %v3066
        %v3068 = vpop.xlane.xlu0 %3067
        %v3069 = vsel %vm562, %v3019, 0.0
        %3070 = vadd.xlane.f32.xlu0 %v3069
        %v3071 = vpop.xlane.xlu0 %3070
        %v3072 = vsel %vm562, %v3020, 0.0
        %3073 = vadd.xlane.f32.xlu0 %v3072
        %v3074 = vpop.xlane.xlu0 %3073
        %v3075 = vsel %vm562, %v3021, 0.0
        %3076 = vadd.xlane.f32.xlu0 %v3075
        %v3077 = vpop.xlane.xlu0 %3076
        %v3078 = vsel %vm562, %v3022, 0.0
        %3079 = vadd.xlane.f32.xlu0 %v3078
        %v3080 = vpop.xlane.xlu0 %3079
        %v3081 = vsel %vm562, %v3023, 0.0
        %3082 = vadd.xlane.f32.xlu0 %v3081
        %v3083 = vpop.xlane.xlu0 %3082
        %v3084 = vsel %vm562, %v3024, 0.0
        %3085 = vadd.xlane.f32.xlu0 %v3084
        %v3086 = vpop.xlane.xlu0 %3085
        %v3087 = vsel %vm562, %v3025, 0.0
        %3088 = vadd.xlane.f32.xlu0 %v3087
        %v3089 = vpop.xlane.xlu0 %3088
        %v3090 = vsel %vm562, %v3026, 0.0
        %3091 = vadd.xlane.f32.xlu0 %v3090
        %v3092 = vpop.xlane.xlu0 %3091
        %v3093 = vsel %vm562, %v3027, 0.0
        %3094 = vadd.xlane.f32.xlu0 %v3093
        %v3095 = vpop.xlane.xlu0 %3094
        %v3096 = vsel %vm562, %v3028, 0.0
        %3097 = vadd.xlane.f32.xlu0 %v3096
        %v3098 = vpop.xlane.xlu0 %3097
        %v3099 = vsel %vm562, %v3029, 0.0
        %3100 = vadd.xlane.f32.xlu0 %v3099
        %v3101 = vpop.xlane.xlu0 %3100
        %v3102 = vsel %vm562, %v3030, 0.0
        %3103 = vadd.xlane.f32.xlu0 %v3102
        %v3104 = vpop.xlane.xlu0 %3103
        %v3105 = vsel %vm562, %v3031, 0.0
        %3106 = vadd.xlane.f32.xlu0 %v3105
        %v3107 = vpop.xlane.xlu0 %3106
        %v3108 = vsel %vm562, %v3032, 0.0
        %3109 = vadd.xlane.f32.xlu0 %v3108
        %v3110 = vpop.xlane.xlu0 %3109
        %v3111 = vsel %vm562, %v3033, 0.0
        %3112 = vadd.xlane.f32.xlu0 %v3111
        %v3113 = vpop.xlane.xlu0 %3112
        %v3114 = vsel %vm562, %v3034, 0.0
        %3115 = vadd.xlane.f32.xlu0 %v3114
        %v3116 = vpop.xlane.xlu0 %3115
        %v3117 = vsel %vm562, %v3035, 0.0
        %3118 = vadd.xlane.f32.xlu0 %v3117
        %v3119 = vpop.xlane.xlu0 %3118
        %v3120 = vsel %vm562, %v3036, 0.0
        %3121 = vadd.xlane.f32.xlu0 %v3120
        %v3122 = vpop.xlane.xlu0 %3121
        %v3123 = vsel %vm562, %v3037, 0.0
        %3124 = vadd.xlane.f32.xlu0 %v3123
        %v3125 = vpop.xlane.xlu0 %3124
        %v3126 = vsel %vm562, %v3038, 0.0
        %3127 = vadd.xlane.f32.xlu0 %v3126
        %v3128 = vpop.xlane.xlu0 %3127
        %v3129 = vsel %vm562, %v3039, 0.0
        %3130 = vadd.xlane.f32.xlu0 %v3129
        %v3131 = vpop.xlane.xlu0 %3130
        %v3132 = vsel %vm562, %v3040, 0.0
        %3133 = vadd.xlane.f32.xlu0 %v3132
        %v3134 = vpop.xlane.xlu0 %3133
        %v3135 = vsel %vm562, %v3041, 0.0
        %3136 = vadd.xlane.f32.xlu0 %v3135
        %v3137 = vpop.xlane.xlu0 %3136
        %v3138 = vmul.f32 %v3044, %v659
        %v3139 = vmul.f32 %v3047, %v659
        %v3140 = vmul.f32 %v3050, %v659
        %v3141 = vmul.f32 %v3053, %v659
        %v3142 = vmul.f32 %v3056, %v659
        %v3143 = vmul.f32 %v3059, %v659
        %v3144 = vmul.f32 %v3062, %v659
        %v3145 = vmul.f32 %v3065, %v659
        %v3146 = vmul.f32 %v3068, %v659
        %v3147 = vmul.f32 %v3071, %v659
        %v3148 = vmul.f32 %v3074, %v659
        %v3149 = vmul.f32 %v3077, %v659
        %v3150 = vmul.f32 %v3080, %v659
        %v3151 = vmul.f32 %v3083, %v659
        %v3152 = vmul.f32 %v3086, %v659
        %v3153 = vmul.f32 %v3089, %v659
        %v3154 = vmul.f32 %v3092, %v659
        %v3155 = vmul.f32 %v3095, %v659
        %v3156 = vmul.f32 %v3098, %v659
        %v3157 = vmul.f32 %v3101, %v659
        %v3158 = vmul.f32 %v3104, %v659
        %v3159 = vmul.f32 %v3107, %v659
        %v3160 = vmul.f32 %v3110, %v659
        %v3161 = vmul.f32 %v3113, %v659
        %v3162 = vmul.f32 %v3116, %v659
        %v3163 = vmul.f32 %v3119, %v659
        %v3164 = vmul.f32 %v3122, %v659
        %v3165 = vmul.f32 %v3125, %v659
        %v3166 = vmul.f32 %v3128, %v659
        %v3167 = vmul.f32 %v3131, %v659
        %v3168 = vmul.f32 %v3134, %v659
        %v3169 = vmul.f32 %v3137, %v659
        %v3170 = vmul.f32 %v2978, %v2978
        %v3171 = vmul.f32 %v2979, %v2979
        %v3172 = vmul.f32 %v2980, %v2980
        %v3173 = vmul.f32 %v2981, %v2981
        %v3174 = vmul.f32 %v2982, %v2982
        %v3175 = vmul.f32 %v2983, %v2983
        %v3176 = vmul.f32 %v2984, %v2984
        %v3177 = vmul.f32 %v2985, %v2985
        %v3178 = vmul.f32 %v2986, %v2986
        %v3179 = vmul.f32 %v2987, %v2987
        %v3180 = vmul.f32 %v2988, %v2988
        %v3181 = vmul.f32 %v2989, %v2989
        %v3182 = vmul.f32 %v2990, %v2990
        %v3183 = vmul.f32 %v2991, %v2991
        %v3184 = vmul.f32 %v2992, %v2992
        %v3185 = vmul.f32 %v2993, %v2993
        %v3186 = vmul.f32 %v2994, %v2994
        %v3187 = vmul.f32 %v2995, %v2995
        %v3188 = vmul.f32 %v2996, %v2996
        %v3189 = vmul.f32 %v2997, %v2997
        %v3190 = vmul.f32 %v2998, %v2998
        %v3191 = vmul.f32 %v2999, %v2999
        %v3192 = vmul.f32 %v3000, %v3000
        %v3193 = vmul.f32 %v3001, %v3001
        %v3194 = vmul.f32 %v3002, %v3002
        %v3195 = vmul.f32 %v3003, %v3003
        %v3196 = vmul.f32 %v3004, %v3004
        %v3197 = vmul.f32 %v3005, %v3005
        %v3198 = vmul.f32 %v3006, %v3006
        %v3199 = vmul.f32 %v3007, %v3007
        %v3200 = vmul.f32 %v3008, %v3008
        %v3201 = vmul.f32 %v3009, %v3009
        %v3202 = vsub.f32 %v3138, %v3170
        %v3203 = vsub.f32 %v3139, %v3171
        %v3204 = vsub.f32 %v3140, %v3172
        %v3205 = vsub.f32 %v3141, %v3173
        %v3206 = vsub.f32 %v3142, %v3174
        %v3207 = vsub.f32 %v3143, %v3175
        %v3208 = vsub.f32 %v3144, %v3176
        %v3209 = vsub.f32 %v3145, %v3177
        %v3210 = vsub.f32 %v3146, %v3178
        %v3211 = vsub.f32 %v3147, %v3179
        %v3212 = vsub.f32 %v3148, %v3180
        %v3213 = vsub.f32 %v3149, %v3181
        %v3214 = vsub.f32 %v3150, %v3182
        %v3215 = vsub.f32 %v3151, %v3183
        %v3216 = vsub.f32 %v3152, %v3184
        %v3217 = vsub.f32 %v3153, %v3185
        %v3218 = vsub.f32 %v3154, %v3186
        %v3219 = vsub.f32 %v3155, %v3187
        %v3220 = vsub.f32 %v3156, %v3188
        %v3221 = vsub.f32 %v3157, %v3189
        %v3222 = vsub.f32 %v3158, %v3190
        %v3223 = vsub.f32 %v3159, %v3191
        %v3224 = vsub.f32 %v3160, %v3192
        %v3225 = vsub.f32 %v3161, %v3193
        %v3226 = vsub.f32 %v3162, %v3194
        %v3227 = vsub.f32 %v3163, %v3195
        %v3228 = vsub.f32 %v3164, %v3196
        %v3229 = vsub.f32 %v3165, %v3197
        %v3230 = vsub.f32 %v3166, %v3198
        %v3231 = vsub.f32 %v3167, %v3199
        %v3232 = vsub.f32 %v3168, %v3200
        %v3233 = vsub.f32 %v3169, %v3201
        %v3234 = vadd.f32 %v3202, 1e-05
        %v3235 = vadd.f32 %v3203, 1e-05
        %v3236 = vadd.f32 %v3204, 1e-05
        %v3237 = vadd.f32 %v3205, 1e-05
        %v3238 = vadd.f32 %v3206, 1e-05
        %v3239 = vadd.f32 %v3207, 1e-05
        %v3240 = vadd.f32 %v3208, 1e-05
        %v3241 = vadd.f32 %v3209, 1e-05
        %v3242 = vadd.f32 %v3210, 1e-05
        %v3243 = vadd.f32 %v3211, 1e-05
        %v3244 = vadd.f32 %v3212, 1e-05
        %v3245 = vadd.f32 %v3213, 1e-05
        %v3246 = vadd.f32 %v3214, 1e-05
        %v3247 = vadd.f32 %v3215, 1e-05
        %v3248 = vadd.f32 %v3216, 1e-05
        %v3249 = vadd.f32 %v3217, 1e-05
        %v3250 = vadd.f32 %v3218, 1e-05
        %v3251 = vadd.f32 %v3219, 1e-05
        %v3252 = vadd.f32 %v3220, 1e-05
        %v3253 = vadd.f32 %v3221, 1e-05
        %v3254 = vadd.f32 %v3222, 1e-05
        %v3255 = vadd.f32 %v3223, 1e-05
        %v3256 = vadd.f32 %v3224, 1e-05
        %v3257 = vadd.f32 %v3225, 1e-05
        %v3258 = vadd.f32 %v3226, 1e-05
        %v3259 = vadd.f32 %v3227, 1e-05
        %v3260 = vadd.f32 %v3228, 1e-05
        %v3261 = vadd.f32 %v3229, 1e-05
        %v3262 = vadd.f32 %v3230, 1e-05
        %v3263 = vadd.f32 %v3231, 1e-05
        %v3264 = vadd.f32 %v3232, 1e-05
        %v3265 = vadd.f32 %v3233, 1e-05
        %v3266 = vrsqrt.pop %v3234
        %v3267 = vrsqrt.pop %v3235
        %v3268 = vrsqrt.pop %v3236
        %v3269 = vrsqrt.pop %v3237
        %v3270 = vrsqrt.pop %v3238
        %v3271 = vrsqrt.pop %v3239
        %v3272 = vrsqrt.pop %v3240
        %v3273 = vrsqrt.pop %v3241
        %v3274 = vrsqrt.pop %v3242
        %v3275 = vrsqrt.pop %v3243
        %v3276 = vrsqrt.pop %v3244
        %v3277 = vrsqrt.pop %v3245
        %v3278 = vrsqrt.pop %v3246
        %v3279 = vrsqrt.pop %v3247
        %v3280 = vrsqrt.pop %v3248
        %v3281 = vrsqrt.pop %v3249
        %v3282 = vrsqrt.pop %v3250
        %v3283 = vrsqrt.pop %v3251
        %v3284 = vrsqrt.pop %v3252
        %v3285 = vrsqrt.pop %v3253
        %v3286 = vrsqrt.pop %v3254
        %v3287 = vrsqrt.pop %v3255
        %v3288 = vrsqrt.pop %v3256
        %v3289 = vrsqrt.pop %v3257
        %v3290 = vrsqrt.pop %v3258
        %v3291 = vrsqrt.pop %v3259
        %v3292 = vrsqrt.pop %v3260
        %v3293 = vrsqrt.pop %v3261
        %v3294 = vrsqrt.pop %v3262
        %v3295 = vrsqrt.pop %v3263
        %v3296 = vrsqrt.pop %v3264
        %v3297 = vrsqrt.pop %v3265
        %v3298 = vlaneseq
        %v3299 = vshrl.u32 %v3298, 7
        %v3300 = vsub.s32 0, %v3299
        %v3301 = vrot.slane %v2880, %v3300
        %v3302 = vmul.f32 %v3266, %v3301
        %v3303 = vmul.f32 %v3267, %v3301
        %v3304 = vmul.f32 %v3268, %v3301
        %v3305 = vmul.f32 %v3269, %v3301
        %v3306 = vmul.f32 %v3270, %v3301
        %v3307 = vmul.f32 %v3271, %v3301
        %v3308 = vmul.f32 %v3272, %v3301
        %v3309 = vmul.f32 %v3273, %v3301
        %v3310 = vmul.f32 %v3274, %v3301
        %v3311 = vmul.f32 %v3275, %v3301
        %v3312 = vmul.f32 %v3276, %v3301
        %v3313 = vmul.f32 %v3277, %v3301
        %v3314 = vmul.f32 %v3278, %v3301
        %v3315 = vmul.f32 %v3279, %v3301
        %v3316 = vmul.f32 %v3280, %v3301
        %v3317 = vmul.f32 %v3281, %v3301
        %v3318 = vmul.f32 %v3282, %v3301
        %v3319 = vmul.f32 %v3283, %v3301
        %v3320 = vmul.f32 %v3284, %v3301
        %v3321 = vmul.f32 %v3285, %v3301
        %v3322 = vmul.f32 %v3286, %v3301
        %v3323 = vmul.f32 %v3287, %v3301
        %v3324 = vmul.f32 %v3288, %v3301
        %v3325 = vmul.f32 %v3289, %v3301
        %v3326 = vmul.f32 %v3290, %v3301
        %v3327 = vmul.f32 %v3291, %v3301
        %v3328 = vmul.f32 %v3292, %v3301
        %v3329 = vmul.f32 %v3293, %v3301
        %v3330 = vmul.f32 %v3294, %v3301
        %v3331 = vmul.f32 %v3295, %v3301
        %v3332 = vmul.f32 %v3296, %v3301
        %v3333 = vmul.f32 %v3297, %v3301
        %v3334 = vmul.f32 %v2848, %v3302
        %v3335 = vmul.f32 %v2849, %v3303
        %v3336 = vmul.f32 %v2850, %v3304
        %v3337 = vmul.f32 %v2851, %v3305
        %v3338 = vmul.f32 %v2852, %v3306
        %v3339 = vmul.f32 %v2853, %v3307
        %v3340 = vmul.f32 %v2854, %v3308
        %v3341 = vmul.f32 %v2855, %v3309
        %v3342 = vmul.f32 %v2856, %v3310
        %v3343 = vmul.f32 %v2857, %v3311
        %v3344 = vmul.f32 %v2858, %v3312
        %v3345 = vmul.f32 %v2859, %v3313
        %v3346 = vmul.f32 %v2860, %v3314
        %v3347 = vmul.f32 %v2861, %v3315
        %v3348 = vmul.f32 %v2862, %v3316
        %v3349 = vmul.f32 %v2863, %v3317
        %v3350 = vmul.f32 %v2864, %v3318
        %v3351 = vmul.f32 %v2865, %v3319
        %v3352 = vmul.f32 %v2866, %v3320
        %v3353 = vmul.f32 %v2867, %v3321
        %v3354 = vmul.f32 %v2868, %v3322
        %v3355 = vmul.f32 %v2869, %v3323
        %v3356 = vmul.f32 %v2870, %v3324
        %v3357 = vmul.f32 %v2871, %v3325
        %v3358 = vmul.f32 %v2872, %v3326
        %v3359 = vmul.f32 %v2873, %v3327
        %v3360 = vmul.f32 %v2874, %v3328
        %v3361 = vmul.f32 %v2875, %v3329
        %v3362 = vmul.f32 %v2876, %v3330
        %v3363 = vmul.f32 %v2877, %v3331
        %v3364 = vmul.f32 %v2878, %v3332
        %v3365 = vmul.f32 %v2879, %v3333
        %v3366 = vmul.f32 %v2978, %v3302
        %v3367 = vmul.f32 %v2979, %v3303
        %v3368 = vmul.f32 %v2980, %v3304
        %v3369 = vmul.f32 %v2981, %v3305
        %v3370 = vmul.f32 %v2982, %v3306
        %v3371 = vmul.f32 %v2983, %v3307
        %v3372 = vmul.f32 %v2984, %v3308
        %v3373 = vmul.f32 %v2985, %v3309
        %v3374 = vmul.f32 %v2986, %v3310
        %v3375 = vmul.f32 %v2987, %v3311
        %v3376 = vmul.f32 %v2988, %v3312
        %v3377 = vmul.f32 %v2989, %v3313
        %v3378 = vmul.f32 %v2990, %v3314
        %v3379 = vmul.f32 %v2991, %v3315
        %v3380 = vmul.f32 %v2992, %v3316
        %v3381 = vmul.f32 %v2993, %v3317
        %v3382 = vmul.f32 %v2994, %v3318
        %v3383 = vmul.f32 %v2995, %v3319
        %v3384 = vmul.f32 %v2996, %v3320
        %v3385 = vmul.f32 %v2997, %v3321
        %v3386 = vmul.f32 %v2998, %v3322
        %v3387 = vmul.f32 %v2999, %v3323
        %v3388 = vmul.f32 %v3000, %v3324
        %v3389 = vmul.f32 %v3001, %v3325
        %v3390 = vmul.f32 %v3002, %v3326
        %v3391 = vmul.f32 %v3003, %v3327
        %v3392 = vmul.f32 %v3004, %v3328
        %v3393 = vmul.f32 %v3005, %v3329
        %v3394 = vmul.f32 %v3006, %v3330
        %v3395 = vmul.f32 %v3007, %v3331
        %v3396 = vmul.f32 %v3008, %v3332
        %v3397 = vmul.f32 %v3009, %v3333
        %v3398 = vlaneseq
        %v3399 = vshrl.u32 %v3398, 7
        %v3400 = vsub.s32 0, %v3399
        %v3401 = vrot.slane %v2881, %v3400
        %v3402 = vsub.f32 %v3401, %v3366
        %v3403 = vsub.f32 %v3401, %v3367
        %v3404 = vsub.f32 %v3401, %v3368
        %v3405 = vsub.f32 %v3401, %v3369
        %v3406 = vsub.f32 %v3401, %v3370
        %v3407 = vsub.f32 %v3401, %v3371
        %v3408 = vsub.f32 %v3401, %v3372
        %v3409 = vsub.f32 %v3401, %v3373
        %v3410 = vsub.f32 %v3401, %v3374
        %v3411 = vsub.f32 %v3401, %v3375
        %v3412 = vsub.f32 %v3401, %v3376
        %v3413 = vsub.f32 %v3401, %v3377
        %v3414 = vsub.f32 %v3401, %v3378
        %v3415 = vsub.f32 %v3401, %v3379
        %v3416 = vsub.f32 %v3401, %v3380
        %v3417 = vsub.f32 %v3401, %v3381
        %v3418 = vsub.f32 %v3401, %v3382
        %v3419 = vsub.f32 %v3401, %v3383
        %v3420 = vsub.f32 %v3401, %v3384
        %v3421 = vsub.f32 %v3401, %v3385
        %v3422 = vsub.f32 %v3401, %v3386
        %v3423 = vsub.f32 %v3401, %v3387
        %v3424 = vsub.f32 %v3401, %v3388
        %v3425 = vsub.f32 %v3401, %v3389
        %v3426 = vsub.f32 %v3401, %v3390
        %v3427 = vsub.f32 %v3401, %v3391
        %v3428 = vsub.f32 %v3401, %v3392
        %v3429 = vsub.f32 %v3401, %v3393
        %v3430 = vsub.f32 %v3401, %v3394
        %v3431 = vsub.f32 %v3401, %v3395
        %v3432 = vsub.f32 %v3401, %v3396
        %v3433 = vsub.f32 %v3401, %v3397
        %v3434 = vadd.f32 %v3334, %v3402
        %v3435 = vadd.f32 %v3335, %v3403
        %v3436 = vadd.f32 %v3336, %v3404
        %v3437 = vadd.f32 %v3337, %v3405
        %v3438 = vadd.f32 %v3338, %v3406
        %v3439 = vadd.f32 %v3339, %v3407
        %v3440 = vadd.f32 %v3340, %v3408
        %v3441 = vadd.f32 %v3341, %v3409
        %v3442 = vadd.f32 %v3342, %v3410
        %v3443 = vadd.f32 %v3343, %v3411
        %v3444 = vadd.f32 %v3344, %v3412
        %v3445 = vadd.f32 %v3345, %v3413
        %v3446 = vadd.f32 %v3346, %v3414
        %v3447 = vadd.f32 %v3347, %v3415
        %v3448 = vadd.f32 %v3348, %v3416
        %v3449 = vadd.f32 %v3349, %v3417
        %v3450 = vadd.f32 %v3350, %v3418
        %v3451 = vadd.f32 %v3351, %v3419
        %v3452 = vadd.f32 %v3352, %v3420
        %v3453 = vadd.f32 %v3353, %v3421
        %v3454 = vadd.f32 %v3354, %v3422
        %v3455 = vadd.f32 %v3355, %v3423
        %v3456 = vadd.f32 %v3356, %v3424
        %v3457 = vadd.f32 %v3357, %v3425
        %v3458 = vadd.f32 %v3358, %v3426
        %v3459 = vadd.f32 %v3359, %v3427
        %v3460 = vadd.f32 %v3360, %v3428
        %v3461 = vadd.f32 %v3361, %v3429
        %v3462 = vadd.f32 %v3362, %v3430
        %v3463 = vadd.f32 %v3363, %v3431
        %v3464 = vadd.f32 %v3364, %v3432
        %v3465 = vadd.f32 %v3365, %v3433
        %v3466 = vmax.f32 %v3434, 0.0
        %v3467 = vmax.f32 %v3435, 0.0
        %v3468 = vmax.f32 %v3436, 0.0
        %v3469 = vmax.f32 %v3437, 0.0
        %v3470 = vmax.f32 %v3438, 0.0
        %v3471 = vmax.f32 %v3439, 0.0
        %v3472 = vmax.f32 %v3440, 0.0
        %v3473 = vmax.f32 %v3441, 0.0
        %v3474 = vmax.f32 %v3442, 0.0
        %v3475 = vmax.f32 %v3443, 0.0
        %v3476 = vmax.f32 %v3444, 0.0
        %v3477 = vmax.f32 %v3445, 0.0
        %v3478 = vmax.f32 %v3446, 0.0
        %v3479 = vmax.f32 %v3447, 0.0
        %v3480 = vmax.f32 %v3448, 0.0
        %v3481 = vmax.f32 %v3449, 0.0
        %v3482 = vmax.f32 %v3450, 0.0
        %v3483 = vmax.f32 %v3451, 0.0
        %v3484 = vmax.f32 %v3452, 0.0
        %v3485 = vmax.f32 %v3453, 0.0
        %v3486 = vmax.f32 %v3454, 0.0
        %v3487 = vmax.f32 %v3455, 0.0
        %v3488 = vmax.f32 %v3456, 0.0
        %v3489 = vmax.f32 %v3457, 0.0
        %v3490 = vmax.f32 %v3458, 0.0
        %v3491 = vmax.f32 %v3459, 0.0
        %v3492 = vmax.f32 %v3460, 0.0
        %v3493 = vmax.f32 %v3461, 0.0
        %v3494 = vmax.f32 %v3462, 0.0
        %v3495 = vmax.f32 %v3463, 0.0
        %v3496 = vmax.f32 %v3464, 0.0
        %v3497 = vmax.f32 %v3465, 0.0
        %v3498 = vpack.c.bf16 %v3467, %v3466
        %v3499 = vpack.c.bf16 %v3469, %v3468
        %v3500 = vpack.c.bf16 %v3471, %v3470
        %v3501 = vpack.c.bf16 %v3473, %v3472
        %v3502 = vpack.c.bf16 %v3475, %v3474
        %v3503 = vpack.c.bf16 %v3477, %v3476
        %v3504 = vpack.c.bf16 %v3479, %v3478
        %v3505 = vpack.c.bf16 %v3481, %v3480
        %v3506 = vpack.c.bf16 %v3483, %v3482
        %v3507 = vpack.c.bf16 %v3485, %v3484
        %v3508 = vpack.c.bf16 %v3487, %v3486
        %v3509 = vpack.c.bf16 %v3489, %v3488
        %v3510 = vpack.c.bf16 %v3491, %v3490
        %v3511 = vpack.c.bf16 %v3493, %v3492
        %v3512 = vpack.c.bf16 %v3495, %v3494
        %v3513 = vpack.c.bf16 %v3497, %v3496
        %v3514 = vld [vmem:[%s4] sm:$0xf]
        %v3515 = vld [vmem:[%s4 + $0x4] sm:$0xf]
        %v3516 = vld [vmem:[%s4 + $0x8] sm:$0xf]
        %v3517 = vld [vmem:[%s4 + $0xc] sm:$0xf]
        %v3518 = vld [vmem:[%s4 + $0x10] sm:$0xf]
        %v3519 = vld [vmem:[%s4 + $0x14] sm:$0xf]
        %v3520 = vld [vmem:[%s4 + $0x18] sm:$0xf]
        %v3521 = vld [vmem:[%s4 + $0x1c] sm:$0xf]
        %v3522 = vld [vmem:[%s6] sm:$0x1]
        %v3523 = vlaneseq
        %v3524 = vshrl.u32 %v3523, 7
        %v3525 = vsub.s32 0, %v3524
        %v3526 = vrot.slane %v3522, %v3525
        %v3535 = vunpack.c.l.b16 %v3514
        %v3536 = vunpack.c.l.b16 %v3515
        %v3537 = vunpack.c.l.b16 %v3516
        %v3538 = vunpack.c.l.b16 %v3517
        %v3539 = vunpack.c.l.b16 %v3518
        %v3540 = vunpack.c.l.b16 %v3519
        %v3541 = vunpack.c.l.b16 %v3520
        %v3542 = vunpack.c.l.b16 %v3521
        %v3543 = vpack.c.b16 %v3536, %v3535
        %v3544 = vpack.c.b16 %v3538, %v3537
        %v3545 = vpack.c.b16 %v3540, %v3539
        %v3546 = vpack.c.b16 %v3542, %v3541
        %v3552 = vsel %vm562, %v3498, 0
        %v3555 = vsel %vm562, %v3499, 0
        %v3558 = vsel %vm562, %v3500, 0
        %v3561 = vsel %vm562, %v3501, 0
        %v3564 = vsel %vm562, %v3502, 0
        %v3567 = vsel %vm562, %v3503, 0
        %v3570 = vsel %vm562, %v3504, 0
        %v3573 = vsel %vm562, %v3505, 0
        %v3576 = vsel %vm562, %v3506, 0
        %v3579 = vsel %vm562, %v3507, 0
        %v3582 = vsel %vm562, %v3508, 0
        %v3585 = vsel %vm562, %v3509, 0
        %v3588 = vsel %vm562, %v3510, 0
        %v3591 = vsel %vm562, %v3511, 0
        %v3594 = vsel %vm562, %v3512, 0
        %v3597 = vsel %vm562, %v3513, 0
        %3599 = vmatprep.subr.bf16.mxu0 0
        %3600 = vmatpush1.bf16.msra.mxu0 0
        %3601 = vmatprep.subr.bf16.mxu0 0
        %3602 = vmatpush1.bf16.msra.mxu0 0
        %3603 = vmatprep.subr.bf16.mxu0 0
        %3604 = vmatpush1.bf16.msra.mxu0 0
        %3605 = vmatprep.subr.bf16.mxu0 0
        %3606 = vmatpush1.bf16.msra.mxu0 0
        %3607 = vmatprep.subr.bf16.mxu0 0
        %3608 = vmatpush1.bf16.msra.mxu0 %v3546
        %3609 = vmatprep.subr.bf16.mxu0 0
        %3610 = vmatpush1.bf16.msra.mxu0 %v3545
        %3611 = vmatprep.subr.bf16.mxu0 0
        %3612 = vmatpush1.bf16.msra.mxu0 %v3544
        %3613 = vmatprep.subr.bf16.mxu0 0
        %3614 = vmatpush1.bf16.msra.mxu0 %v3543
        %3615 = vmatprep.subr.bf16.mxu0 0
        %3616 = vmatpush2.bf16.msra.mxu0 0
        %3617 = vmatprep.subr.bf16.mxu0 0
        %3618 = vmatpush2.bf16.msra.mxu0 0
        %3619 = vmatprep.subr.bf16.mxu0 0
        %3620 = vmatpush2.bf16.msra.mxu0 0
        %3621 = vmatprep.subr.bf16.mxu0 0
        %3622 = vmatpush2.bf16.msra.mxu0 0
        %3623 = vmatprep.subr.bf16.mxu0 0
        %3624 = vmatpush2.bf16.msra.mxu0 0
        %3625 = vmatprep.subr.bf16.mxu0 0
        %3626 = vmatpush2.bf16.msra.mxu0 0
        %3627 = vmatprep.subr.bf16.mxu0 0
        %3628 = vmatpush2.bf16.msra.mxu0 0
        %3629 = vmatprep.subr.bf16.mxu0 0
        %3630 = vmatpush2.bf16.msra.mxu0 0
        %3631 = vmatprep.mubr.bf16.mxu0 0
        %3632 = vmatmul.mubr.bf16.gmra.mxu0 %v3552
        %v3633 = vpop.f32.mrf.mxu0
        %v3634 = vadd.f32 %v3526, %v3633
        %v3635 = vpop.f32.mrf.mxu0
        %v3636 = vpop.f32.mrf.mxu0
        %v3637 = vadd.f32 %v3526, %v3636
        %v3638 = vpop.f32.mrf.mxu0
        %3639 = vmatprep.mubr.bf16.mxu0 0
        %3640 = vmatmul.mubr.bf16.gmra.mxu0 %v3555
        %v3641 = vpop.f32.mrf.mxu0
        %v3642 = vadd.f32 %v3526, %v3641
        %v3643 = vpop.f32.mrf.mxu0
        %v3644 = vpop.f32.mrf.mxu0
        %v3645 = vadd.f32 %v3526, %v3644
        %v3646 = vpop.f32.mrf.mxu0
        %3647 = vmatprep.mubr.bf16.mxu0 0
        %3648 = vmatmul.mubr.bf16.gmra.mxu0 %v3558
        %v3649 = vpop.f32.mrf.mxu0
        %v3650 = vadd.f32 %v3526, %v3649
        %v3651 = vpop.f32.mrf.mxu0
        %v3652 = vpop.f32.mrf.mxu0
        %v3653 = vadd.f32 %v3526, %v3652
        %v3654 = vpop.f32.mrf.mxu0
        %3655 = vmatprep.mubr.bf16.mxu0 0
        %3656 = vmatmul.mubr.bf16.gmra.mxu0 %v3561
        %v3657 = vpop.f32.mrf.mxu0
        %v3658 = vadd.f32 %v3526, %v3657
        %v3659 = vpop.f32.mrf.mxu0
        %v3660 = vpop.f32.mrf.mxu0
        %v3661 = vadd.f32 %v3526, %v3660
        %v3662 = vpop.f32.mrf.mxu0
        %3663 = vmatprep.mubr.bf16.mxu0 0
        %3664 = vmatmul.mubr.bf16.gmra.mxu0 %v3564
        %v3665 = vpop.f32.mrf.mxu0
        %v3666 = vadd.f32 %v3526, %v3665
        %v3667 = vpop.f32.mrf.mxu0
        %v3668 = vpop.f32.mrf.mxu0
        %v3669 = vadd.f32 %v3526, %v3668
        %v3670 = vpop.f32.mrf.mxu0
        %3671 = vmatprep.mubr.bf16.mxu0 0
        %3672 = vmatmul.mubr.bf16.gmra.mxu0 %v3567
        %v3673 = vpop.f32.mrf.mxu0
        %v3674 = vadd.f32 %v3526, %v3673
        %v3675 = vpop.f32.mrf.mxu0
        %v3676 = vpop.f32.mrf.mxu0
        %v3677 = vadd.f32 %v3526, %v3676
        %v3678 = vpop.f32.mrf.mxu0
        %3679 = vmatprep.mubr.bf16.mxu0 0
        %3680 = vmatmul.mubr.bf16.gmra.mxu0 %v3570
        %v3681 = vpop.f32.mrf.mxu0
        %v3682 = vadd.f32 %v3526, %v3681
        %v3683 = vpop.f32.mrf.mxu0
        %v3684 = vpop.f32.mrf.mxu0
        %v3685 = vadd.f32 %v3526, %v3684
        %v3686 = vpop.f32.mrf.mxu0
        %3687 = vmatprep.mubr.bf16.mxu0 0
        %3688 = vmatmul.mubr.bf16.gmra.mxu0 %v3573
        %v3689 = vpop.f32.mrf.mxu0
        %v3690 = vadd.f32 %v3526, %v3689
        %v3691 = vpop.f32.mrf.mxu0
        %v3692 = vpop.f32.mrf.mxu0
        %v3693 = vadd.f32 %v3526, %v3692
        %v3694 = vpop.f32.mrf.mxu0
        %3695 = vmatprep.mubr.bf16.mxu0 0
        %3696 = vmatmul.mubr.bf16.gmra.mxu0 %v3576
        %v3697 = vpop.f32.mrf.mxu0
        %v3698 = vadd.f32 %v3526, %v3697
        %v3699 = vpop.f32.mrf.mxu0
        %v3700 = vpop.f32.mrf.mxu0
        %v3701 = vadd.f32 %v3526, %v3700
        %v3702 = vpop.f32.mrf.mxu0
        %3703 = vmatprep.mubr.bf16.mxu0 0
        %3704 = vmatmul.mubr.bf16.gmra.mxu0 %v3579
        %v3705 = vpop.f32.mrf.mxu0
        %v3706 = vadd.f32 %v3526, %v3705
        %v3707 = vpop.f32.mrf.mxu0
        %v3708 = vpop.f32.mrf.mxu0
        %v3709 = vadd.f32 %v3526, %v3708
        %v3710 = vpop.f32.mrf.mxu0
        %3711 = vmatprep.mubr.bf16.mxu0 0
        %3712 = vmatmul.mubr.bf16.gmra.mxu0 %v3582
        %v3713 = vpop.f32.mrf.mxu0
        %v3714 = vadd.f32 %v3526, %v3713
        %v3715 = vpop.f32.mrf.mxu0
        %v3716 = vpop.f32.mrf.mxu0
        %v3717 = vadd.f32 %v3526, %v3716
        %v3718 = vpop.f32.mrf.mxu0
        %3719 = vmatprep.mubr.bf16.mxu0 0
        %3720 = vmatmul.mubr.bf16.gmra.mxu0 %v3585
        %v3721 = vpop.f32.mrf.mxu0
        %v3722 = vadd.f32 %v3526, %v3721
        %v3723 = vpop.f32.mrf.mxu0
        %v3724 = vpop.f32.mrf.mxu0
        %v3725 = vadd.f32 %v3526, %v3724
        %v3726 = vpop.f32.mrf.mxu0
        %3727 = vmatprep.mubr.bf16.mxu0 0
        %3728 = vmatmul.mubr.bf16.gmra.mxu0 %v3588
        %v3729 = vpop.f32.mrf.mxu0
        %v3730 = vadd.f32 %v3526, %v3729
        %v3731 = vpop.f32.mrf.mxu0
        %v3732 = vpop.f32.mrf.mxu0
        %v3733 = vadd.f32 %v3526, %v3732
        %v3734 = vpop.f32.mrf.mxu0
        %3735 = vmatprep.mubr.bf16.mxu0 0
        %3736 = vmatmul.mubr.bf16.gmra.mxu0 %v3591
        %v3737 = vpop.f32.mrf.mxu0
        %v3738 = vadd.f32 %v3526, %v3737
        %v3739 = vpop.f32.mrf.mxu0
        %v3740 = vpop.f32.mrf.mxu0
        %v3741 = vadd.f32 %v3526, %v3740
        %v3742 = vpop.f32.mrf.mxu0
        %3743 = vmatprep.mubr.bf16.mxu0 0
        %3744 = vmatmul.mubr.bf16.gmra.mxu0 %v3594
        %v3745 = vpop.f32.mrf.mxu0
        %v3746 = vadd.f32 %v3526, %v3745
        %v3747 = vpop.f32.mrf.mxu0
        %v3748 = vpop.f32.mrf.mxu0
        %v3749 = vadd.f32 %v3526, %v3748
        %v3750 = vpop.f32.mrf.mxu0
        %3751 = vmatprep.mubr.bf16.mxu0 0
        %3752 = vmatmul.mubr.bf16.gmra.mxu0 %v3597
        %v3753 = vpop.f32.mrf.mxu0
        %v3754 = vadd.f32 %v3526, %v3753
        %v3755 = vpop.f32.mrf.mxu0
        %v3756 = vpop.f32.mrf.mxu0
        %v3757 = vadd.f32 %v3526, %v3756
        %v3758 = vpop.f32.mrf.mxu0
        %3759 = vdwg.mxu0
        %v3760 = vpack.c.bf16 %v3637, %v3634
        %v3761 = vpack.c.bf16 %v3645, %v3642
        %v3762 = vpack.c.bf16 %v3653, %v3650
        %v3763 = vpack.c.bf16 %v3661, %v3658
        %v3764 = vpack.c.bf16 %v3669, %v3666
        %v3765 = vpack.c.bf16 %v3677, %v3674
        %v3766 = vpack.c.bf16 %v3685, %v3682
        %v3767 = vpack.c.bf16 %v3693, %v3690
        %v3768 = vpack.c.bf16 %v3701, %v3698
        %v3769 = vpack.c.bf16 %v3709, %v3706
        %v3770 = vpack.c.bf16 %v3717, %v3714
        %v3771 = vpack.c.bf16 %v3725, %v3722
        %v3772 = vpack.c.bf16 %v3733, %v3730
        %v3773 = vpack.c.bf16 %v3741, %v3738
        %v3774 = vpack.c.bf16 %v3749, %v3746
        %v3775 = vpack.c.bf16 %v3757, %v3754
        %v3792 = vunpack.c.l.b16 %v3760
        %v3793 = vunpack.c.h.b16 %v3760
        %v3794 = vunpack.c.l.b16 %v3761
        %v3795 = vunpack.c.h.b16 %v3761
        %v3796 = vunpack.c.l.b16 %v3762
        %v3797 = vunpack.c.h.b16 %v3762
        %v3798 = vunpack.c.l.b16 %v3763
        %v3799 = vunpack.c.h.b16 %v3763
        %v3800 = vunpack.c.l.b16 %v3764
        %v3801 = vunpack.c.h.b16 %v3764
        %v3802 = vunpack.c.l.b16 %v3765
        %v3803 = vunpack.c.h.b16 %v3765
        %v3804 = vunpack.c.l.b16 %v3766
        %v3805 = vunpack.c.h.b16 %v3766
        %v3806 = vunpack.c.l.b16 %v3767
        %v3807 = vunpack.c.h.b16 %v3767
        %v3808 = vunpack.c.l.b16 %v3768
        %v3809 = vunpack.c.h.b16 %v3768
        %v3810 = vunpack.c.l.b16 %v3769
        %v3811 = vunpack.c.h.b16 %v3769
        %v3812 = vunpack.c.l.b16 %v3770
        %v3813 = vunpack.c.h.b16 %v3770
        %v3814 = vunpack.c.l.b16 %v3771
        %v3815 = vunpack.c.h.b16 %v3771
        %v3816 = vunpack.c.l.b16 %v3772
        %v3817 = vunpack.c.h.b16 %v3772
        %v3818 = vunpack.c.l.b16 %v3773
        %v3819 = vunpack.c.h.b16 %v3773
        %v3820 = vunpack.c.l.b16 %v3774
        %v3821 = vunpack.c.h.b16 %v3774
        %v3822 = vunpack.c.l.b16 %v3775
        %v3823 = vunpack.c.h.b16 %v3775
        %v3824 = vpack.c.b16 %v3792, %v3792
        %v3825 = vpack.c.b16 %v3793, %v3793
        %v3826 = vpack.c.b16 %v3794, %v3794
        %v3827 = vpack.c.b16 %v3795, %v3795
        %v3828 = vpack.c.b16 %v3796, %v3796
        %v3829 = vpack.c.b16 %v3797, %v3797
        %v3830 = vpack.c.b16 %v3798, %v3798
        %v3831 = vpack.c.b16 %v3799, %v3799
        %v3832 = vpack.c.b16 %v3800, %v3800
        %v3833 = vpack.c.b16 %v3801, %v3801
        %v3834 = vpack.c.b16 %v3802, %v3802
        %v3835 = vpack.c.b16 %v3803, %v3803
        %v3836 = vpack.c.b16 %v3804, %v3804
        %v3837 = vpack.c.b16 %v3805, %v3805
        %v3838 = vpack.c.b16 %v3806, %v3806
        %v3839 = vpack.c.b16 %v3807, %v3807
        %v3840 = vpack.c.b16 %v3808, %v3808
        %v3841 = vpack.c.b16 %v3809, %v3809
        %v3842 = vpack.c.b16 %v3810, %v3810
        %v3843 = vpack.c.b16 %v3811, %v3811
        %v3844 = vpack.c.b16 %v3812, %v3812
        %v3845 = vpack.c.b16 %v3813, %v3813
        %v3846 = vpack.c.b16 %v3814, %v3814
        %v3847 = vpack.c.b16 %v3815, %v3815
        %v3848 = vpack.c.b16 %v3816, %v3816
        %v3849 = vpack.c.b16 %v3817, %v3817
        %v3850 = vpack.c.b16 %v3818, %v3818
        %v3851 = vpack.c.b16 %v3819, %v3819
        %v3852 = vpack.c.b16 %v3820, %v3820
        %v3853 = vpack.c.b16 %v3821, %v3821
        %v3854 = vpack.c.b16 %v3822, %v3822
        %v3855 = vpack.c.b16 %v3823, %v3823
        %3888 = vst [vmem:[%s272] sm:$0xf] %v3824
        %3889 = vst [vmem:[%s272 + $0x4] sm:$0xf] %v3825
        %3890 = vst [vmem:[%s272 + $0x8] sm:$0xf] %v3826
        %3891 = vst [vmem:[%s272 + $0xc] sm:$0xf] %v3827
        %3892 = vst [vmem:[%s272 + $0x10] sm:$0xf] %v3828
        %3893 = vst [vmem:[%s272 + $0x14] sm:$0xf] %v3829
        %3894 = vst [vmem:[%s272 + $0x18] sm:$0xf] %v3830
        %3895 = vst [vmem:[%s272 + $0x1c] sm:$0xf] %v3831
        %3896 = vst [vmem:[%s272 + $0x20] sm:$0xf] %v3832
        %3897 = vst [vmem:[%s272 + $0x24] sm:$0xf] %v3833
        %3898 = vst [vmem:[%s272 + $0x28] sm:$0xf] %v3834
        %3899 = vst [vmem:[%s272 + $0x2c] sm:$0xf] %v3835
        %3900 = vst [vmem:[%s272 + $0x30] sm:$0xf] %v3836
        %3901 = vst [vmem:[%s272 + $0x34] sm:$0xf] %v3837
        %3902 = vst [vmem:[%s272 + $0x38] sm:$0xf] %v3838
        %3903 = vst [vmem:[%s272 + $0x3c] sm:$0xf] %v3839
        %3904 = vst [vmem:[%s272 + $0x40] sm:$0xf] %v3840
        %3905 = vst [vmem:[%s272 + $0x44] sm:$0xf] %v3841
        %3906 = vst [vmem:[%s272 + $0x48] sm:$0xf] %v3842
        %3907 = vst [vmem:[%s272 + $0x4c] sm:$0xf] %v3843
        %3908 = vst [vmem:[%s272 + $0x50] sm:$0xf] %v3844
        %3909 = vst [vmem:[%s272 + $0x54] sm:$0xf] %v3845
        %3910 = vst [vmem:[%s272 + $0x58] sm:$0xf] %v3846
        %3911 = vst [vmem:[%s272 + $0x5c] sm:$0xf] %v3847
        %3912 = vst [vmem:[%s272 + $0x60] sm:$0xf] %v3848
        %3913 = vst [vmem:[%s272 + $0x64] sm:$0xf] %v3849
        %3914 = vst [vmem:[%s272 + $0x68] sm:$0xf] %v3850
        %3915 = vst [vmem:[%s272 + $0x6c] sm:$0xf] %v3851
        %3916 = vst [vmem:[%s272 + $0x70] sm:$0xf] %v3852
        %3917 = vst [vmem:[%s272 + $0x74] sm:$0xf] %v3853
        %3918 = vst [vmem:[%s272 + $0x78] sm:$0xf] %v3854
        %3919 = vst [vmem:[%s272 + $0x7c] sm:$0xf] %v3855
        %s3920 = sand.u32 %s181, 1
        %s3921 = scalar_lea.sflag [#allocation3], %s3920
        %s3922 = sand.u32 %s181, 1
        %s3923 = smul.addr %s3922, 128
        %s3924 = scalar_lea.vmem [#allocation2], %s3923
        // Predicated region
        $region49: #{tpu_custom_call.1} parent=47 // pred_check
          %p3925 = pneg %p191
        $region50: #{tpu_custom_call.1} parent=47 // pred_check_branch
          %3927 = sbr.rel (%p3925) target = $region52
        $region51: #{tpu_custom_call.1} parent=47 // pred_region
          %s3928 = smul.u32 32, %s21
          %s3930 = ssub.s32 2048, 2048
          %3931 = vsyncadd %s3921, %s3930
          %s3932 = smul.addr %s3928, 64
          %s3933 = scalar_lea.hbm %s7, %s3932
          %s3934 = sshll.u32 %s3924, 4
          %s3935 = int_to_ptr.vmem [resolvable:$true] %s3934
          %3940 = dma.vmem_to_hbm [thread:$0]  %s3935, 2048, %s3933, %s3921, 64, 64, 4
        $region52: #{tpu_custom_call.1} parent=47 // pred_fallthru
          _
      $region48: #{tpu_custom_call.1} parent=5 // pred_fallthru
        _
      %p3941 = scmp.le.s32.totalorder 2, %s16
      // Predicated region
      $region53: #{tpu_custom_call.1} parent=5 // pred_check
        %p3942 = pneg %p3941
      $region54: #{tpu_custom_call.1} parent=5 // pred_check_branch
        %3944 = sbr.rel (%p3942) target = $region56
      $region55: #{tpu_custom_call.1} parent=5 // pred_region
        %s3945 = ssub.s32 %s16, 2
        // Predicated region
        $region57: #{tpu_custom_call.1} parent=55 // pred_check
          %p3946 = pneg %p197
        $region58: #{tpu_custom_call.1} parent=55 // pred_check_branch
          %3948 = sbr.rel (%p3946) target = $region60
        $region59: #{tpu_custom_call.1} parent=55 // pred_region
          %s3949 = sand.u32 %s182, 1
          %s3950 = scalar_lea.sflag [#allocation3], %s3949
          %s3951 = sand.u32 %s182, 1
          %s3952 = smul.addr %s3951, 128
          %s3953 = scalar_lea.vmem [#allocation2], %s3952
          %3954 = dma.done %s3950, 2048
        $region60: #{tpu_custom_call.1} parent=55 // pred_fallthru
          _
      $region56: #{tpu_custom_call.1} parent=5 // pred_fallthru
        _
    $region6: #{tpu_custom_call.1} parent=1 // loop_footer
      %s20 = sadd.s32 1, %s16
    $region7: #{tpu_custom_call.1} parent=1 // loop_footer_branch
      %15 = sbr.rel target = $region3
    $region8: #{tpu_custom_call.1} parent=1 // loop_exit
      _
    %3955 = vsyncpa [#allocation3], 1
    %s3956 = scalar_lea.sflag [#allocation3], 1
    %3957 = vsyncpa %s3956, 1

</llo_original>
